<compile_context>
chip_gen: v5e
topology: v5e:2x2
jax: 0.10.0
libtpu: 0.0.40
codegen_flags: <defaults>
</compile_context>

<pallas_src>
import functools

import jax
import jax.numpy as jnp
from jax.experimental import pallas as pl
from jax.experimental.pallas import tpu as pltpu


def _cdiv(a, b):
    return -(-a // b)


def _row_tile(m, cap, align):
    """Row-tile: multiple of `align`, >=2 grid blocks when possible (v7x has
    two TensorCores that only get work via a 'parallel' grid axis), capped so
    double-buffered blocks stay well under the scoped-VMEM default."""
    if m <= align:
        return m
    t = _cdiv(_cdiv(m, 2), align) * align
    return min(cap, t)


# ----------------------------- Pallas kernels ------------------------------

def _matmul_bias_kernel(x_ref, w_ref, b_ref, o_ref, *, relu):
    """o = act(x @ w + b). bf16 MXU operands, f32 accumulation/epilogue."""
    x = x_ref[...]
    if jnp.issubdtype(x.dtype, jnp.integer):      # int8 conv1 patches
        x = x.astype(jnp.float32)
    x = x.astype(jnp.bfloat16)
    acc = jnp.dot(x, w_ref[...], preferred_element_type=jnp.float32)
    acc = acc + b_ref[...]
    if relu:
        acc = jnp.maximum(acc, 0.0)
    o_ref[...] = acc.astype(o_ref.dtype)


def pallas_matmul_bias(x, w, b, *, relu=False, out_dtype=jnp.bfloat16, cap=2048):
    """y[M,N] = x[M,K] @ w[K,N] + b (+ ReLU), row axis tiled & 'parallel'."""
    M, K = x.shape
    K2, N = w.shape
    assert K == K2
    # sublane alignment: int8 packs 4/sublane-word, bf16 packs 2.
    align = 32 if x.dtype.itemsize == 1 else (16 if x.dtype.itemsize == 2 else 8)
    tm = _row_tile(M, cap, align)
    return pl.pallas_call(
        functools.partial(_matmul_bias_kernel, relu=relu),
        out_shape=jax.ShapeDtypeStruct((M, N), out_dtype),
        grid=(_cdiv(M, tm),),
        in_specs=[
            pl.BlockSpec((tm, K), lambda i: (i, 0)),
            pl.BlockSpec((K, N), lambda i: (0, 0)),    # resident weight
            pl.BlockSpec((1, N), lambda i: (0, 0)),    # resident bias
        ],
        out_specs=pl.BlockSpec((tm, N), lambda i: (i, 0)),
        compiler_params=pltpu.CompilerParams(
            dimension_semantics=("parallel",)),
    )(x, w, b)


def _head_kernel(y3_ref, goal_ref, h_ref, m_ref,
                 fcw_ref, fcb_ref, wih_pe_ref, wih_g_ref, whh_ref,
                 bih_ref, bhh_ref, h_out_ref, pe_ref):
    """Fused FC(+ReLU) over flattened conv3 output + 1-layer GRU step.

    y3_ref is the conv3 output flattened batch-major to [tb, n_sp*32]
    (single full-depth K matmul, no per-spatial micro-matmuls).  GRU weights
    are stored per gate [3, K, H] so no [B,3H] lane slicing is needed.
    """
    # Fully-connected perception embedding + ReLU (f32 epilogue).
    pe = jnp.dot(y3_ref[...], fcw_ref[...], preferred_element_type=jnp.float32)
    pe = jnp.maximum(pe + fcb_ref[...], 0.0)
    pe_ref[...] = pe

    # GRU step (PyTorch nn.GRU equations); masks reset h at episode starts.
    h = h_ref[...] * m_ref[...]                     # f32 [tb, H]
    pe_b = pe.astype(jnp.bfloat16)
    h_b = h.astype(jnp.bfloat16)
    goal = goal_ref[...]                            # bf16 [tb, G]

    def gate(g):
        gi = (jnp.dot(pe_b, wih_pe_ref[g], preferred_element_type=jnp.float32)
              + jnp.dot(goal, wih_g_ref[g], preferred_element_type=jnp.float32)
              + bih_ref[g])
        gh = (jnp.dot(h_b, whh_ref[g], preferred_element_type=jnp.float32)
              + bhh_ref[g])
        return gi, gh

    gi_r, gh_r = gate(0)
    gi_z, gh_z = gate(1)
    gi_n, gh_n = gate(2)
    r = jax.nn.sigmoid(gi_r + gh_r)
    z = jax.nn.sigmoid(gi_z + gh_z)
    n = jnp.tanh(gi_n + r * gh_n)
    h_out_ref[...] = (1.0 - z) * n + z * h


def pallas_head(y3flat, goal_pad, rnn_hidden_states, masks,
                fc_w, fc_b, w_ih_pe, w_ih_goal, w_hh, b_ih, b_hh):
    B, F = y3flat.shape
    H = rnn_hidden_states.shape[2]
    G = goal_pad.shape[1]
    tb = _row_tile(B, cap=256, align=16)
    return pl.pallas_call(
        _head_kernel,
        out_shape=(jax.ShapeDtypeStruct((B, 1, H), jnp.float32),   # h' (rnn state shape)
                   jax.ShapeDtypeStruct((B, H), jnp.float32)),     # perception_embed
        grid=(_cdiv(B, tb),),
        in_specs=[
            pl.BlockSpec((tb, F), lambda i: (i, 0)),               # conv3 flat (bf16)
            pl.BlockSpec((tb, G), lambda i: (i, 0)),               # goal (bf16, padded)
            pl.BlockSpec((tb, None, H), lambda i: (i, 0, 0)),      # h (B,1,H) f32
            pl.BlockSpec((tb, 1), lambda i: (i, 0)),               # masks f32
            pl.BlockSpec((F, H), lambda i: (0, 0)),                # resident fc weight
            pl.BlockSpec((1, H), lambda i: (0, 0)),
            pl.BlockSpec((3, H, H), lambda i: (0, 0, 0)),          # per-gate GRU weights
            pl.BlockSpec((3, G, H), lambda i: (0, 0, 0)),
            pl.BlockSpec((3, H, H), lambda i: (0, 0, 0)),
            pl.BlockSpec((3, 1, H), lambda i: (0, 0, 0)),
            pl.BlockSpec((3, 1, H), lambda i: (0, 0, 0)),
        ],
        out_specs=(pl.BlockSpec((tb, None, H), lambda i: (i, 0, 0)),
                   pl.BlockSpec((tb, H), lambda i: (i, 0))),
        input_output_aliases={2: 0},      # reuse the hidden-state buffer for h'
        compiler_params=pltpu.CompilerParams(
            dimension_semantics=("parallel",)),
    )(y3flat, goal_pad, rnn_hidden_states, masks,
      fc_w, fc_b, w_ih_pe, w_ih_goal, w_hh, b_ih, b_hh)


# ------------------------------ glue (JAX) ---------------------------------

def _im2col(x, kh, kw, sh, sw):
    """x: [B, H, W, C] (NHWC) -> patches [B, oh, ow, kh*kw*C], valid padding."""
    B, H, W, C = x.shape
    oh = (H - kh) // sh + 1
    ow = (W - kw) // sw + 1
    cols = []
    for i in range(kh):
        for j in range(kw):
            cols.append(x[:, i:i + sh * oh:sh, j:j + sw * ow:sw, :])
    p = jnp.stack(cols, axis=3)                       # [B, oh, ow, kh*kw, C]
    return p.reshape(B, oh, ow, kh * kw * C), oh, ow


def init_params(key, *, hidden_size, img_hw, n_input_goal):
    H = hidden_size
    ks = jax.random.split(key, 8)

    def w32(k, shape, fan_in):
        return jax.random.normal(k, shape, jnp.float32) / jnp.sqrt(float(fan_in))

    # SimpleCNN conv stack geometry (kernels/strides fixed by habitat SimpleCNN)
    oh1 = (img_hw - 8) // 4 + 1
    oh2 = (oh1 - 4) // 2 + 1
    oh3 = (oh2 - 3) // 1 + 1
    n_sp = oh3 * oh3
    F = n_sp * 32
    G = 8                                  # goal vector zero-padded to MXU-friendly K

    # conv1 consumes zero-centred int8 pixels (p - 128): fold the 1/255 image
    # normalisation into the weight and the +128 de-centring into the bias, so
    # the kernel reads 1-byte patches and does no divide.
    c1 = w32(ks[0], (8 * 8 * 3, 32), 8 * 8 * 3) / 255.0
    c1_b = 128.0 * jnp.sum(c1, axis=0, keepdims=True)

    wihg = jnp.zeros((3, G, H), jnp.float32).at[:, :n_input_goal, :].set(
        w32(ks[5], (3, n_input_goal, H), H))

    return dict(
        conv1_w=c1.astype(jnp.bfloat16),
        conv1_b=c1_b,
        conv2_w=w32(ks[1], (4 * 4 * 32, 64), 4 * 4 * 32).astype(jnp.bfloat16),
        conv2_b=jnp.zeros((1, 64), jnp.float32),
        conv3_w=w32(ks[2], (3 * 3 * 64, 32), 3 * 3 * 64).astype(jnp.bfloat16),
        conv3_b=jnp.zeros((1, 32), jnp.float32),
        # FC weight stored flat as [n_sp*32, H] with row index p*32 + c, i.e.
        # the torch NCHW-Flatten permutation (flat index c*n_sp + p) is folded
        # in here at init; permute rows accordingly when importing a checkpoint.
        fc_w=w32(ks[3], (F, H), F).astype(jnp.bfloat16),
        fc_b=jnp.zeros((1, H), jnp.float32),
        # GRU weights stored per gate [3 (r,z,n), K, H] so every gate matmul is
        # lane-tile aligned even when H is not a multiple of 128.
        gru_w_ih_pe=w32(ks[4], (3, H, H), H).astype(jnp.bfloat16),
        gru_w_ih_goal=wihg.astype(jnp.bfloat16),
        gru_w_hh=w32(ks[6], (3, H, H), H).astype(jnp.bfloat16),
        gru_b_ih=jnp.zeros((3, 1, H), jnp.float32),
        gru_b_hh=jnp.zeros((3, 1, H), jnp.float32),
    )


@jax.jit
def pointnav_baseline_net_forward(params, observations, rnn_hidden_states,
                                  prev_actions, masks):
    del prev_actions                      # unused by this forward (matches torch)
    rgb = observations["rgb"]
    B = rgb.shape[0]

    # --- SimpleCNN visual encoder ------------------------------------------
    # conv1 reads raw pixels as zero-centred int8 (scale/offset folded into w/b).
    rgb_i8 = (rgb.astype(jnp.int16) - 128).astype(jnp.int8)
    p1, oh1, ow1 = _im2col(rgb_i8, 8, 8, 4, 4)
    y1 = pallas_matmul_bias(p1.reshape(B * oh1 * ow1, -1),
                            params["conv1_w"], params["conv1_b"], relu=True)
    y1 = y1.reshape(B, oh1, ow1, -1)

    p2, oh2, ow2 = _im2col(y1, 4, 4, 2, 2)
    y2 = pallas_matmul_bias(p2.reshape(B * oh2 * ow2, -1),
                            params["conv2_w"], params["conv2_b"], relu=True)
    y2 = y2.reshape(B, oh2, ow2, -1)

    # conv3 (no ReLU before Flatten in SimpleCNN); rows stay batch-major so the
    # flatten to [B, n_sp*32] below is a free contiguous reshape.
    p3, oh3, ow3 = _im2col(y2, 3, 3, 1, 1)
    y3 = pallas_matmul_bias(p3.reshape(B * oh3 * ow3, -1),
                            params["conv3_w"], params["conv3_b"], relu=False)
    y3flat = y3.reshape(B, oh3 * ow3 * 32)

    # --- goal encoding (zero-padded to the GRU kernel's K) -------------------
    goal = observations["pointgoal_with_gps_compass"].astype(jnp.float32)
    G = params["gru_w_ih_goal"].shape[1]
    goal_pad = jnp.pad(goal, ((0, 0), (0, G - goal.shape[1]))).astype(jnp.bfloat16)

    # --- fused FC + ReLU + GRU step, batch-tiled, state buffer aliased -------
    h_new3d, perception_embed = pallas_head(
        y3flat, goal_pad, rnn_hidden_states, masks.astype(jnp.float32),
        params["fc_w"], params["fc_b"],
        params["gru_w_ih_pe"], params["gru_w_ih_goal"], params["gru_w_hh"],
        params["gru_b_ih"], params["gru_b_hh"])

    x_out = h_new3d[:, 0, :]
    aux_loss_state = {"perception_embed": perception_embed, "rnn_output": x_out}
    # TODO(synk): rnn_build_seq_info (packed multi-step sequence forward) not
    # implemented; this covers the single-step rollout path.
    return x_out, h_new3d, aux_loss_state


# --------------------------------- demo ------------------------------------

if __name__ == "__main__":
    B, IMG, HIDDEN, N_GOAL = 2, 64, 32, 2
    key = jax.random.PRNGKey(0)
    k_p, k_rgb, k_goal, k_h = jax.random.split(key, 4)

    params = init_params(k_p, hidden_size=HIDDEN, img_hw=IMG, n_input_goal=N_GOAL)

    observations = {
        "rgb": jax.random.randint(k_rgb, (B, IMG, IMG, 3), 0, 256,
                                  dtype=jnp.int32).astype(jnp.uint8),
        "pointgoal_with_gps_compass": jax.random.normal(k_goal, (B, N_GOAL),
                                                        jnp.float32),
    }
    rnn_hidden_states = jax.random.normal(k_h, (B, 1, HIDDEN), jnp.float32)
    prev_actions = jnp.zeros((B, 1), jnp.int32)          # unused by forward
    masks = jnp.ones((B, 1), jnp.float32)

    x_out, h_out, aux = pointnav_baseline_net_forward(
        params, observations, rnn_hidden_states, prev_actions, masks)

    jax.block_until_ready((x_out, h_out, aux["perception_embed"]))
    assert x_out.shape == (B, HIDDEN)
    assert h_out.shape == (B, 1, HIDDEN)
    assert aux["perception_embed"].shape == (B, HIDDEN)
    assert bool(jnp.all(jnp.isfinite(x_out)))
    assert bool(jnp.all(jnp.isfinite(h_out)))
    print("KERNEL_OK")
</pallas_src>

<mosaic_0001>
module attributes {stable_mosaic.version = 11 : i64} {
  func.func @_matmul_bias_kernel(%arg0: i32, %arg1: memref<256x192xi8, #tpu.memory_space<vmem>>, %arg2: memref<192x32xbf16, #tpu.memory_space<vmem>>, %arg3: memref<1x32xf32, #tpu.memory_space<vmem>>, %arg4: memref<256x32xbf16, #tpu.memory_space<vmem>>) attributes {dimension_semantics = [#tpu.dimension_semantics<parallel>], iteration_bounds = array<i64: 2>, scalar_prefetch = 0 : i64, scratch_operands = 0 : i64, tpu.core_type = #tpu.core_type<tc>, window_params = [{transform_indices = @transform_0, window_bounds = array<i64: 256, 192>}, {pipeline_mode = #tpu.pipeline_mode<synchronous>, transform_indices = @transform_1, window_bounds = array<i64: 192, 32>}, {pipeline_mode = #tpu.pipeline_mode<synchronous>, transform_indices = @transform_2, window_bounds = array<i64: 1, 32>}, {transform_indices = @transform_3, window_bounds = array<i64: 256, 32>}]} {
    %c0 = arith.constant 0 : index
    %c0_0 = arith.constant 0 : index
    %0 = vector.load %arg1[%c0, %c0_0] : memref<256x192xi8, #tpu.memory_space<vmem>>, vector<256x192xi8>
    %1 = arith.sitofp %0 : vector<256x192xi8> to vector<256x192xf32>
    %2 = arith.truncf %1 : vector<256x192xf32> to vector<256x192xbf16>
    %c0_1 = arith.constant 0 : index
    %c0_2 = arith.constant 0 : index
    %3 = vector.load %arg2[%c0_1, %c0_2] : memref<192x32xbf16, #tpu.memory_space<vmem>>, vector<192x32xbf16>
    %cst = arith.constant dense<0.000000e+00> : vector<256x32xf32>
    %4 = tpu.matmul %2, %3, %cst {dimension_numbers = #tpu.dot_dimension_numbers<[1], [0], [0], [1], [0, 0, 1, 1], [], []>} : vector<256x192xbf16>, vector<192x32xbf16>, vector<256x32xf32> -> vector<256x32xf32>
    %c0_3 = arith.constant 0 : index
    %c0_4 = arith.constant 0 : index
    %5 = vector.load %arg3[%c0_3, %c0_4] : memref<1x32xf32, #tpu.memory_space<vmem>>, vector<1x32xf32>
    %6 = vector.broadcast %5 : vector<1x32xf32> to vector<256x32xf32>
    %7 = arith.addf %4, %6 : vector<256x32xf32>
    %cst_5 = arith.constant 0.000000e+00 : f32
    %8 = vector.broadcast %cst_5 : f32 to vector<256x32xf32>
    %9 = arith.maximumf %7, %8 : vector<256x32xf32>
    %10 = arith.truncf %9 : vector<256x32xf32> to vector<256x32xbf16>
    %c0_6 = arith.constant 0 : index
    %c0_7 = arith.constant 0 : index
    %11 = vector.load %arg4[%c0_6, %c0_7] : memref<256x32xbf16, #tpu.memory_space<vmem>>, vector<256x32xbf16>
    tpu.vector_store %arg4[%c0_6, %c0_7], %10 {strides = array<i32>} : memref<256x32xbf16, #tpu.memory_space<vmem>>, vector<256x32xbf16>,
    return
  }
  func.func @transform_0(%arg0: i32) -> (i32, i32) {
    %c0_i32 = arith.constant 0 : i32
    %c0_i32_0 = arith.constant 0 : i32
    return %arg0, %c0_i32 : i32, i32
  }
  func.func @transform_1(%arg0: i32) -> (i32, i32) {
    %c0_i32 = arith.constant 0 : i32
    %c0_i32_0 = arith.constant 0 : i32
    %c0_i32_1 = arith.constant 0 : i32
    return %c0_i32, %c0_i32_0 : i32, i32
  }
  func.func @transform_2(%arg0: i32) -> (i32, i32) {
    %c0_i32 = arith.constant 0 : i32
    %c0_i32_0 = arith.constant 0 : i32
    %c0_i32_1 = arith.constant 0 : i32
    return %c0_i32, %c0_i32_0 : i32, i32
  }
  func.func @transform_3(%arg0: i32) -> (i32, i32) {
    %c0_i32 = arith.constant 0 : i32
    %c0_i32_0 = arith.constant 0 : i32
    return %arg0, %c0_i32 : i32, i32
  }
}

module attributes {stable_mosaic.version = 11 : i64} {
  func.func @_matmul_bias_kernel(%arg0: i32, %arg1: memref<48x512xbf16, #tpu.memory_space<vmem>>, %arg2: memref<512x64xbf16, #tpu.memory_space<vmem>>, %arg3: memref<1x64xf32, #tpu.memory_space<vmem>>, %arg4: memref<48x64xbf16, #tpu.memory_space<vmem>>) attributes {dimension_semantics = [#tpu.dimension_semantics<parallel>], iteration_bounds = array<i64: 2>, scalar_prefetch = 0 : i64, scratch_operands = 0 : i64, tpu.core_type = #tpu.core_type<tc>, window_params = [{transform_indices = @transform_0, window_bounds = array<i64: 48, 512>}, {pipeline_mode = #tpu.pipeline_mode<synchronous>, transform_indices = @transform_1, window_bounds = array<i64: 512, 64>}, {pipeline_mode = #tpu.pipeline_mode<synchronous>, transform_indices = @transform_2, window_bounds = array<i64: 1, 64>}, {transform_indices = @transform_3, window_bounds = array<i64: 48, 64>}]} {
    %c0 = arith.constant 0 : index
    %c0_0 = arith.constant 0 : index
    %0 = vector.load %arg1[%c0, %c0_0] : memref<48x512xbf16, #tpu.memory_space<vmem>>, vector<48x512xbf16>
    %c0_1 = arith.constant 0 : index
    %c0_2 = arith.constant 0 : index
    %1 = vector.load %arg2[%c0_1, %c0_2] : memref<512x64xbf16, #tpu.memory_space<vmem>>, vector<512x64xbf16>
    %cst = arith.constant dense<0.000000e+00> : vector<48x64xf32>
    %2 = tpu.matmul %0, %1, %cst {dimension_numbers = #tpu.dot_dimension_numbers<[1], [0], [0], [1], [0, 0, 1, 1], [], []>} : vector<48x512xbf16>, vector<512x64xbf16>, vector<48x64xf32> -> vector<48x64xf32>
    %c0_3 = arith.constant 0 : index
    %c0_4 = arith.constant 0 : index
    %3 = vector.load %arg3[%c0_3, %c0_4] : memref<1x64xf32, #tpu.memory_space<vmem>>, vector<1x64xf32>
    %4 = vector.broadcast %3 : vector<1x64xf32> to vector<48x64xf32>
    %5 = arith.addf %2, %4 : vector<48x64xf32>
    %cst_5 = arith.constant 0.000000e+00 : f32
    %6 = vector.broadcast %cst_5 : f32 to vector<48x64xf32>
    %7 = arith.maximumf %5, %6 : vector<48x64xf32>
    %8 = arith.truncf %7 : vector<48x64xf32> to vector<48x64xbf16>
    %c0_6 = arith.constant 0 : index
    %c0_7 = arith.constant 0 : index
    %9 = vector.load %arg4[%c0_6, %c0_7] : memref<48x64xbf16, #tpu.memory_space<vmem>>, vector<48x64xbf16>
    tpu.vector_store %arg4[%c0_6, %c0_7], %8 {strides = array<i32>} : memref<48x64xbf16, #tpu.memory_space<vmem>>, vector<48x64xbf16>,
    return
  }
  func.func @transform_0(%arg0: i32) -> (i32, i32) {
    %c0_i32 = arith.constant 0 : i32
    %c0_i32_0 = arith.constant 0 : i32
    return %arg0, %c0_i32 : i32, i32
  }
  func.func @transform_1(%arg0: i32) -> (i32, i32) {
    %c0_i32 = arith.constant 0 : i32
    %c0_i32_0 = arith.constant 0 : i32
    %c0_i32_1 = arith.constant 0 : i32
    return %c0_i32, %c0_i32_0 : i32, i32
  }
  func.func @transform_2(%arg0: i32) -> (i32, i32) {
    %c0_i32 = arith.constant 0 : i32
    %c0_i32_0 = arith.constant 0 : i32
    %c0_i32_1 = arith.constant 0 : i32
    return %c0_i32, %c0_i32_0 : i32, i32
  }
  func.func @transform_3(%arg0: i32) -> (i32, i32) {
    %c0_i32 = arith.constant 0 : i32
    %c0_i32_0 = arith.constant 0 : i32
    return %arg0, %c0_i32 : i32, i32
  }
}

module attributes {stable_mosaic.version = 11 : i64} {
  func.func @_matmul_bias_kernel(%arg0: i32, %arg1: memref<16x576xbf16, #tpu.memory_space<vmem>>, %arg2: memref<576x32xbf16, #tpu.memory_space<vmem>>, %arg3: memref<1x32xf32, #tpu.memory_space<vmem>>, %arg4: memref<16x32xbf16, #tpu.memory_space<vmem>>) attributes {dimension_semantics = [#tpu.dimension_semantics<parallel>], iteration_bounds = array<i64: 2>, scalar_prefetch = 0 : i64, scratch_operands = 0 : i64, tpu.core_type = #tpu.core_type<tc>, window_params = [{transform_indices = @transform_0, window_bounds = array<i64: 16, 576>}, {pipeline_mode = #tpu.pipeline_mode<synchronous>, transform_indices = @transform_1, window_bounds = array<i64: 576, 32>}, {pipeline_mode = #tpu.pipeline_mode<synchronous>, transform_indices = @transform_2, window_bounds = array<i64: 1, 32>}, {transform_indices = @transform_3, window_bounds = array<i64: 16, 32>}]} {
    %c0 = arith.constant 0 : index
    %c0_0 = arith.constant 0 : index
    %0 = vector.load %arg1[%c0, %c0_0] : memref<16x576xbf16, #tpu.memory_space<vmem>>, vector<16x576xbf16>
    %c0_1 = arith.constant 0 : index
    %c0_2 = arith.constant 0 : index
    %1 = vector.load %arg2[%c0_1, %c0_2] : memref<576x32xbf16, #tpu.memory_space<vmem>>, vector<576x32xbf16>
    %cst = arith.constant dense<0.000000e+00> : vector<16x32xf32>
    %2 = tpu.matmul %0, %1, %cst {dimension_numbers = #tpu.dot_dimension_numbers<[1], [0], [0], [1], [0, 0, 1, 1], [], []>} : vector<16x576xbf16>, vector<576x32xbf16>, vector<16x32xf32> -> vector<16x32xf32>
    %c0_3 = arith.constant 0 : index
    %c0_4 = arith.constant 0 : index
    %3 = vector.load %arg3[%c0_3, %c0_4] : memref<1x32xf32, #tpu.memory_space<vmem>>, vector<1x32xf32>
    %4 = vector.broadcast %3 : vector<1x32xf32> to vector<16x32xf32>
    %5 = arith.addf %2, %4 : vector<16x32xf32>
    %6 = arith.truncf %5 : vector<16x32xf32> to vector<16x32xbf16>
    %c0_5 = arith.constant 0 : index
    %c0_6 = arith.constant 0 : index
    %7 = vector.load %arg4[%c0_5, %c0_6] : memref<16x32xbf16, #tpu.memory_space<vmem>>, vector<16x32xbf16>
    tpu.vector_store %arg4[%c0_5, %c0_6], %6 {strides = array<i32>} : memref<16x32xbf16, #tpu.memory_space<vmem>>, vector<16x32xbf16>,
    return
  }
  func.func @transform_0(%arg0: i32) -> (i32, i32) {
    %c0_i32 = arith.constant 0 : i32
    %c0_i32_0 = arith.constant 0 : i32
    return %arg0, %c0_i32 : i32, i32
  }
  func.func @transform_1(%arg0: i32) -> (i32, i32) {
    %c0_i32 = arith.constant 0 : i32
    %c0_i32_0 = arith.constant 0 : i32
    %c0_i32_1 = arith.constant 0 : i32
    return %c0_i32, %c0_i32_0 : i32, i32
  }
  func.func @transform_2(%arg0: i32) -> (i32, i32) {
    %c0_i32 = arith.constant 0 : i32
    %c0_i32_0 = arith.constant 0 : i32
    %c0_i32_1 = arith.constant 0 : i32
    return %c0_i32, %c0_i32_0 : i32, i32
  }
  func.func @transform_3(%arg0: i32) -> (i32, i32) {
    %c0_i32 = arith.constant 0 : i32
    %c0_i32_0 = arith.constant 0 : i32
    return %arg0, %c0_i32 : i32, i32
  }
}

module attributes {stable_mosaic.version = 11 : i64} {
  func.func @_head_kernel(%arg0: i32, %arg1: memref<2x512xbf16, #tpu.memory_space<vmem>>, %arg2: memref<2x8xbf16, #tpu.memory_space<vmem>>, %arg3: memref<2x1x32xf32, #tpu.memory_space<vmem>>, %arg4: memref<2x1xf32, #tpu.memory_space<vmem>>, %arg5: memref<512x32xbf16, #tpu.memory_space<vmem>>, %arg6: memref<1x32xf32, #tpu.memory_space<vmem>>, %arg7: memref<3x32x32xbf16, #tpu.memory_space<vmem>>, %arg8: memref<3x8x32xbf16, #tpu.memory_space<vmem>>, %arg9: memref<3x32x32xbf16, #tpu.memory_space<vmem>>, %arg10: memref<3x1x32xf32, #tpu.memory_space<vmem>>, %arg11: memref<3x1x32xf32, #tpu.memory_space<vmem>>, %arg12: memref<2x1x32xf32, #tpu.memory_space<vmem>>, %arg13: memref<2x32xf32, #tpu.memory_space<vmem>>) attributes {dimension_semantics = [#tpu.dimension_semantics<parallel>], iteration_bounds = array<i64: 1>, scalar_prefetch = 0 : i64, scratch_operands = 0 : i64, tpu.core_type = #tpu.core_type<tc>, window_params = [{transform_indices = @transform_0, window_bounds = array<i64: 2, 512>}, {transform_indices = @transform_1, window_bounds = array<i64: 2, 8>}, {transform_indices = @transform_2, window_bounds = array<i64: 2, 1, 32>}, {transform_indices = @transform_3, window_bounds = array<i64: 2, 1>}, {pipeline_mode = #tpu.pipeline_mode<synchronous>, transform_indices = @transform_4, window_bounds = array<i64: 512, 32>}, {pipeline_mode = #tpu.pipeline_mode<synchronous>, transform_indices = @transform_5, window_bounds = array<i64: 1, 32>}, {pipeline_mode = #tpu.pipeline_mode<synchronous>, transform_indices = @transform_6, window_bounds = array<i64: 3, 32, 32>}, {pipeline_mode = #tpu.pipeline_mode<synchronous>, transform_indices = @transform_7, window_bounds = array<i64: 3, 8, 32>}, {pipeline_mode = #tpu.pipeline_mode<synchronous>, transform_indices = @transform_8, window_bounds = array<i64: 3, 32, 32>}, {pipeline_mode = #tpu.pipeline_mode<synchronous>, transform_indices = @transform_9, window_bounds = array<i64: 3, 1, 32>}, {pipeline_mode = #tpu.pipeline_mode<synchronous>, transform_indices = @transform_10, window_bounds = array<i64: 3, 1, 32>}, {transform_indices = @transform_11, window_bounds = array<i64: 2, 1, 32>}, {transform_indices = @transform_12, window_bounds = array<i64: 2, 32>}]} {
    %c0 = arith.constant 0 : index
    %c0_0 = arith.constant 0 : index
    %0 = vector.load %arg1[%c0, %c0_0] : memref<2x512xbf16, #tpu.memory_space<vmem>>, vector<2x512xbf16>
    %c0_1 = arith.constant 0 : index
    %c0_2 = arith.constant 0 : index
    %1 = vector.load %arg5[%c0_1, %c0_2] : memref<512x32xbf16, #tpu.memory_space<vmem>>, vector<512x32xbf16>
    %cst = arith.constant dense<0.000000e+00> : vector<2x32xf32>
    %2 = tpu.matmul %0, %1, %cst {dimension_numbers = #tpu.dot_dimension_numbers<[1], [0], [0], [1], [0, 0, 1, 1], [], []>} : vector<2x512xbf16>, vector<512x32xbf16>, vector<2x32xf32> -> vector<2x32xf32>
    %c0_3 = arith.constant 0 : index
    %c0_4 = arith.constant 0 : index
    %3 = vector.load %arg6[%c0_3, %c0_4] : memref<1x32xf32, #tpu.memory_space<vmem>>, vector<1x32xf32>
    %4 = vector.broadcast %3 : vector<1x32xf32> to vector<2x32xf32>
    %5 = arith.addf %2, %4 : vector<2x32xf32>
    %cst_5 = arith.constant 0.000000e+00 : f32
    %6 = vector.broadcast %cst_5 : f32 to vector<2x32xf32>
    %7 = arith.maximumf %5, %6 : vector<2x32xf32>
    %c0_6 = arith.constant 0 : index
    %c0_7 = arith.constant 0 : index
    %8 = vector.load %arg13[%c0_6, %c0_7] : memref<2x32xf32, #tpu.memory_space<vmem>>, vector<2x32xf32>
    tpu.vector_store %arg13[%c0_6, %c0_7], %7 {strides = array<i32>} : memref<2x32xf32, #tpu.memory_space<vmem>>, vector<2x32xf32>,
    %c0_8 = arith.constant 0 : index
    %c0_9 = arith.constant 0 : index
    %c0_10 = arith.constant 0 : index
    %9 = vector.load %arg3[%c0_8, %c0_9, %c0_10] : memref<2x1x32xf32, #tpu.memory_space<vmem>>, vector<2x1x32xf32>
    %10 = vector.shape_cast %9 : vector<2x1x32xf32> to vector<2x32xf32>
    %c0_11 = arith.constant 0 : index
    %c0_12 = arith.constant 0 : index
    %11 = vector.load %arg4[%c0_11, %c0_12] : memref<2x1xf32, #tpu.memory_space<vmem>>, vector<2x1xf32>
    %12 = vector.broadcast %11 : vector<2x1xf32> to vector<2x32xf32>
    %13 = arith.mulf %10, %12 : vector<2x32xf32>
    %14 = arith.truncf %7 : vector<2x32xf32> to vector<2x32xbf16>
    %15 = arith.truncf %13 : vector<2x32xf32> to vector<2x32xbf16>
    %c0_13 = arith.constant 0 : index
    %c0_14 = arith.constant 0 : index
    %16 = vector.load %arg2[%c0_13, %c0_14] : memref<2x8xbf16, #tpu.memory_space<vmem>>, vector<2x8xbf16>
    %c0_15 = arith.constant 0 : index
    %c0_16 = arith.constant 0 : index
    %c0_17 = arith.constant 0 : index
    %17 = vector.load %arg7[%c0_15, %c0_16, %c0_17] : memref<3x32x32xbf16, #tpu.memory_space<vmem>>, vector<1x32x32xbf16>
    %18 = vector.shape_cast %17 : vector<1x32x32xbf16> to vector<32x32xbf16>
    %cst_18 = arith.constant dense<0.000000e+00> : vector<2x32xf32>
    %19 = tpu.matmul %14, %18, %cst_18 {dimension_numbers = #tpu.dot_dimension_numbers<[1], [0], [0], [1], [0, 0, 1, 1], [], []>} : vector<2x32xbf16>, vector<32x32xbf16>, vector<2x32xf32> -> vector<2x32xf32>
    %c0_19 = arith.constant 0 : index
    %c0_20 = arith.constant 0 : index
    %c0_21 = arith.constant 0 : index
    %20 = vector.load %arg8[%c0_19, %c0_20, %c0_21] : memref<3x8x32xbf16, #tpu.memory_space<vmem>>, vector<1x8x32xbf16>
    %21 = vector.shape_cast %20 : vector<1x8x32xbf16> to vector<8x32xbf16>
    %cst_22 = arith.constant dense<0.000000e+00> : vector<2x32xf32>
    %22 = tpu.matmul %16, %21, %cst_22 {dimension_numbers = #tpu.dot_dimension_numbers<[1], [0], [0], [1], [0, 0, 1, 1], [], []>} : vector<2x8xbf16>, vector<8x32xbf16>, vector<2x32xf32> -> vector<2x32xf32>
    %23 = arith.addf %19, %22 : vector<2x32xf32>
    %c0_23 = arith.constant 0 : index
    %c0_24 = arith.constant 0 : index
    %c0_25 = arith.constant 0 : index
    %24 = vector.load %arg10[%c0_23, %c0_24, %c0_25] : memref<3x1x32xf32, #tpu.memory_space<vmem>>, vector<1x1x32xf32>
    %25 = vector.shape_cast %24 : vector<1x1x32xf32> to vector<1x32xf32>
    %26 = vector.broadcast %25 : vector<1x32xf32> to vector<2x32xf32>
    %27 = arith.addf %23, %26 : vector<2x32xf32>
    %c0_26 = arith.constant 0 : index
    %c0_27 = arith.constant 0 : index
    %c0_28 = arith.constant 0 : index
    %28 = vector.load %arg9[%c0_26, %c0_27, %c0_28] : memref<3x32x32xbf16, #tpu.memory_space<vmem>>, vector<1x32x32xbf16>
    %29 = vector.shape_cast %28 : vector<1x32x32xbf16> to vector<32x32xbf16>
    %cst_29 = arith.constant dense<0.000000e+00> : vector<2x32xf32>
    %30 = tpu.matmul %15, %29, %cst_29 {dimension_numbers = #tpu.dot_dimension_numbers<[1], [0], [0], [1], [0, 0, 1, 1], [], []>} : vector<2x32xbf16>, vector<32x32xbf16>, vector<2x32xf32> -> vector<2x32xf32>
    %c0_30 = arith.constant 0 : index
    %c0_31 = arith.constant 0 : index
    %c0_32 = arith.constant 0 : index
    %31 = vector.load %arg11[%c0_30, %c0_31, %c0_32] : memref<3x1x32xf32, #tpu.memory_space<vmem>>, vector<1x1x32xf32>
    %32 = vector.shape_cast %31 : vector<1x1x32xf32> to vector<1x32xf32>
    %33 = vector.broadcast %32 : vector<1x32xf32> to vector<2x32xf32>
    %34 = arith.addf %30, %33 : vector<2x32xf32>
    %c1 = arith.constant 1 : index
    %c0_33 = arith.constant 0 : index
    %c0_34 = arith.constant 0 : index
    %35 = vector.load %arg7[%c1, %c0_33, %c0_34] : memref<3x32x32xbf16, #tpu.memory_space<vmem>>, vector<1x32x32xbf16>
    %36 = vector.shape_cast %35 : vector<1x32x32xbf16> to vector<32x32xbf16>
    %cst_35 = arith.constant dense<0.000000e+00> : vector<2x32xf32>
    %37 = tpu.matmul %14, %36, %cst_35 {dimension_numbers = #tpu.dot_dimension_numbers<[1], [0], [0], [1], [0, 0, 1, 1], [], []>} : vector<2x32xbf16>, vector<32x32xbf16>, vector<2x32xf32> -> vector<2x32xf32>
    %c1_36 = arith.constant 1 : index
    %c0_37 = arith.constant 0 : index
    %c0_38 = arith.constant 0 : index
    %38 = vector.load %arg8[%c1_36, %c0_37, %c0_38] : memref<3x8x32xbf16, #tpu.memory_space<vmem>>, vector<1x8x32xbf16>
    %39 = vector.shape_cast %38 : vector<1x8x32xbf16> to vector<8x32xbf16>
    %cst_39 = arith.constant dense<0.000000e+00> : vector<2x32xf32>
    %40 = tpu.matmul %16, %39, %cst_39 {dimension_numbers = #tpu.dot_dimension_numbers<[1], [0], [0], [1], [0, 0, 1, 1], [], []>} : vector<2x8xbf16>, vector<8x32xbf16>, vector<2x32xf32> -> vector<2x32xf32>
    %41 = arith.addf %37, %40 : vector<2x32xf32>
    %c1_40 = arith.constant 1 : index
    %c0_41 = arith.constant 0 : index
    %c0_42 = arith.constant 0 : index
    %42 = vector.load %arg10[%c1_40, %c0_41, %c0_42] : memref<3x1x32xf32, #tpu.memory_space<vmem>>, vector<1x1x32xf32>
    %43 = vector.shape_cast %42 : vector<1x1x32xf32> to vector<1x32xf32>
    %44 = vector.broadcast %43 : vector<1x32xf32> to vector<2x32xf32>
    %45 = arith.addf %41, %44 : vector<2x32xf32>
    %c1_43 = arith.constant 1 : index
    %c0_44 = arith.constant 0 : index
    %c0_45 = arith.constant 0 : index
    %46 = vector.load %arg9[%c1_43, %c0_44, %c0_45] : memref<3x32x32xbf16, #tpu.memory_space<vmem>>, vector<1x32x32xbf16>
    %47 = vector.shape_cast %46 : vector<1x32x32xbf16> to vector<32x32xbf16>
    %cst_46 = arith.constant dense<0.000000e+00> : vector<2x32xf32>
    %48 = tpu.matmul %15, %47, %cst_46 {dimension_numbers = #tpu.dot_dimension_numbers<[1], [0], [0], [1], [0, 0, 1, 1], [], []>} : vector<2x32xbf16>, vector<32x32xbf16>, vector<2x32xf32> -> vector<2x32xf32>
    %c1_47 = arith.constant 1 : index
    %c0_48 = arith.constant 0 : index
    %c0_49 = arith.constant 0 : index
    %49 = vector.load %arg11[%c1_47, %c0_48, %c0_49] : memref<3x1x32xf32, #tpu.memory_space<vmem>>, vector<1x1x32xf32>
    %50 = vector.shape_cast %49 : vector<1x1x32xf32> to vector<1x32xf32>
    %51 = vector.broadcast %50 : vector<1x32xf32> to vector<2x32xf32>
    %52 = arith.addf %48, %51 : vector<2x32xf32>
    %c2 = arith.constant 2 : index
    %c0_50 = arith.constant 0 : index
    %c0_51 = arith.constant 0 : index
    %53 = vector.load %arg7[%c2, %c0_50, %c0_51] : memref<3x32x32xbf16, #tpu.memory_space<vmem>>, vector<1x32x32xbf16>
    %54 = vector.shape_cast %53 : vector<1x32x32xbf16> to vector<32x32xbf16>
    %cst_52 = arith.constant dense<0.000000e+00> : vector<2x32xf32>
    %55 = tpu.matmul %14, %54, %cst_52 {dimension_numbers = #tpu.dot_dimension_numbers<[1], [0], [0], [1], [0, 0, 1, 1], [], []>} : vector<2x32xbf16>, vector<32x32xbf16>, vector<2x32xf32> -> vector<2x32xf32>
    %c2_53 = arith.constant 2 : index
    %c0_54 = arith.constant 0 : index
    %c0_55 = arith.constant 0 : index
    %56 = vector.load %arg8[%c2_53, %c0_54, %c0_55] : memref<3x8x32xbf16, #tpu.memory_space<vmem>>, vector<1x8x32xbf16>
    %57 = vector.shape_cast %56 : vector<1x8x32xbf16> to vector<8x32xbf16>
    %cst_56 = arith.constant dense<0.000000e+00> : vector<2x32xf32>
    %58 = tpu.matmul %16, %57, %cst_56 {dimension_numbers = #tpu.dot_dimension_numbers<[1], [0], [0], [1], [0, 0, 1, 1], [], []>} : vector<2x8xbf16>, vector<8x32xbf16>, vector<2x32xf32> -> vector<2x32xf32>
    %59 = arith.addf %55, %58 : vector<2x32xf32>
    %c2_57 = arith.constant 2 : index
    %c0_58 = arith.constant 0 : index
    %c0_59 = arith.constant 0 : index
    %60 = vector.load %arg10[%c2_57, %c0_58, %c0_59] : memref<3x1x32xf32, #tpu.memory_space<vmem>>, vector<1x1x32xf32>
    %61 = vector.shape_cast %60 : vector<1x1x32xf32> to vector<1x32xf32>
    %62 = vector.broadcast %61 : vector<1x32xf32> to vector<2x32xf32>
    %63 = arith.addf %59, %62 : vector<2x32xf32>
    %c2_60 = arith.constant 2 : index
    %c0_61 = arith.constant 0 : index
    %c0_62 = arith.constant 0 : index
    %64 = vector.load %arg9[%c2_60, %c0_61, %c0_62] : memref<3x32x32xbf16, #tpu.memory_space<vmem>>, vector<1x32x32xbf16>
    %65 = vector.shape_cast %64 : vector<1x32x32xbf16> to vector<32x32xbf16>
    %cst_63 = arith.constant dense<0.000000e+00> : vector<2x32xf32>
    %66 = tpu.matmul %15, %65, %cst_63 {dimension_numbers = #tpu.dot_dimension_numbers<[1], [0], [0], [1], [0, 0, 1, 1], [], []>} : vector<2x32xbf16>, vector<32x32xbf16>, vector<2x32xf32> -> vector<2x32xf32>
    %c2_64 = arith.constant 2 : index
    %c0_65 = arith.constant 0 : index
    %c0_66 = arith.constant 0 : index
    %67 = vector.load %arg11[%c2_64, %c0_65, %c0_66] : memref<3x1x32xf32, #tpu.memory_space<vmem>>, vector<1x1x32xf32>
    %68 = vector.shape_cast %67 : vector<1x1x32xf32> to vector<1x32xf32>
    %69 = vector.broadcast %68 : vector<1x32xf32> to vector<2x32xf32>
    %70 = arith.addf %66, %69 : vector<2x32xf32>
    %71 = arith.addf %27, %34 : vector<2x32xf32>
    %72 = arith.negf %71 : vector<2x32xf32>
    %73 = math.exp %72 : vector<2x32xf32>
    %cst_67 = arith.constant 1.000000e+00 : f32
    %74 = vector.broadcast %cst_67 : f32 to vector<2x32xf32>
    %75 = arith.addf %74, %73 : vector<2x32xf32>
    %76 = arith.divf %74, %75 : vector<2x32xf32>
    %77 = arith.addf %45, %52 : vector<2x32xf32>
    %78 = arith.negf %77 : vector<2x32xf32>
    %79 = math.exp %78 : vector<2x32xf32>
    %cst_68 = arith.constant 1.000000e+00 : f32
    %80 = vector.broadcast %cst_68 : f32 to vector<2x32xf32>
    %81 = arith.addf %80, %79 : vector<2x32xf32>
    %82 = arith.divf %80, %81 : vector<2x32xf32>
    %83 = arith.mulf %76, %70 : vector<2x32xf32>
    %84 = arith.addf %63, %83 : vector<2x32xf32>
    %85 = math.tanh %84 : vector<2x32xf32>
    %cst_69 = arith.constant 1.000000e+00 : f32
    %86 = vector.broadcast %cst_69 : f32 to vector<2x32xf32>
    %87 = arith.subf %86, %82 : vector<2x32xf32>
    %88 = arith.mulf %87, %85 : vector<2x32xf32>
    %89 = arith.mulf %82, %13 : vector<2x32xf32>
    %90 = arith.addf %88, %89 : vector<2x32xf32>
    %c0_70 = arith.constant 0 : index
    %c0_71 = arith.constant 0 : index
    %c0_72 = arith.constant 0 : index
    %91 = vector.load %arg12[%c0_70, %c0_71, %c0_72] : memref<2x1x32xf32, #tpu.memory_space<vmem>>, vector<2x1x32xf32>
    %92 = vector.shape_cast %91 : vector<2x1x32xf32> to vector<2x32xf32>
    %93 = vector.shape_cast %90 : vector<2x32xf32> to vector<2x1x32xf32>
    tpu.vector_store %arg12[%c0_70, %c0_71, %c0_72], %93 {strides = array<i32>} : memref<2x1x32xf32, #tpu.memory_space<vmem>>, vector<2x1x32xf32>,
    return
  }
  func.func @transform_0(%arg0: i32) -> (i32, i32) {
    %c0_i32 = arith.constant 0 : i32
    %c0_i32_0 = arith.constant 0 : i32
    return %arg0, %c0_i32 : i32, i32
  }
  func.func @transform_1(%arg0: i32) -> (i32, i32) {
    %c0_i32 = arith.constant 0 : i32
    %c0_i32_0 = arith.constant 0 : i32
    return %arg0, %c0_i32 : i32, i32
  }
  func.func @transform_2(%arg0: i32) -> (i32, i32, i32) {
    %c0_i32 = arith.constant 0 : i32
    %c0_i32_0 = arith.constant 0 : i32
    %c0_i32_1 = arith.constant 0 : i32
    return %arg0, %c0_i32, %c0_i32_0 : i32, i32, i32
  }
  func.func @transform_3(%arg0: i32) -> (i32, i32) {
    %c0_i32 = arith.constant 0 : i32
    %c0_i32_0 = arith.constant 0 : i32
    return %arg0, %c0_i32 : i32, i32
  }
  func.func @transform_4(%arg0: i32) -> (i32, i32) {
    %c0_i32 = arith.constant 0 : i32
    %c0_i32_0 = arith.constant 0 : i32
    %c0_i32_1 = arith.constant 0 : i32
    return %c0_i32, %c0_i32_0 : i32, i32
  }
  func.func @transform_5(%arg0: i32) -> (i32, i32) {
    %c0_i32 = arith.constant 0 : i32
    %c0_i32_0 = arith.constant 0 : i32
    %c0_i32_1 = arith.constant 0 : i32
    return %c0_i32, %c0_i32_0 : i32, i32
  }
  func.func @transform_6(%arg0: i32) -> (i32, i32, i32) {
    %c0_i32 = arith.constant 0 : i32
    %c0_i32_0 = arith.constant 0 : i32
    %c0_i32_1 = arith.constant 0 : i32
    %c0_i32_2 = arith.constant 0 : i32
    return %c0_i32, %c0_i32_0, %c0_i32_1 : i32, i32, i32
  }
  func.func @transform_7(%arg0: i32) -> (i32, i32, i32) {
    %c0_i32 = arith.constant 0 : i32
    %c0_i32_0 = arith.constant 0 : i32
    %c0_i32_1 = arith.constant 0 : i32
    %c0_i32_2 = arith.constant 0 : i32
    return %c0_i32, %c0_i32_0, %c0_i32_1 : i32, i32, i32
  }
  func.func @transform_8(%arg0: i32) -> (i32, i32, i32) {
    %c0_i32 = arith.constant 0 : i32
    %c0_i32_0 = arith.constant 0 : i32
    %c0_i32_1 = arith.constant 0 : i32
    %c0_i32_2 = arith.constant 0 : i32
    return %c0_i32, %c0_i32_0, %c0_i32_1 : i32, i32, i32
  }
  func.func @transform_9(%arg0: i32) -> (i32, i32, i32) {
    %c0_i32 = arith.constant 0 : i32
    %c0_i32_0 = arith.constant 0 : i32
    %c0_i32_1 = arith.constant 0 : i32
    %c0_i32_2 = arith.constant 0 : i32
    return %c0_i32, %c0_i32_0, %c0_i32_1 : i32, i32, i32
  }
  func.func @transform_10(%arg0: i32) -> (i32, i32, i32) {
    %c0_i32 = arith.constant 0 : i32
    %c0_i32_0 = arith.constant 0 : i32
    %c0_i32_1 = arith.constant 0 : i32
    %c0_i32_2 = arith.constant 0 : i32
    return %c0_i32, %c0_i32_0, %c0_i32_1 : i32, i32, i32
  }
  func.func @transform_11(%arg0: i32) -> (i32, i32, i32) {
    %c0_i32 = arith.constant 0 : i32
    %c0_i32_0 = arith.constant 0 : i32
    %c0_i32_1 = arith.constant 0 : i32
    return %arg0, %c0_i32, %c0_i32_0 : i32, i32, i32
  }
  func.func @transform_12(%arg0: i32) -> (i32, i32) {
    %c0_i32 = arith.constant 0 : i32
    %c0_i32_0 = arith.constant 0 : i32
    return %arg0, %c0_i32 : i32, i32
  }
}

</mosaic_0001>

<llo_original>
// kernel: pointnav_baseline_net_forward.4
$region0: #{pointnav_baseline_net_forward.4}
  #allocation0 [shape = 'u32[]', space=smem, size = 0x4, offset = 0x4, fixed_abs, tag = 'smem constant byte address 0x4 - core index']
  #allocation1 [shape = 'u32[72,128]{1,0:T(1,128)}', space=vmem, size = 0x9000, scoped, tag = 'internal scratch']
  %s0 = inlined_call_operand.vmem [shape: s8[450,192], index: 0, kind: input, shape index: {}]
  %s1 = inlined_call_operand.vmem [shape: bf16[192,32], index: 1, kind: input, shape index: {}]
  %s2 = inlined_call_operand.vmem [shape: f32[1,32], index: 2, kind: input, shape index: {}]
  %s3 = inlined_call_operand.vmem [shape: bf16[450,32], index: 3, kind: output, shape index: {}]
  %s4 = sld [smem:[#allocation0]]
  $region89: #{pointnav_baseline_net_forward.4} parent=0
    _
  %s6 = ssub.s32 1, %s4
  %s7 = scalar_select 0, %s6, %s4
  $region1: #{pointnav_baseline_net_forward.4} parent=0
    #allocation2 [shape = 'u8[131072]{0}', space=vmem, size = 0x20000, scoped, tag = 'output window, operand 0']
    loop: start=0, step=1, limit=4
    $region2: #{pointnav_baseline_net_forward.4} parent=1 // loop_pre_header
      _
    $region3: #{pointnav_baseline_net_forward.4} parent=1 // loop_header
      %s9 = sphi 0, %s13
      %p10 = scmp.ge.s32.totalorder %s9, 4
      %s19 = sphi 0, %s21
      %s22 = sphi 0, %s19
      %s23 = sphi 0, %s22
      %s39 = sphi 0, %s23
      %s43 = sphi 0, %s43
      %s45 = sphi 0, %s43
      %s46 = sphi 0, %s45
      %s60 = sphi 0, %s46
      %s64 = sphi 0, %s64
      %s66 = sphi 0, %s64
      %s67 = sphi 0, %s66
      %s81 = sphi 0, %s67
      %s87 = sphi 0, %s89
      %s90 = sphi 0, %s87
      %s91 = sphi 0, %s90
      %s107 = sphi 0, %s91
    $region4: #{pointnav_baseline_net_forward.4} parent=1 // loop_header_branch
      %12 = sbr.rel (%p10) target = $region8
    $region5: #{pointnav_baseline_net_forward.4} parent=1 // loop_body
      %s14 = ssub.s32 %s9, 1
      %s15 = ssub.s32 %s9, 2
      %s16 = sadd.s32 %s9, 1
      %s17 = ssub.s32 %s9, %s16
      %p18 = scmp.eq.s32.totalorder %s17, 0
      %s20 = sadd.s32 %s19, 1
      %s21 = scalar_select %p18, %s19, %s20
      %p24 = pneg %p18
      %p25 = scmp.eq.s32.totalorder %s9, 1
      %p26 = por %p24, %p25
      %p27 = scmp.ne.s32.totalorder %s19, %s22
      %p28 = scmp.eq.s32.totalorder %s9, 0
      %p29 = por %p27, %p28
      %p30 = scmp.ne.s32.totalorder %s19, %s22
      %p31 = scmp.eq.s32.totalorder %s14, 1
      %p32 = por %p30, %p31
      %p33 = scmp.ne.s32.totalorder %s22, %s23
      %p34 = scmp.eq.s32.totalorder %s14, 0
      %p35 = por %p33, %p34
      %p36 = scmp.ne.s32.totalorder %s22, %s23
      %p37 = scmp.eq.s32.totalorder %s15, 1
      %p38 = por %p36, %p37
      %p40 = scmp.ne.s32.totalorder %s23, %s39
      %p41 = scmp.eq.s32.totalorder %s15, 0
      %p42 = por %p40, %p41
      %s44 = sadd.s32 %s43, 1
      %p47 = scmp.eq.s32.totalorder %s9, 1
      %p48 = scmp.ne.s32.totalorder %s43, %s45
      %p49 = scmp.eq.s32.totalorder %s9, 0
      %p50 = por %p48, %p49
      %p51 = scmp.ne.s32.totalorder %s43, %s45
      %p52 = scmp.eq.s32.totalorder %s14, 1
      %p53 = por %p51, %p52
      %p54 = scmp.ne.s32.totalorder %s45, %s46
      %p55 = scmp.eq.s32.totalorder %s14, 0
      %p56 = por %p54, %p55
      %p57 = scmp.ne.s32.totalorder %s45, %s46
      %p58 = scmp.eq.s32.totalorder %s15, 1
      %p59 = por %p57, %p58
      %p61 = scmp.ne.s32.totalorder %s46, %s60
      %p62 = scmp.eq.s32.totalorder %s15, 0
      %p63 = por %p61, %p62
      %s65 = sadd.s32 %s64, 1
      %p68 = scmp.eq.s32.totalorder %s9, 1
      %p69 = scmp.ne.s32.totalorder %s64, %s66
      %p70 = scmp.eq.s32.totalorder %s9, 0
      %p71 = por %p69, %p70
      %p72 = scmp.ne.s32.totalorder %s64, %s66
      %p73 = scmp.eq.s32.totalorder %s14, 1
      %p74 = por %p72, %p73
      %p75 = scmp.ne.s32.totalorder %s66, %s67
      %p76 = scmp.eq.s32.totalorder %s14, 0
      %p77 = por %p75, %p76
      %p78 = scmp.ne.s32.totalorder %s66, %s67
      %p79 = scmp.eq.s32.totalorder %s15, 1
      %p80 = por %p78, %p79
      %p82 = scmp.ne.s32.totalorder %s67, %s81
      %p83 = scmp.eq.s32.totalorder %s15, 0
      %p84 = por %p82, %p83
      %s85 = ssub.s32 %s9, %s16
      %p86 = scmp.eq.s32.totalorder %s85, 0
      %s88 = sadd.s32 %s87, 1
      %s89 = scalar_select %p86, %s87, %s88
      %p92 = pneg %p86
      %p93 = scmp.eq.s32.totalorder %s9, 1
      %p94 = por %p92, %p93
      %p95 = scmp.ne.s32.totalorder %s87, %s90
      %p96 = scmp.eq.s32.totalorder %s9, 0
      %p97 = por %p95, %p96
      %p98 = scmp.ne.s32.totalorder %s87, %s90
      %p99 = scmp.eq.s32.totalorder %s14, 1
      %p100 = por %p98, %p99
      %p101 = scmp.ne.s32.totalorder %s90, %s91
      %p102 = scmp.eq.s32.totalorder %s14, 0
      %p103 = por %p101, %p102
      %p104 = scmp.ne.s32.totalorder %s90, %s91
      %p105 = scmp.eq.s32.totalorder %s15, 1
      %p106 = por %p104, %p105
      %p108 = scmp.ne.s32.totalorder %s91, %s107
      %p109 = scmp.eq.s32.totalorder %s15, 0
      %p110 = por %p108, %p109
      %p111 = scmp.le.s32.totalorder 1, %s9
      %p112 = scmp.lt.s32.totalorder %s9, 3
      %p113 = pnand %p111, %p112
      %p114 = pneg %p113
      // Predicated region
      $region9: #{pointnav_baseline_net_forward.4} parent=5 // pred_check
        _
      $region10: #{pointnav_baseline_net_forward.4} parent=5 // pred_check_branch
        %116 = sbr.rel (%p113) target = $region12
      $region11: #{pointnav_baseline_net_forward.4} parent=5 // pred_region
        %s117 = ssub.s32 %s9, 1
        // Predicated region
        $region13: #{pointnav_baseline_net_forward.4} parent=11 // pred_check
          %p118 = pneg %p56
        $region14: #{pointnav_baseline_net_forward.4} parent=11 // pred_check_branch
          %120 = sbr.rel (%p118) target = $region16
        $region15: #{pointnav_baseline_net_forward.4} parent=11 // pred_region
          _
        $region16: #{pointnav_baseline_net_forward.4} parent=11 // pred_fallthru
          _
        // Predicated region
        $region17: #{pointnav_baseline_net_forward.4} parent=11 // pred_check
          %p121 = pneg %p77
        $region18: #{pointnav_baseline_net_forward.4} parent=11 // pred_check_branch
          %123 = sbr.rel (%p121) target = $region20
        $region19: #{pointnav_baseline_net_forward.4} parent=11 // pred_region
          _
        $region20: #{pointnav_baseline_net_forward.4} parent=11 // pred_fallthru
          _
      $region12: #{pointnav_baseline_net_forward.4} parent=5 // pred_fallthru
        _
      %p124 = scmp.lt.s32.totalorder %s9, 2
      // Predicated region
      $region21: #{pointnav_baseline_net_forward.4} parent=5 // pred_check
        %p125 = pneg %p124
      $region22: #{pointnav_baseline_net_forward.4} parent=5 // pred_check_branch
        %127 = sbr.rel (%p125) target = $region24
      $region23: #{pointnav_baseline_net_forward.4} parent=5 // pred_region
        // Predicated region
        $region25: #{pointnav_baseline_net_forward.4} parent=23 // pred_check
          %p128 = pneg %p29
        $region26: #{pointnav_baseline_net_forward.4} parent=23 // pred_check_branch
          %130 = sbr.rel (%p128) target = $region28
        $region27: #{pointnav_baseline_net_forward.4} parent=23 // pred_region
          %s131 = smul.u32 32, %s9
          %s132 = ssub.s32 57, %s131
          %p133 = scmp.lt.s32.totalorder %s132, 32
          %s134 = scalar_select %p133, %s132, 32
          %s135 = smul.u32 2, %s134
          %s136 = smul.u32 %s135, 2
          %p137 = scmp.lt.s32.totalorder %s131, 56
          %s138 = scalar_select %p137, %s131, 56
          %s139 = smul.addr %s138, 2
          %s140 = smul.addr %s139, 2
          %s141 = scalar_lea.vmem %s0, %s140
          %s142 = smul.u32 32, %s9
          %s143 = ssub.s32 57, %s142
          %p144 = scmp.lt.s32.totalorder %s143, 32
          %s145 = scalar_select %p144, %s143, 32
          %s146 = smul.u32 2, %s145
          %s147 = smul.u32 %s146, 2
        $region28: #{pointnav_baseline_net_forward.4} parent=23 // pred_fallthru
          _
      $region24: #{pointnav_baseline_net_forward.4} parent=5 // pred_fallthru
        _
      %p148 = scmp.le.s32.totalorder 1, %s9
      %p149 = scmp.lt.s32.totalorder %s9, 3
      %p150 = pnand %p148, %p149
      %p151 = pneg %p150
      // Predicated region
      $region29: #{pointnav_baseline_net_forward.4} parent=5 // pred_check
        _
      $region30: #{pointnav_baseline_net_forward.4} parent=5 // pred_check_branch
        %153 = sbr.rel (%p150) target = $region32
      $region31: #{pointnav_baseline_net_forward.4} parent=5 // pred_region
        %s154 = ssub.s32 %s9, 1
        %s155 = smul.u32 32, %s14
        %s156 = ssub.s32 57, %s155
        %p157 = scmp.lt.s32.totalorder %s156, 32
        %s158 = scalar_select %p157, %s156, 32
        %s159 = smul.u32 2, %s158
        %s160 = smul.u32 %s159, 2
        %p161 = scmp.lt.s32.totalorder %s155, 56
        %s162 = scalar_select %p161, %s155, 56
        %s163 = smul.addr %s162, 2
        %s164 = smul.addr %s163, 2
        %s165 = scalar_lea.vmem %s0, %s164
        %p166 = pneg %p35
        %p167 = pneg %p32
        %p168 = pneg %p56
        %p169 = pneg %p53
        %p170 = pneg %p77
        %p171 = pneg %p74
        %p172 = pneg %p103
        %p173 = pneg %p100
        %s174 = sand.u32 %s90, 1
        %s175 = sand.u32 %s90, 1
        %s176 = smul.addr %s175, 128
        %s177 = scalar_lea.vmem [#allocation2], %s176
        %s178 = smul.u32 32, %s14
        %s179 = ssub.s32 57, %s178
        %p180 = scmp.lt.s32.totalorder %s179, 32
        %s181 = scalar_select %p180, %s179, 32
        %s182 = smul.u32 2, %s181
        %s183 = smul.u32 %s182, 2
        %p184 = scmp.lt.s32.totalorder %s178, 56
        %s185 = scalar_select %p184, %s178, 56
        %s186 = smul.addr %s185, 2
        %s187 = smul.addr %s186, 2
        %s188 = scalar_lea.vmem %s0, %s187
        %s189 = smul.u32 32, %s14
        %s190 = ssub.s32 57, %s189
        %p191 = scmp.lt.s32.totalorder %s190, 32
        %s192 = scalar_select %p191, %s190, 32
        %s193 = smul.u32 2, %s192
        %s194 = smul.u32 %s193, 2
        %s195 = smul.u32 32, %s14
        %s196 = ssub.s32 57, %s195
        %p197 = scmp.lt.s32.totalorder %s196, 32
        %s198 = scalar_select %p197, %s196, 32
        %s199 = smul.u32 4, %s198
        %v201 = vld [vmem:[%s188] sm:$0xf]
        %v202 = vld [vmem:[%s188 + $0x4] sm:$0xf]
        %v203 = vld [vmem:[%s188 + $0x8] sm:$0xf]
        %v204 = vld [vmem:[%s188 + $0xc] sm:$0xf]
        %v205 = vld [vmem:[%s188 + $0x10] sm:$0xf]
        %v206 = vld [vmem:[%s188 + $0x14] sm:$0xf]
        %v207 = vld [vmem:[%s188 + $0x18] sm:$0xf]
        %v208 = vld [vmem:[%s188 + $0x1c] sm:$0xf]
        %v209 = vld [vmem:[%s188 + $0x20] sm:$0xf]
        %v210 = vld [vmem:[%s188 + $0x24] sm:$0xf]
        %v211 = vld [vmem:[%s188 + $0x28] sm:$0xf]
        %v212 = vld [vmem:[%s188 + $0x2c] sm:$0xf]
        %v213 = vld [vmem:[%s188 + $0x30] sm:$0xf]
        %v214 = vld [vmem:[%s188 + $0x34] sm:$0xf]
        %v215 = vld [vmem:[%s188 + $0x38] sm:$0xf]
        %v216 = vld [vmem:[%s188 + $0x3c] sm:$0xf]
        %v217 = vld [vmem:[%s188 + $0x40] sm:$0xf]
        %v218 = vld [vmem:[%s188 + $0x44] sm:$0xf]
        %v219 = vld [vmem:[%s188 + $0x48] sm:$0xf]
        %v220 = vld [vmem:[%s188 + $0x4c] sm:$0xf]
        %v221 = vld [vmem:[%s188 + $0x50] sm:$0xf]
        %v222 = vld [vmem:[%s188 + $0x54] sm:$0xf]
        %v223 = vld [vmem:[%s188 + $0x58] sm:$0xf]
        %v224 = vld [vmem:[%s188 + $0x5c] sm:$0xf]
        %v225 = vld [vmem:[%s188 + $0x60] sm:$0xf]
        %v226 = vld [vmem:[%s188 + $0x64] sm:$0xf]
        %v227 = vld [vmem:[%s188 + $0x68] sm:$0xf]
        %v228 = vld [vmem:[%s188 + $0x6c] sm:$0xf]
        %v229 = vld [vmem:[%s188 + $0x70] sm:$0xf]
        %v230 = vld [vmem:[%s188 + $0x74] sm:$0xf]
        %v231 = vld [vmem:[%s188 + $0x78] sm:$0xf]
        %v232 = vld [vmem:[%s188 + $0x7c] sm:$0xf]
        %v233 = vunpack.c.0.s8 %v201
        %v234 = vunpack.c.1.s8 %v201
        %v235 = vunpack.c.0.s8 %v202
        %v236 = vunpack.c.1.s8 %v202
        %v237 = vunpack.c.0.s8 %v203
        %v238 = vunpack.c.1.s8 %v203
        %v239 = vunpack.c.0.s8 %v204
        %v240 = vunpack.c.1.s8 %v204
        %v241 = vunpack.c.0.s8 %v205
        %v242 = vunpack.c.1.s8 %v205
        %v243 = vunpack.c.0.s8 %v206
        %v244 = vunpack.c.1.s8 %v206
        %v245 = vunpack.c.0.s8 %v207
        %v246 = vunpack.c.1.s8 %v207
        %v247 = vunpack.c.0.s8 %v208
        %v248 = vunpack.c.1.s8 %v208
        %v249 = vunpack.c.0.s8 %v209
        %v250 = vunpack.c.1.s8 %v209
        %v251 = vunpack.c.0.s8 %v210
        %v252 = vunpack.c.1.s8 %v210
        %v253 = vunpack.c.0.s8 %v211
        %v254 = vunpack.c.1.s8 %v211
        %v255 = vunpack.c.0.s8 %v212
        %v256 = vunpack.c.1.s8 %v212
        %v257 = vunpack.c.0.s8 %v213
        %v258 = vunpack.c.1.s8 %v213
        %v259 = vunpack.c.0.s8 %v214
        %v260 = vunpack.c.1.s8 %v214
        %v261 = vunpack.c.0.s8 %v215
        %v262 = vunpack.c.1.s8 %v215
        %v263 = vunpack.c.0.s8 %v216
        %v264 = vunpack.c.1.s8 %v216
        %v265 = vunpack.c.0.s8 %v217
        %v266 = vunpack.c.1.s8 %v217
        %v267 = vunpack.c.0.s8 %v218
        %v268 = vunpack.c.1.s8 %v218
        %v269 = vunpack.c.0.s8 %v219
        %v270 = vunpack.c.1.s8 %v219
        %v271 = vunpack.c.0.s8 %v220
        %v272 = vunpack.c.1.s8 %v220
        %v273 = vunpack.c.0.s8 %v221
        %v274 = vunpack.c.1.s8 %v221
        %v275 = vunpack.c.0.s8 %v222
        %v276 = vunpack.c.1.s8 %v222
        %v277 = vunpack.c.0.s8 %v223
        %v278 = vunpack.c.1.s8 %v223
        %v279 = vunpack.c.0.s8 %v224
        %v280 = vunpack.c.1.s8 %v224
        %v281 = vunpack.c.0.s8 %v225
        %v282 = vunpack.c.1.s8 %v225
        %v283 = vunpack.c.0.s8 %v226
        %v284 = vunpack.c.1.s8 %v226
        %v285 = vunpack.c.0.s8 %v227
        %v286 = vunpack.c.1.s8 %v227
        %v287 = vunpack.c.0.s8 %v228
        %v288 = vunpack.c.1.s8 %v228
        %v289 = vunpack.c.0.s8 %v229
        %v290 = vunpack.c.1.s8 %v229
        %v291 = vunpack.c.0.s8 %v230
        %v292 = vunpack.c.1.s8 %v230
        %v293 = vunpack.c.0.s8 %v231
        %v294 = vunpack.c.1.s8 %v231
        %v295 = vunpack.c.0.s8 %v232
        %v296 = vunpack.c.1.s8 %v232
        %v297 = vcvt.s32.f32 %v233
        %v298 = vcvt.s32.f32 %v234
        %v299 = vcvt.s32.f32 %v235
        %v300 = vcvt.s32.f32 %v236
        %v301 = vcvt.s32.f32 %v237
        %v302 = vcvt.s32.f32 %v238
        %v303 = vcvt.s32.f32 %v239
        %v304 = vcvt.s32.f32 %v240
        %v305 = vcvt.s32.f32 %v241
        %v306 = vcvt.s32.f32 %v242
        %v307 = vcvt.s32.f32 %v243
        %v308 = vcvt.s32.f32 %v244
        %v309 = vcvt.s32.f32 %v245
        %v310 = vcvt.s32.f32 %v246
        %v311 = vcvt.s32.f32 %v247
        %v312 = vcvt.s32.f32 %v248
        %v313 = vcvt.s32.f32 %v249
        %v314 = vcvt.s32.f32 %v250
        %v315 = vcvt.s32.f32 %v251
        %v316 = vcvt.s32.f32 %v252
        %v317 = vcvt.s32.f32 %v253
        %v318 = vcvt.s32.f32 %v254
        %v319 = vcvt.s32.f32 %v255
        %v320 = vcvt.s32.f32 %v256
        %v321 = vcvt.s32.f32 %v257
        %v322 = vcvt.s32.f32 %v258
        %v323 = vcvt.s32.f32 %v259
        %v324 = vcvt.s32.f32 %v260
        %v325 = vcvt.s32.f32 %v261
        %v326 = vcvt.s32.f32 %v262
        %v327 = vcvt.s32.f32 %v263
        %v328 = vcvt.s32.f32 %v264
        %v329 = vcvt.s32.f32 %v265
        %v330 = vcvt.s32.f32 %v266
        %v331 = vcvt.s32.f32 %v267
        %v332 = vcvt.s32.f32 %v268
        %v333 = vcvt.s32.f32 %v269
        %v334 = vcvt.s32.f32 %v270
        %v335 = vcvt.s32.f32 %v271
        %v336 = vcvt.s32.f32 %v272
        %v337 = vcvt.s32.f32 %v273
        %v338 = vcvt.s32.f32 %v274
        %v339 = vcvt.s32.f32 %v275
        %v340 = vcvt.s32.f32 %v276
        %v341 = vcvt.s32.f32 %v277
        %v342 = vcvt.s32.f32 %v278
        %v343 = vcvt.s32.f32 %v279
        %v344 = vcvt.s32.f32 %v280
        %v345 = vcvt.s32.f32 %v281
        %v346 = vcvt.s32.f32 %v282
        %v347 = vcvt.s32.f32 %v283
        %v348 = vcvt.s32.f32 %v284
        %v349 = vcvt.s32.f32 %v285
        %v350 = vcvt.s32.f32 %v286
        %v351 = vcvt.s32.f32 %v287
        %v352 = vcvt.s32.f32 %v288
        %v353 = vcvt.s32.f32 %v289
        %v354 = vcvt.s32.f32 %v290
        %v355 = vcvt.s32.f32 %v291
        %v356 = vcvt.s32.f32 %v292
        %v357 = vcvt.s32.f32 %v293
        %v358 = vcvt.s32.f32 %v294
        %v359 = vcvt.s32.f32 %v295
        %v360 = vcvt.s32.f32 %v296
        %v361 = vpack.c.bf16 %v299, %v297
        %v362 = vpack.c.bf16 %v300, %v298
        %v363 = vpack.c.bf16 %v303, %v301
        %v364 = vpack.c.bf16 %v304, %v302
        %v365 = vpack.c.bf16 %v307, %v305
        %v366 = vpack.c.bf16 %v308, %v306
        %v367 = vpack.c.bf16 %v311, %v309
        %v368 = vpack.c.bf16 %v312, %v310
        %v369 = vpack.c.bf16 %v315, %v313
        %v370 = vpack.c.bf16 %v316, %v314
        %v371 = vpack.c.bf16 %v319, %v317
        %v372 = vpack.c.bf16 %v320, %v318
        %v373 = vpack.c.bf16 %v323, %v321
        %v374 = vpack.c.bf16 %v324, %v322
        %v375 = vpack.c.bf16 %v327, %v325
        %v376 = vpack.c.bf16 %v328, %v326
        %v377 = vpack.c.bf16 %v331, %v329
        %v378 = vpack.c.bf16 %v332, %v330
        %v379 = vpack.c.bf16 %v335, %v333
        %v380 = vpack.c.bf16 %v336, %v334
        %v381 = vpack.c.bf16 %v339, %v337
        %v382 = vpack.c.bf16 %v340, %v338
        %v383 = vpack.c.bf16 %v343, %v341
        %v384 = vpack.c.bf16 %v344, %v342
        %v385 = vpack.c.bf16 %v347, %v345
        %v386 = vpack.c.bf16 %v348, %v346
        %v387 = vpack.c.bf16 %v351, %v349
        %v388 = vpack.c.bf16 %v352, %v350
        %v389 = vpack.c.bf16 %v355, %v353
        %v390 = vpack.c.bf16 %v356, %v354
        %v391 = vpack.c.bf16 %v359, %v357
        %v392 = vpack.c.bf16 %v360, %v358
        %v393 = vld [vmem:[%s1] sm:$0xf]
        %v394 = vld [vmem:[%s1 + $0x4] sm:$0xf]
        %v395 = vld [vmem:[%s1 + $0x8] sm:$0xf]
        %v396 = vld [vmem:[%s1 + $0xc] sm:$0xf]
        %v397 = vld [vmem:[%s1 + $0x10] sm:$0xf]
        %v398 = vld [vmem:[%s1 + $0x14] sm:$0xf]
        %v399 = vld [vmem:[%s1 + $0x18] sm:$0xf]
        %v400 = vld [vmem:[%s1 + $0x1c] sm:$0xf]
        %v401 = vld [vmem:[%s1 + $0x20] sm:$0xf]
        %v402 = vld [vmem:[%s1 + $0x24] sm:$0xf]
        %v403 = vld [vmem:[%s1 + $0x28] sm:$0xf]
        %v404 = vld [vmem:[%s1 + $0x2c] sm:$0xf]
        %v405 = vld [vmem:[%s1 + $0x30] sm:$0xf]
        %v406 = vld [vmem:[%s1 + $0x34] sm:$0xf]
        %v407 = vld [vmem:[%s1 + $0x38] sm:$0xf]
        %v408 = vld [vmem:[%s1 + $0x3c] sm:$0xf]
        %v409 = vld [vmem:[%s1 + $0x40] sm:$0xf]
        %v410 = vld [vmem:[%s1 + $0x44] sm:$0xf]
        %v411 = vld [vmem:[%s1 + $0x48] sm:$0xf]
        %v412 = vld [vmem:[%s1 + $0x4c] sm:$0xf]
        %v413 = vld [vmem:[%s1 + $0x50] sm:$0xf]
        %v414 = vld [vmem:[%s1 + $0x54] sm:$0xf]
        %v415 = vld [vmem:[%s1 + $0x58] sm:$0xf]
        %v416 = vld [vmem:[%s1 + $0x5c] sm:$0xf]
        %v417 = vld [vmem:[%s2] sm:$0x1]
        %v419 = vperm.slane %v417, 0
        %v445 = vunpack.c.l.b16 %v393
        %v446 = vunpack.c.l.b16 %v394
        %v447 = vunpack.c.l.b16 %v395
        %v448 = vunpack.c.l.b16 %v396
        %v449 = vunpack.c.l.b16 %v397
        %v450 = vunpack.c.l.b16 %v398
        %v451 = vunpack.c.l.b16 %v399
        %v452 = vunpack.c.l.b16 %v400
        %v453 = vunpack.c.l.b16 %v401
        %v454 = vunpack.c.l.b16 %v402
        %v455 = vunpack.c.l.b16 %v403
        %v456 = vunpack.c.l.b16 %v404
        %v457 = vunpack.c.l.b16 %v405
        %v458 = vunpack.c.l.b16 %v406
        %v459 = vunpack.c.l.b16 %v407
        %v460 = vunpack.c.l.b16 %v408
        %v461 = vunpack.c.l.b16 %v409
        %v462 = vunpack.c.l.b16 %v410
        %v463 = vunpack.c.l.b16 %v411
        %v464 = vunpack.c.l.b16 %v412
        %v465 = vunpack.c.l.b16 %v413
        %v466 = vunpack.c.l.b16 %v414
        %v467 = vunpack.c.l.b16 %v415
        %v468 = vunpack.c.l.b16 %v416
        %v469 = vpack.c.b16 %v446, %v445
        %v470 = vpack.c.b16 %v448, %v447
        %v471 = vpack.c.b16 %v450, %v449
        %v472 = vpack.c.b16 %v452, %v451
        %v473 = vpack.c.b16 %v454, %v453
        %v474 = vpack.c.b16 %v456, %v455
        %v475 = vpack.c.b16 %v458, %v457
        %v476 = vpack.c.b16 %v460, %v459
        %v477 = vpack.c.b16 %v462, %v461
        %v478 = vpack.c.b16 %v464, %v463
        %v479 = vpack.c.b16 %v466, %v465
        %v480 = vpack.c.b16 %v468, %v467
        %vm493 = vcmask 523264
        %v495 = vsel %vm493, %v362, 0
        %v498 = vsel %vm493, %v364, 0
        %v501 = vsel %vm493, %v366, 0
        %v504 = vsel %vm493, %v368, 0
        %v507 = vsel %vm493, %v370, 0
        %v510 = vsel %vm493, %v372, 0
        %v513 = vsel %vm493, %v374, 0
        %v516 = vsel %vm493, %v376, 0
        %v519 = vsel %vm493, %v378, 0
        %v522 = vsel %vm493, %v380, 0
        %v525 = vsel %vm493, %v382, 0
        %v528 = vsel %vm493, %v384, 0
        %v531 = vsel %vm493, %v386, 0
        %v534 = vsel %vm493, %v388, 0
        %v537 = vsel %vm493, %v390, 0
        %v540 = vsel %vm493, %v392, 0
        %542 = vmatpush.bf16.msra.mxu0 %v476
        %543 = vmatpush.bf16.msra.mxu0 %v475
        %544 = vmatpush.bf16.msra.mxu0 %v474
        %545 = vmatpush.bf16.msra.mxu0 %v473
        %546 = vmatpush.bf16.msra.mxu0 %v472
        %547 = vmatpush.bf16.msra.mxu0 %v471
        %548 = vmatpush.bf16.msra.mxu0 %v470
        %549 = vmatpush.bf16.msra.mxu0 %v469
        %550 = vmatmul.bf16.gmra.mxu0 %v361
        %v551 = vpop.f32.mrf.mxu0
        %v552 = vadd.f32 %v419, %v551
        %v553 = vpop.f32.mrf.mxu0
        %v554 = vadd.f32 %v419, %v553
        %555 = vmatmul.bf16.gmra.mxu0 %v363
        %v556 = vpop.f32.mrf.mxu0
        %v557 = vadd.f32 %v419, %v556
        %v558 = vpop.f32.mrf.mxu0
        %v559 = vadd.f32 %v419, %v558
        %560 = vmatmul.bf16.gmra.mxu0 %v365
        %v561 = vpop.f32.mrf.mxu0
        %v562 = vadd.f32 %v419, %v561
        %v563 = vpop.f32.mrf.mxu0
        %v564 = vadd.f32 %v419, %v563
        %565 = vmatmul.bf16.gmra.mxu0 %v367
        %v566 = vpop.f32.mrf.mxu0
        %v567 = vadd.f32 %v419, %v566
        %v568 = vpop.f32.mrf.mxu0
        %v569 = vadd.f32 %v419, %v568
        %570 = vmatmul.bf16.gmra.mxu0 %v369
        %v571 = vpop.f32.mrf.mxu0
        %v572 = vadd.f32 %v419, %v571
        %v573 = vpop.f32.mrf.mxu0
        %v574 = vadd.f32 %v419, %v573
        %575 = vmatmul.bf16.gmra.mxu0 %v371
        %v576 = vpop.f32.mrf.mxu0
        %v577 = vadd.f32 %v419, %v576
        %v578 = vpop.f32.mrf.mxu0
        %v579 = vadd.f32 %v419, %v578
        %580 = vmatmul.bf16.gmra.mxu0 %v373
        %v581 = vpop.f32.mrf.mxu0
        %v582 = vadd.f32 %v419, %v581
        %v583 = vpop.f32.mrf.mxu0
        %v584 = vadd.f32 %v419, %v583
        %585 = vmatmul.bf16.gmra.mxu0 %v375
        %v586 = vpop.f32.mrf.mxu0
        %v587 = vadd.f32 %v419, %v586
        %v588 = vpop.f32.mrf.mxu0
        %v589 = vadd.f32 %v419, %v588
        %590 = vmatmul.bf16.gmra.mxu0 %v377
        %v591 = vpop.f32.mrf.mxu0
        %v592 = vadd.f32 %v419, %v591
        %v593 = vpop.f32.mrf.mxu0
        %v594 = vadd.f32 %v419, %v593
        %595 = vmatmul.bf16.gmra.mxu0 %v379
        %v596 = vpop.f32.mrf.mxu0
        %v597 = vadd.f32 %v419, %v596
        %v598 = vpop.f32.mrf.mxu0
        %v599 = vadd.f32 %v419, %v598
        %600 = vmatmul.bf16.gmra.mxu0 %v381
        %v601 = vpop.f32.mrf.mxu0
        %v602 = vadd.f32 %v419, %v601
        %v603 = vpop.f32.mrf.mxu0
        %v604 = vadd.f32 %v419, %v603
        %605 = vmatmul.bf16.gmra.mxu0 %v383
        %v606 = vpop.f32.mrf.mxu0
        %v607 = vadd.f32 %v419, %v606
        %v608 = vpop.f32.mrf.mxu0
        %v609 = vadd.f32 %v419, %v608
        %610 = vmatmul.bf16.gmra.mxu0 %v385
        %v611 = vpop.f32.mrf.mxu0
        %v612 = vadd.f32 %v419, %v611
        %v613 = vpop.f32.mrf.mxu0
        %v614 = vadd.f32 %v419, %v613
        %615 = vmatmul.bf16.gmra.mxu0 %v387
        %v616 = vpop.f32.mrf.mxu0
        %v617 = vadd.f32 %v419, %v616
        %v618 = vpop.f32.mrf.mxu0
        %v619 = vadd.f32 %v419, %v618
        %620 = vmatmul.bf16.gmra.mxu0 %v389
        %v621 = vpop.f32.mrf.mxu0
        %v622 = vadd.f32 %v419, %v621
        %v623 = vpop.f32.mrf.mxu0
        %v624 = vadd.f32 %v419, %v623
        %625 = vmatmul.bf16.gmra.mxu0 %v391
        %v626 = vpop.f32.mrf.mxu0
        %v627 = vadd.f32 %v419, %v626
        %v628 = vpop.f32.mrf.mxu0
        %v629 = vadd.f32 %v419, %v628
        %630 = vdwg.mxu0
        %631 = vmatpush.bf16.msra.mxu0 0
        %632 = vmatpush.bf16.msra.mxu0 0
        %633 = vmatpush.bf16.msra.mxu0 0
        %634 = vmatpush.bf16.msra.mxu0 0
        %635 = vmatpush.bf16.msra.mxu0 %v480
        %636 = vmatpush.bf16.msra.mxu0 %v479
        %637 = vmatpush.bf16.msra.mxu0 %v478
        %638 = vmatpush.bf16.msra.mxu0 %v477
        %639 = vmatmul.bf16.gmra.mxu0 %v495
        %v640 = vpop.f32.mrf.mxu0
        %v641 = vadd.f32 %v552, %v640
        %v642 = vpop.f32.mrf.mxu0
        %v643 = vadd.f32 %v554, %v642
        %644 = vmatmul.bf16.gmra.mxu0 %v498
        %v645 = vpop.f32.mrf.mxu0
        %v646 = vadd.f32 %v557, %v645
        %v647 = vpop.f32.mrf.mxu0
        %v648 = vadd.f32 %v559, %v647
        %649 = vmatmul.bf16.gmra.mxu0 %v501
        %v650 = vpop.f32.mrf.mxu0
        %v651 = vadd.f32 %v562, %v650
        %v652 = vpop.f32.mrf.mxu0
        %v653 = vadd.f32 %v564, %v652
        %654 = vmatmul.bf16.gmra.mxu0 %v504
        %v655 = vpop.f32.mrf.mxu0
        %v656 = vadd.f32 %v567, %v655
        %v657 = vpop.f32.mrf.mxu0
        %v658 = vadd.f32 %v569, %v657
        %659 = vmatmul.bf16.gmra.mxu0 %v507
        %v660 = vpop.f32.mrf.mxu0
        %v661 = vadd.f32 %v572, %v660
        %v662 = vpop.f32.mrf.mxu0
        %v663 = vadd.f32 %v574, %v662
        %664 = vmatmul.bf16.gmra.mxu0 %v510
        %v665 = vpop.f32.mrf.mxu0
        %v666 = vadd.f32 %v577, %v665
        %v667 = vpop.f32.mrf.mxu0
        %v668 = vadd.f32 %v579, %v667
        %669 = vmatmul.bf16.gmra.mxu0 %v513
        %v670 = vpop.f32.mrf.mxu0
        %v671 = vadd.f32 %v582, %v670
        %v672 = vpop.f32.mrf.mxu0
        %v673 = vadd.f32 %v584, %v672
        %674 = vmatmul.bf16.gmra.mxu0 %v516
        %v675 = vpop.f32.mrf.mxu0
        %v676 = vadd.f32 %v587, %v675
        %v677 = vpop.f32.mrf.mxu0
        %v678 = vadd.f32 %v589, %v677
        %679 = vmatmul.bf16.gmra.mxu0 %v519
        %v680 = vpop.f32.mrf.mxu0
        %v681 = vadd.f32 %v592, %v680
        %v682 = vpop.f32.mrf.mxu0
        %v683 = vadd.f32 %v594, %v682
        %684 = vmatmul.bf16.gmra.mxu0 %v522
        %v685 = vpop.f32.mrf.mxu0
        %v686 = vadd.f32 %v597, %v685
        %v687 = vpop.f32.mrf.mxu0
        %v688 = vadd.f32 %v599, %v687
        %689 = vmatmul.bf16.gmra.mxu0 %v525
        %v690 = vpop.f32.mrf.mxu0
        %v691 = vadd.f32 %v602, %v690
        %v692 = vpop.f32.mrf.mxu0
        %v693 = vadd.f32 %v604, %v692
        %694 = vmatmul.bf16.gmra.mxu0 %v528
        %v695 = vpop.f32.mrf.mxu0
        %v696 = vadd.f32 %v607, %v695
        %v697 = vpop.f32.mrf.mxu0
        %v698 = vadd.f32 %v609, %v697
        %699 = vmatmul.bf16.gmra.mxu0 %v531
        %v700 = vpop.f32.mrf.mxu0
        %v701 = vadd.f32 %v612, %v700
        %v702 = vpop.f32.mrf.mxu0
        %v703 = vadd.f32 %v614, %v702
        %704 = vmatmul.bf16.gmra.mxu0 %v534
        %v705 = vpop.f32.mrf.mxu0
        %v706 = vadd.f32 %v617, %v705
        %v707 = vpop.f32.mrf.mxu0
        %v708 = vadd.f32 %v619, %v707
        %709 = vmatmul.bf16.gmra.mxu0 %v537
        %v710 = vpop.f32.mrf.mxu0
        %v711 = vadd.f32 %v622, %v710
        %v712 = vpop.f32.mrf.mxu0
        %v713 = vadd.f32 %v624, %v712
        %714 = vmatmul.bf16.gmra.mxu0 %v540
        %v715 = vpop.f32.mrf.mxu0
        %v716 = vadd.f32 %v627, %v715
        %v717 = vpop.f32.mrf.mxu0
        %v718 = vadd.f32 %v629, %v717
        %719 = vdwg.mxu0
        %v720 = vmax.f32 %v641, 0.0
        %v721 = vmax.f32 %v643, 0.0
        %v722 = vmax.f32 %v646, 0.0
        %v723 = vmax.f32 %v648, 0.0
        %v724 = vmax.f32 %v651, 0.0
        %v725 = vmax.f32 %v653, 0.0
        %v726 = vmax.f32 %v656, 0.0
        %v727 = vmax.f32 %v658, 0.0
        %v728 = vmax.f32 %v661, 0.0
        %v729 = vmax.f32 %v663, 0.0
        %v730 = vmax.f32 %v666, 0.0
        %v731 = vmax.f32 %v668, 0.0
        %v732 = vmax.f32 %v671, 0.0
        %v733 = vmax.f32 %v673, 0.0
        %v734 = vmax.f32 %v676, 0.0
        %v735 = vmax.f32 %v678, 0.0
        %v736 = vmax.f32 %v681, 0.0
        %v737 = vmax.f32 %v683, 0.0
        %v738 = vmax.f32 %v686, 0.0
        %v739 = vmax.f32 %v688, 0.0
        %v740 = vmax.f32 %v691, 0.0
        %v741 = vmax.f32 %v693, 0.0
        %v742 = vmax.f32 %v696, 0.0
        %v743 = vmax.f32 %v698, 0.0
        %v744 = vmax.f32 %v701, 0.0
        %v745 = vmax.f32 %v703, 0.0
        %v746 = vmax.f32 %v706, 0.0
        %v747 = vmax.f32 %v708, 0.0
        %v748 = vmax.f32 %v711, 0.0
        %v749 = vmax.f32 %v713, 0.0
        %v750 = vmax.f32 %v716, 0.0
        %v751 = vmax.f32 %v718, 0.0
        %v752 = vpack.c.bf16 %v720, %v720
        %v753 = vpack.c.bf16 %v721, %v721
        %v754 = vpack.c.bf16 %v722, %v722
        %v755 = vpack.c.bf16 %v723, %v723
        %v756 = vpack.c.bf16 %v724, %v724
        %v757 = vpack.c.bf16 %v725, %v725
        %v758 = vpack.c.bf16 %v726, %v726
        %v759 = vpack.c.bf16 %v727, %v727
        %v760 = vpack.c.bf16 %v728, %v728
        %v761 = vpack.c.bf16 %v729, %v729
        %v762 = vpack.c.bf16 %v730, %v730
        %v763 = vpack.c.bf16 %v731, %v731
        %v764 = vpack.c.bf16 %v732, %v732
        %v765 = vpack.c.bf16 %v733, %v733
        %v766 = vpack.c.bf16 %v734, %v734
        %v767 = vpack.c.bf16 %v735, %v735
        %v768 = vpack.c.bf16 %v736, %v736
        %v769 = vpack.c.bf16 %v737, %v737
        %v770 = vpack.c.bf16 %v738, %v738
        %v771 = vpack.c.bf16 %v739, %v739
        %v772 = vpack.c.bf16 %v740, %v740
        %v773 = vpack.c.bf16 %v741, %v741
        %v774 = vpack.c.bf16 %v742, %v742
        %v775 = vpack.c.bf16 %v743, %v743
        %v776 = vpack.c.bf16 %v744, %v744
        %v777 = vpack.c.bf16 %v745, %v745
        %v778 = vpack.c.bf16 %v746, %v746
        %v779 = vpack.c.bf16 %v747, %v747
        %v780 = vpack.c.bf16 %v748, %v748
        %v781 = vpack.c.bf16 %v749, %v749
        %v782 = vpack.c.bf16 %v750, %v750
        %v783 = vpack.c.bf16 %v751, %v751
        %vm784 = vcmask 257024
        %785 = vst.msk [vmem:[%s177] sm:$0xf] %vm784, %v752
        %786 = vst.msk [vmem:[%s177 + $0x4] sm:$0xf] %vm784, %v753
        %787 = vst.msk [vmem:[%s177 + $0x8] sm:$0xf] %vm784, %v754
        %788 = vst.msk [vmem:[%s177 + $0xc] sm:$0xf] %vm784, %v755
        %789 = vst.msk [vmem:[%s177 + $0x10] sm:$0xf] %vm784, %v756
        %790 = vst.msk [vmem:[%s177 + $0x14] sm:$0xf] %vm784, %v757
        %791 = vst.msk [vmem:[%s177 + $0x18] sm:$0xf] %vm784, %v758
        %792 = vst.msk [vmem:[%s177 + $0x1c] sm:$0xf] %vm784, %v759
        %793 = vst.msk [vmem:[%s177 + $0x20] sm:$0xf] %vm784, %v760
        %794 = vst.msk [vmem:[%s177 + $0x24] sm:$0xf] %vm784, %v761
        %795 = vst.msk [vmem:[%s177 + $0x28] sm:$0xf] %vm784, %v762
        %796 = vst.msk [vmem:[%s177 + $0x2c] sm:$0xf] %vm784, %v763
        %797 = vst.msk [vmem:[%s177 + $0x30] sm:$0xf] %vm784, %v764
        %798 = vst.msk [vmem:[%s177 + $0x34] sm:$0xf] %vm784, %v765
        %799 = vst.msk [vmem:[%s177 + $0x38] sm:$0xf] %vm784, %v766
        %800 = vst.msk [vmem:[%s177 + $0x3c] sm:$0xf] %vm784, %v767
        %801 = vst.msk [vmem:[%s177 + $0x40] sm:$0xf] %vm784, %v768
        %802 = vst.msk [vmem:[%s177 + $0x44] sm:$0xf] %vm784, %v769
        %803 = vst.msk [vmem:[%s177 + $0x48] sm:$0xf] %vm784, %v770
        %804 = vst.msk [vmem:[%s177 + $0x4c] sm:$0xf] %vm784, %v771
        %805 = vst.msk [vmem:[%s177 + $0x50] sm:$0xf] %vm784, %v772
        %806 = vst.msk [vmem:[%s177 + $0x54] sm:$0xf] %vm784, %v773
        %807 = vst.msk [vmem:[%s177 + $0x58] sm:$0xf] %vm784, %v774
        %808 = vst.msk [vmem:[%s177 + $0x5c] sm:$0xf] %vm784, %v775
        %809 = vst.msk [vmem:[%s177 + $0x60] sm:$0xf] %vm784, %v776
        %810 = vst.msk [vmem:[%s177 + $0x64] sm:$0xf] %vm784, %v777
        %811 = vst.msk [vmem:[%s177 + $0x68] sm:$0xf] %vm784, %v778
        %812 = vst.msk [vmem:[%s177 + $0x6c] sm:$0xf] %vm784, %v779
        %813 = vst.msk [vmem:[%s177 + $0x70] sm:$0xf] %vm784, %v780
        %814 = vst.msk [vmem:[%s177 + $0x74] sm:$0xf] %vm784, %v781
        %815 = vst.msk [vmem:[%s177 + $0x78] sm:$0xf] %vm784, %v782
        %816 = vst.msk [vmem:[%s177 + $0x7c] sm:$0xf] %vm784, %v783
        %s817 = sand.u32 %s90, 1
        %s818 = sand.u32 %s90, 1
        %s819 = smul.addr %s818, 128
        %s820 = scalar_lea.vmem [#allocation2], %s819
        // Predicated region
        $region33: #{pointnav_baseline_net_forward.4} parent=31 // pred_check
          %p821 = pneg %p100
        $region34: #{pointnav_baseline_net_forward.4} parent=31 // pred_check_branch
          %823 = sbr.rel (%p821) target = $region36
        $region35: #{pointnav_baseline_net_forward.4} parent=31 // pred_region
          %s824 = smul.u32 32, %s14
          %s825 = ssub.s32 57, %s824
          %p826 = scmp.lt.s32.totalorder %s825, 32
          %s827 = scalar_select %p826, %s825, 32
          %s828 = smul.u32 4, %s827
          %p829 = scmp.ne.s32.totalorder 0, %s828
          %s830 = smul.addr %s824, 4
          %s831 = scalar_lea.vmem %s3, %s830
          // Predicated region
          $region37: #{pointnav_baseline_net_forward.4} parent=35 // pred_check
            %p832 = pneg %p829
          $region38: #{pointnav_baseline_net_forward.4} parent=35 // pred_check_branch
            %834 = sbr.rel (%p832) target = $region40
          $region39: #{pointnav_baseline_net_forward.4} parent=35 // pred_region
            // Predicated region
            $region41: #{pointnav_baseline_net_forward.4} parent=39 // pred_check
              _
            $region42: #{pointnav_baseline_net_forward.4} parent=39 // pred_check_branch
              %836 = sbr.rel target = $region44
            $region43: #{pointnav_baseline_net_forward.4} parent=39 // pred_region
              // Predicated region
              $region63: #{pointnav_baseline_net_forward.4} parent=43 // pred_check
                _
              $region64: #{pointnav_baseline_net_forward.4} parent=43 // pred_check_branch
                %948 = sbr.rel (0) target = $region66
              $region65: #{pointnav_baseline_net_forward.4} parent=43 // pred_region
                %s950 = ssub.s32 16, 1
                %s951 = sshrl.u32 %s827, 5
                // While loop
                $region67: #{pointnav_baseline_net_forward.4} parent=65 // loop_pre_header
                  _
                $region68: #{pointnav_baseline_net_forward.4} parent=65 // loop_header
                  %s953 = sphi 0, %s955
                  %p954 = scmp.ge.s32.totalorder %s953, %s951
                  %s958 = sphi 0, %s1027
                  %s959 = sphi %s820, %s1030
                  %s960 = sphi %s831, %s1031
                $region69: #{pointnav_baseline_net_forward.4} parent=65 // loop_header_branch
                  %957 = sbr.rel (%p954) target = $region73
                $region70: #{pointnav_baseline_net_forward.4} parent=65 // loop_body
                  %v961 = vld [vmem:[%s959] sm:%s950]
                  %962 = vst [vmem:[%s960] sm:%s950] %v961
                  %v963 = vld [vmem:[%s959 + $0x4] sm:%s950]
                  %964 = vst [vmem:[%s960 + $0x4] sm:%s950] %v963
                  %v965 = vld [vmem:[%s959 + $0x8] sm:%s950]
                  %966 = vst [vmem:[%s960 + $0x8] sm:%s950] %v965
                  %v967 = vld [vmem:[%s959 + $0xc] sm:%s950]
                  %968 = vst [vmem:[%s960 + $0xc] sm:%s950] %v967
                  %v969 = vld [vmem:[%s959 + $0x10] sm:%s950]
                  %970 = vst [vmem:[%s960 + $0x10] sm:%s950] %v969
                  %v971 = vld [vmem:[%s959 + $0x14] sm:%s950]
                  %972 = vst [vmem:[%s960 + $0x14] sm:%s950] %v971
                  %v973 = vld [vmem:[%s959 + $0x18] sm:%s950]
                  %974 = vst [vmem:[%s960 + $0x18] sm:%s950] %v973
                  %v975 = vld [vmem:[%s959 + $0x1c] sm:%s950]
                  %976 = vst [vmem:[%s960 + $0x1c] sm:%s950] %v975
                  %v977 = vld [vmem:[%s959 + $0x20] sm:%s950]
                  %978 = vst [vmem:[%s960 + $0x20] sm:%s950] %v977
                  %v979 = vld [vmem:[%s959 + $0x24] sm:%s950]
                  %980 = vst [vmem:[%s960 + $0x24] sm:%s950] %v979
                  %v981 = vld [vmem:[%s959 + $0x28] sm:%s950]
                  %982 = vst [vmem:[%s960 + $0x28] sm:%s950] %v981
                  %v983 = vld [vmem:[%s959 + $0x2c] sm:%s950]
                  %984 = vst [vmem:[%s960 + $0x2c] sm:%s950] %v983
                  %v985 = vld [vmem:[%s959 + $0x30] sm:%s950]
                  %986 = vst [vmem:[%s960 + $0x30] sm:%s950] %v985
                  %v987 = vld [vmem:[%s959 + $0x34] sm:%s950]
                  %988 = vst [vmem:[%s960 + $0x34] sm:%s950] %v987
                  %v989 = vld [vmem:[%s959 + $0x38] sm:%s950]
                  %990 = vst [vmem:[%s960 + $0x38] sm:%s950] %v989
                  %v991 = vld [vmem:[%s959 + $0x3c] sm:%s950]
                  %992 = vst [vmem:[%s960 + $0x3c] sm:%s950] %v991
                  %v993 = vld [vmem:[%s959 + $0x40] sm:%s950]
                  %994 = vst [vmem:[%s960 + $0x40] sm:%s950] %v993
                  %v995 = vld [vmem:[%s959 + $0x44] sm:%s950]
                  %996 = vst [vmem:[%s960 + $0x44] sm:%s950] %v995
                  %v997 = vld [vmem:[%s959 + $0x48] sm:%s950]
                  %998 = vst [vmem:[%s960 + $0x48] sm:%s950] %v997
                  %v999 = vld [vmem:[%s959 + $0x4c] sm:%s950]
                  %1000 = vst [vmem:[%s960 + $0x4c] sm:%s950] %v999
                  %v1001 = vld [vmem:[%s959 + $0x50] sm:%s950]
                  %1002 = vst [vmem:[%s960 + $0x50] sm:%s950] %v1001
                  %v1003 = vld [vmem:[%s959 + $0x54] sm:%s950]
                  %1004 = vst [vmem:[%s960 + $0x54] sm:%s950] %v1003
                  %v1005 = vld [vmem:[%s959 + $0x58] sm:%s950]
                  %1006 = vst [vmem:[%s960 + $0x58] sm:%s950] %v1005
                  %v1007 = vld [vmem:[%s959 + $0x5c] sm:%s950]
                  %1008 = vst [vmem:[%s960 + $0x5c] sm:%s950] %v1007
                  %v1009 = vld [vmem:[%s959 + $0x60] sm:%s950]
                  %1010 = vst [vmem:[%s960 + $0x60] sm:%s950] %v1009
                  %v1011 = vld [vmem:[%s959 + $0x64] sm:%s950]
                  %1012 = vst [vmem:[%s960 + $0x64] sm:%s950] %v1011
                  %v1013 = vld [vmem:[%s959 + $0x68] sm:%s950]
                  %1014 = vst [vmem:[%s960 + $0x68] sm:%s950] %v1013
                  %v1015 = vld [vmem:[%s959 + $0x6c] sm:%s950]
                  %1016 = vst [vmem:[%s960 + $0x6c] sm:%s950] %v1015
                  %v1017 = vld [vmem:[%s959 + $0x70] sm:%s950]
                  %1018 = vst [vmem:[%s960 + $0x70] sm:%s950] %v1017
                  %v1019 = vld [vmem:[%s959 + $0x74] sm:%s950]
                  %1020 = vst [vmem:[%s960 + $0x74] sm:%s950] %v1019
                  %v1021 = vld [vmem:[%s959 + $0x78] sm:%s950]
                  %1022 = vst [vmem:[%s960 + $0x78] sm:%s950] %v1021
                  %v1023 = vld [vmem:[%s959 + $0x7c] sm:%s950]
                  %1024 = vst [vmem:[%s960 + $0x7c] sm:%s950] %v1023
                  %s1025 = sadd.s32 1, %s958
                  %p1026 = scmp.ge.s32.totalorder %s1025, %s951
                  %s1027 = scalar_select %p1026, 0, %s1025
                  %s1028 = smul.u32 %s1027, 128
                  %s1029 = smul.u32 %s1027, 128
                  %s1030 = scalar_lea.vmem %s820, %s1028 [#allocation2]
                  %s1031 = scalar_lea.vmem %s831, %s1029
                $region71: #{pointnav_baseline_net_forward.4} parent=65 // loop_footer
                  %s955 = sadd.s32 %s953, 1
                $region72: #{pointnav_baseline_net_forward.4} parent=65 // loop_footer_branch
                  %952 = sbr.rel target = $region68
                $region73: #{pointnav_baseline_net_forward.4} parent=65 // loop_exit
                  _
                %s1032 = sshrl.u32 %s827, 5
                %s1033 = sand.u32 %s827, 31
                %s1034 = smul.u32 %s1032, 32
                %s1035 = smul.u32 4, %s1034
                %s1036 = scalar_lea.vmem %s820, %s1035 [#allocation2]
                %s1037 = smul.u32 4, %s1034
                %s1038 = scalar_lea.vmem %s831, %s1037
                // While loop
                $region74: #{pointnav_baseline_net_forward.4} parent=65 // loop_pre_header
                  _
                $region75: #{pointnav_baseline_net_forward.4} parent=65 // loop_header
                  %s1040 = sphi 0, %s1042
                  %p1041 = scmp.ge.s32.totalorder %s1040, %s1033
                  %s1045 = sphi 0, %s1052
                  %s1046 = sphi %s1036, %s1055
                  %s1047 = sphi %s1038, %s1056
                $region76: #{pointnav_baseline_net_forward.4} parent=65 // loop_header_branch
                  %1044 = sbr.rel (%p1041) target = $region80
                $region77: #{pointnav_baseline_net_forward.4} parent=65 // loop_body
                  %v1048 = vld [vmem:[%s1046] sm:%s950]
                  %1049 = vst [vmem:[%s1047] sm:%s950] %v1048
                  %s1050 = sadd.s32 1, %s1045
                  %p1051 = scmp.ge.s32.totalorder %s1050, %s1033
                  %s1052 = scalar_select %p1051, 0, %s1050
                  %s1053 = smul.u32 %s1052, 4
                  %s1054 = smul.u32 %s1052, 4
                  %s1055 = scalar_lea.vmem %s1036, %s1053 [#allocation2]
                  %s1056 = scalar_lea.vmem %s1038, %s1054
                $region78: #{pointnav_baseline_net_forward.4} parent=65 // loop_footer
                  %s1042 = sadd.s32 %s1040, 1
                $region79: #{pointnav_baseline_net_forward.4} parent=65 // loop_footer_branch
                  %1039 = sbr.rel target = $region75
                $region80: #{pointnav_baseline_net_forward.4} parent=65 // loop_exit
                  _
              $region66: #{pointnav_baseline_net_forward.4} parent=43 // pred_fallthru
                _
            $region44: #{pointnav_baseline_net_forward.4} parent=39 // pred_fallthru
              _
            // Predicated region
            $region45: #{pointnav_baseline_net_forward.4} parent=39 // pred_check
              _
            $region46: #{pointnav_baseline_net_forward.4} parent=39 // pred_check_branch
              %838 = sbr.rel (0) target = $region48
            $region47: #{pointnav_baseline_net_forward.4} parent=39 // pred_region
              %s840 = ssub.s32 16, 1
              %s841 = sshrl.u32 %s827, 5
              // While loop
              $region49: #{pointnav_baseline_net_forward.4} parent=47 // loop_pre_header
                _
              $region50: #{pointnav_baseline_net_forward.4} parent=47 // loop_header
                %s843 = sphi 0, %s845
                %p844 = scmp.ge.s32.totalorder %s843, %s841
                %s848 = sphi 0, %s917
                %s849 = sphi %s820, %s920
                %s850 = sphi %s831, %s921
              $region51: #{pointnav_baseline_net_forward.4} parent=47 // loop_header_branch
                %847 = sbr.rel (%p844) target = $region55
              $region52: #{pointnav_baseline_net_forward.4} parent=47 // loop_body
                %v851 = vld [vmem:[%s849] sm:%s840]
                %852 = vst [vmem:[%s850] sm:%s840] %v851
                %v853 = vld [vmem:[%s849 + $0x4] sm:%s840]
                %854 = vst [vmem:[%s850 + $0x4] sm:%s840] %v853
                %v855 = vld [vmem:[%s849 + $0x8] sm:%s840]
                %856 = vst [vmem:[%s850 + $0x8] sm:%s840] %v855
                %v857 = vld [vmem:[%s849 + $0xc] sm:%s840]
                %858 = vst [vmem:[%s850 + $0xc] sm:%s840] %v857
                %v859 = vld [vmem:[%s849 + $0x10] sm:%s840]
                %860 = vst [vmem:[%s850 + $0x10] sm:%s840] %v859
                %v861 = vld [vmem:[%s849 + $0x14] sm:%s840]
                %862 = vst [vmem:[%s850 + $0x14] sm:%s840] %v861
                %v863 = vld [vmem:[%s849 + $0x18] sm:%s840]
                %864 = vst [vmem:[%s850 + $0x18] sm:%s840] %v863
                %v865 = vld [vmem:[%s849 + $0x1c] sm:%s840]
                %866 = vst [vmem:[%s850 + $0x1c] sm:%s840] %v865
                %v867 = vld [vmem:[%s849 + $0x20] sm:%s840]
                %868 = vst [vmem:[%s850 + $0x20] sm:%s840] %v867
                %v869 = vld [vmem:[%s849 + $0x24] sm:%s840]
                %870 = vst [vmem:[%s850 + $0x24] sm:%s840] %v869
                %v871 = vld [vmem:[%s849 + $0x28] sm:%s840]
                %872 = vst [vmem:[%s850 + $0x28] sm:%s840] %v871
                %v873 = vld [vmem:[%s849 + $0x2c] sm:%s840]
                %874 = vst [vmem:[%s850 + $0x2c] sm:%s840] %v873
                %v875 = vld [vmem:[%s849 + $0x30] sm:%s840]
                %876 = vst [vmem:[%s850 + $0x30] sm:%s840] %v875
                %v877 = vld [vmem:[%s849 + $0x34] sm:%s840]
                %878 = vst [vmem:[%s850 + $0x34] sm:%s840] %v877
                %v879 = vld [vmem:[%s849 + $0x38] sm:%s840]
                %880 = vst [vmem:[%s850 + $0x38] sm:%s840] %v879
                %v881 = vld [vmem:[%s849 + $0x3c] sm:%s840]
                %882 = vst [vmem:[%s850 + $0x3c] sm:%s840] %v881
                %v883 = vld [vmem:[%s849 + $0x40] sm:%s840]
                %884 = vst [vmem:[%s850 + $0x40] sm:%s840] %v883
                %v885 = vld [vmem:[%s849 + $0x44] sm:%s840]
                %886 = vst [vmem:[%s850 + $0x44] sm:%s840] %v885
                %v887 = vld [vmem:[%s849 + $0x48] sm:%s840]
                %888 = vst [vmem:[%s850 + $0x48] sm:%s840] %v887
                %v889 = vld [vmem:[%s849 + $0x4c] sm:%s840]
                %890 = vst [vmem:[%s850 + $0x4c] sm:%s840] %v889
                %v891 = vld [vmem:[%s849 + $0x50] sm:%s840]
                %892 = vst [vmem:[%s850 + $0x50] sm:%s840] %v891
                %v893 = vld [vmem:[%s849 + $0x54] sm:%s840]
                %894 = vst [vmem:[%s850 + $0x54] sm:%s840] %v893
                %v895 = vld [vmem:[%s849 + $0x58] sm:%s840]
                %896 = vst [vmem:[%s850 + $0x58] sm:%s840] %v895
                %v897 = vld [vmem:[%s849 + $0x5c] sm:%s840]
                %898 = vst [vmem:[%s850 + $0x5c] sm:%s840] %v897
                %v899 = vld [vmem:[%s849 + $0x60] sm:%s840]
                %900 = vst [vmem:[%s850 + $0x60] sm:%s840] %v899
                %v901 = vld [vmem:[%s849 + $0x64] sm:%s840]
                %902 = vst [vmem:[%s850 + $0x64] sm:%s840] %v901
                %v903 = vld [vmem:[%s849 + $0x68] sm:%s840]
                %904 = vst [vmem:[%s850 + $0x68] sm:%s840] %v903
                %v905 = vld [vmem:[%s849 + $0x6c] sm:%s840]
                %906 = vst [vmem:[%s850 + $0x6c] sm:%s840] %v905
                %v907 = vld [vmem:[%s849 + $0x70] sm:%s840]
                %908 = vst [vmem:[%s850 + $0x70] sm:%s840] %v907
                %v909 = vld [vmem:[%s849 + $0x74] sm:%s840]
                %910 = vst [vmem:[%s850 + $0x74] sm:%s840] %v909
                %v911 = vld [vmem:[%s849 + $0x78] sm:%s840]
                %912 = vst [vmem:[%s850 + $0x78] sm:%s840] %v911
                %v913 = vld [vmem:[%s849 + $0x7c] sm:%s840]
                %914 = vst [vmem:[%s850 + $0x7c] sm:%s840] %v913
                %s915 = sadd.s32 1, %s848
                %p916 = scmp.ge.s32.totalorder %s915, %s841
                %s917 = scalar_select %p916, 0, %s915
                %s918 = smul.u32 %s917, 128
                %s919 = smul.u32 %s917, 128
                %s920 = scalar_lea.vmem %s820, %s918 [#allocation2]
                %s921 = scalar_lea.vmem %s831, %s919
              $region53: #{pointnav_baseline_net_forward.4} parent=47 // loop_footer
                %s845 = sadd.s32 %s843, 1
              $region54: #{pointnav_baseline_net_forward.4} parent=47 // loop_footer_branch
                %842 = sbr.rel target = $region50
              $region55: #{pointnav_baseline_net_forward.4} parent=47 // loop_exit
                _
              %s922 = sshrl.u32 %s827, 5
              %s923 = sand.u32 %s827, 31
              %s924 = smul.u32 %s922, 32
              %s925 = smul.u32 4, %s924
              %s926 = scalar_lea.vmem %s820, %s925 [#allocation2]
              %s927 = smul.u32 4, %s924
              %s928 = scalar_lea.vmem %s831, %s927
              // While loop
              $region56: #{pointnav_baseline_net_forward.4} parent=47 // loop_pre_header
                _
              $region57: #{pointnav_baseline_net_forward.4} parent=47 // loop_header
                %s930 = sphi 0, %s932
                %p931 = scmp.ge.s32.totalorder %s930, %s923
                %s935 = sphi 0, %s942
                %s936 = sphi %s926, %s945
                %s937 = sphi %s928, %s946
              $region58: #{pointnav_baseline_net_forward.4} parent=47 // loop_header_branch
                %934 = sbr.rel (%p931) target = $region62
              $region59: #{pointnav_baseline_net_forward.4} parent=47 // loop_body
                %v938 = vld [vmem:[%s936] sm:%s840]
                %939 = vst [vmem:[%s937] sm:%s840] %v938
                %s940 = sadd.s32 1, %s935
                %p941 = scmp.ge.s32.totalorder %s940, %s923
                %s942 = scalar_select %p941, 0, %s940
                %s943 = smul.u32 %s942, 4
                %s944 = smul.u32 %s942, 4
                %s945 = scalar_lea.vmem %s926, %s943 [#allocation2]
                %s946 = scalar_lea.vmem %s928, %s944
              $region60: #{pointnav_baseline_net_forward.4} parent=47 // loop_footer
                %s932 = sadd.s32 %s930, 1
              $region61: #{pointnav_baseline_net_forward.4} parent=47 // loop_footer_branch
                %929 = sbr.rel target = $region57
              $region62: #{pointnav_baseline_net_forward.4} parent=47 // loop_exit
                _
            $region48: #{pointnav_baseline_net_forward.4} parent=39 // pred_fallthru
              _
          $region40: #{pointnav_baseline_net_forward.4} parent=35 // pred_fallthru
            _
          %1057 = vnop
        $region36: #{pointnav_baseline_net_forward.4} parent=31 // pred_fallthru
          _
      $region32: #{pointnav_baseline_net_forward.4} parent=5 // pred_fallthru
        _
      %p1058 = scmp.le.s32.totalorder 2, %s9
      // Predicated region
      $region81: #{pointnav_baseline_net_forward.4} parent=5 // pred_check
        %p1059 = pneg %p1058
      $region82: #{pointnav_baseline_net_forward.4} parent=5 // pred_check_branch
        %1061 = sbr.rel (%p1059) target = $region84
      $region83: #{pointnav_baseline_net_forward.4} parent=5 // pred_region
        %s1062 = ssub.s32 %s9, 2
        // Predicated region
        $region85: #{pointnav_baseline_net_forward.4} parent=83 // pred_check
          %p1063 = pneg %p106
        $region86: #{pointnav_baseline_net_forward.4} parent=83 // pred_check_branch
          %1065 = sbr.rel (%p1063) target = $region88
        $region87: #{pointnav_baseline_net_forward.4} parent=83 // pred_region
          %s1066 = sand.u32 %s91, 1
          %s1067 = sand.u32 %s91, 1
          %s1068 = smul.addr %s1067, 128
          %s1069 = scalar_lea.vmem [#allocation2], %s1068
        $region88: #{pointnav_baseline_net_forward.4} parent=83 // pred_fallthru
          _
      $region84: #{pointnav_baseline_net_forward.4} parent=5 // pred_fallthru
        _
    $region6: #{pointnav_baseline_net_forward.4} parent=1 // loop_footer
      %s13 = sadd.s32 1, %s9
    $region7: #{pointnav_baseline_net_forward.4} parent=1 // loop_footer_branch
      %8 = sbr.rel target = $region3
    $region8: #{pointnav_baseline_net_forward.4} parent=1 // loop_exit
      _

// kernel: pointnav_baseline_net_forward.5
$region0: #{pointnav_baseline_net_forward.5}
  #allocation0 [shape = 'u32[]', space=smem, size = 0x4, offset = 0x4, fixed_abs, tag = 'smem constant byte address 0x4 - core index']
  #allocation1 [shape = 'u32[72,128]{1,0:T(1,128)}', space=vmem, size = 0x9000, scoped, tag = 'internal scratch']
  %s0 = inlined_call_operand.vmem [shape: bf16[72,512], index: 0, kind: input, shape index: {}]
  %s1 = inlined_call_operand.vmem [shape: bf16[512,64], index: 1, kind: input, shape index: {}]
  %s2 = inlined_call_operand.vmem [shape: f32[1,64], index: 2, kind: input, shape index: {}]
  %s3 = inlined_call_operand.vmem [shape: bf16[72,64], index: 3, kind: output, shape index: {}]
  %s4 = sld [smem:[#allocation0]]
  $region89: #{pointnav_baseline_net_forward.5} parent=0
    _
  %s6 = ssub.s32 1, %s4
  %s7 = scalar_select 0, %s6, %s4
  $region1: #{pointnav_baseline_net_forward.5} parent=0
    #allocation2 [shape = 'u8[24576]{0}', space=vmem, size = 0x6000, scoped, tag = 'output window, operand 0']
    loop: start=0, step=1, limit=4
    $region2: #{pointnav_baseline_net_forward.5} parent=1 // loop_pre_header
      _
    $region3: #{pointnav_baseline_net_forward.5} parent=1 // loop_header
      %s9 = sphi 0, %s13
      %p10 = scmp.ge.s32.totalorder %s9, 4
      %s19 = sphi 0, %s21
      %s22 = sphi 0, %s19
      %s23 = sphi 0, %s22
      %s39 = sphi 0, %s23
      %s43 = sphi 0, %s43
      %s45 = sphi 0, %s43
      %s46 = sphi 0, %s45
      %s60 = sphi 0, %s46
      %s64 = sphi 0, %s64
      %s66 = sphi 0, %s64
      %s67 = sphi 0, %s66
      %s81 = sphi 0, %s67
      %s87 = sphi 0, %s89
      %s90 = sphi 0, %s87
      %s91 = sphi 0, %s90
      %s107 = sphi 0, %s91
    $region4: #{pointnav_baseline_net_forward.5} parent=1 // loop_header_branch
      %12 = sbr.rel (%p10) target = $region8
    $region5: #{pointnav_baseline_net_forward.5} parent=1 // loop_body
      %s14 = ssub.s32 %s9, 1
      %s15 = ssub.s32 %s9, 2
      %s16 = sadd.s32 %s9, 1
      %s17 = ssub.s32 %s9, %s16
      %p18 = scmp.eq.s32.totalorder %s17, 0
      %s20 = sadd.s32 %s19, 1
      %s21 = scalar_select %p18, %s19, %s20
      %p24 = pneg %p18
      %p25 = scmp.eq.s32.totalorder %s9, 1
      %p26 = por %p24, %p25
      %p27 = scmp.ne.s32.totalorder %s19, %s22
      %p28 = scmp.eq.s32.totalorder %s9, 0
      %p29 = por %p27, %p28
      %p30 = scmp.ne.s32.totalorder %s19, %s22
      %p31 = scmp.eq.s32.totalorder %s14, 1
      %p32 = por %p30, %p31
      %p33 = scmp.ne.s32.totalorder %s22, %s23
      %p34 = scmp.eq.s32.totalorder %s14, 0
      %p35 = por %p33, %p34
      %p36 = scmp.ne.s32.totalorder %s22, %s23
      %p37 = scmp.eq.s32.totalorder %s15, 1
      %p38 = por %p36, %p37
      %p40 = scmp.ne.s32.totalorder %s23, %s39
      %p41 = scmp.eq.s32.totalorder %s15, 0
      %p42 = por %p40, %p41
      %s44 = sadd.s32 %s43, 1
      %p47 = scmp.eq.s32.totalorder %s9, 1
      %p48 = scmp.ne.s32.totalorder %s43, %s45
      %p49 = scmp.eq.s32.totalorder %s9, 0
      %p50 = por %p48, %p49
      %p51 = scmp.ne.s32.totalorder %s43, %s45
      %p52 = scmp.eq.s32.totalorder %s14, 1
      %p53 = por %p51, %p52
      %p54 = scmp.ne.s32.totalorder %s45, %s46
      %p55 = scmp.eq.s32.totalorder %s14, 0
      %p56 = por %p54, %p55
      %p57 = scmp.ne.s32.totalorder %s45, %s46
      %p58 = scmp.eq.s32.totalorder %s15, 1
      %p59 = por %p57, %p58
      %p61 = scmp.ne.s32.totalorder %s46, %s60
      %p62 = scmp.eq.s32.totalorder %s15, 0
      %p63 = por %p61, %p62
      %s65 = sadd.s32 %s64, 1
      %p68 = scmp.eq.s32.totalorder %s9, 1
      %p69 = scmp.ne.s32.totalorder %s64, %s66
      %p70 = scmp.eq.s32.totalorder %s9, 0
      %p71 = por %p69, %p70
      %p72 = scmp.ne.s32.totalorder %s64, %s66
      %p73 = scmp.eq.s32.totalorder %s14, 1
      %p74 = por %p72, %p73
      %p75 = scmp.ne.s32.totalorder %s66, %s67
      %p76 = scmp.eq.s32.totalorder %s14, 0
      %p77 = por %p75, %p76
      %p78 = scmp.ne.s32.totalorder %s66, %s67
      %p79 = scmp.eq.s32.totalorder %s15, 1
      %p80 = por %p78, %p79
      %p82 = scmp.ne.s32.totalorder %s67, %s81
      %p83 = scmp.eq.s32.totalorder %s15, 0
      %p84 = por %p82, %p83
      %s85 = ssub.s32 %s9, %s16
      %p86 = scmp.eq.s32.totalorder %s85, 0
      %s88 = sadd.s32 %s87, 1
      %s89 = scalar_select %p86, %s87, %s88
      %p92 = pneg %p86
      %p93 = scmp.eq.s32.totalorder %s9, 1
      %p94 = por %p92, %p93
      %p95 = scmp.ne.s32.totalorder %s87, %s90
      %p96 = scmp.eq.s32.totalorder %s9, 0
      %p97 = por %p95, %p96
      %p98 = scmp.ne.s32.totalorder %s87, %s90
      %p99 = scmp.eq.s32.totalorder %s14, 1
      %p100 = por %p98, %p99
      %p101 = scmp.ne.s32.totalorder %s90, %s91
      %p102 = scmp.eq.s32.totalorder %s14, 0
      %p103 = por %p101, %p102
      %p104 = scmp.ne.s32.totalorder %s90, %s91
      %p105 = scmp.eq.s32.totalorder %s15, 1
      %p106 = por %p104, %p105
      %p108 = scmp.ne.s32.totalorder %s91, %s107
      %p109 = scmp.eq.s32.totalorder %s15, 0
      %p110 = por %p108, %p109
      %p111 = scmp.le.s32.totalorder 1, %s9
      %p112 = scmp.lt.s32.totalorder %s9, 3
      %p113 = pnand %p111, %p112
      %p114 = pneg %p113
      // Predicated region
      $region9: #{pointnav_baseline_net_forward.5} parent=5 // pred_check
        _
      $region10: #{pointnav_baseline_net_forward.5} parent=5 // pred_check_branch
        %116 = sbr.rel (%p113) target = $region12
      $region11: #{pointnav_baseline_net_forward.5} parent=5 // pred_region
        %s117 = ssub.s32 %s9, 1
        // Predicated region
        $region13: #{pointnav_baseline_net_forward.5} parent=11 // pred_check
          %p118 = pneg %p56
        $region14: #{pointnav_baseline_net_forward.5} parent=11 // pred_check_branch
          %120 = sbr.rel (%p118) target = $region16
        $region15: #{pointnav_baseline_net_forward.5} parent=11 // pred_region
          _
        $region16: #{pointnav_baseline_net_forward.5} parent=11 // pred_fallthru
          _
        // Predicated region
        $region17: #{pointnav_baseline_net_forward.5} parent=11 // pred_check
          %p121 = pneg %p77
        $region18: #{pointnav_baseline_net_forward.5} parent=11 // pred_check_branch
          %123 = sbr.rel (%p121) target = $region20
        $region19: #{pointnav_baseline_net_forward.5} parent=11 // pred_region
          _
        $region20: #{pointnav_baseline_net_forward.5} parent=11 // pred_fallthru
          _
      $region12: #{pointnav_baseline_net_forward.5} parent=5 // pred_fallthru
        _
      %p124 = scmp.lt.s32.totalorder %s9, 2
      // Predicated region
      $region21: #{pointnav_baseline_net_forward.5} parent=5 // pred_check
        %p125 = pneg %p124
      $region22: #{pointnav_baseline_net_forward.5} parent=5 // pred_check_branch
        %127 = sbr.rel (%p125) target = $region24
      $region23: #{pointnav_baseline_net_forward.5} parent=5 // pred_region
        // Predicated region
        $region25: #{pointnav_baseline_net_forward.5} parent=23 // pred_check
          %p128 = pneg %p29
        $region26: #{pointnav_baseline_net_forward.5} parent=23 // pred_check_branch
          %130 = sbr.rel (%p128) target = $region28
        $region27: #{pointnav_baseline_net_forward.5} parent=23 // pred_region
          %s131 = smul.u32 6, %s9
          %s132 = ssub.s32 9, %s131
          %p133 = scmp.lt.s32.totalorder %s132, 6
          %s134 = scalar_select %p133, %s132, 6
          %s135 = smul.u32 4, %s134
          %s136 = smul.u32 %s135, 4
          %p137 = scmp.lt.s32.totalorder %s131, 8
          %s138 = scalar_select %p137, %s131, 8
          %s139 = smul.addr %s138, 4
          %s140 = smul.addr %s139, 4
          %s141 = scalar_lea.vmem %s0, %s140
          %s142 = smul.u32 6, %s9
          %s143 = ssub.s32 9, %s142
          %p144 = scmp.lt.s32.totalorder %s143, 6
          %s145 = scalar_select %p144, %s143, 6
          %s146 = smul.u32 4, %s145
          %s147 = smul.u32 %s146, 4
        $region28: #{pointnav_baseline_net_forward.5} parent=23 // pred_fallthru
          _
      $region24: #{pointnav_baseline_net_forward.5} parent=5 // pred_fallthru
        _
      %p148 = scmp.le.s32.totalorder 1, %s9
      %p149 = scmp.lt.s32.totalorder %s9, 3
      %p150 = pnand %p148, %p149
      %p151 = pneg %p150
      // Predicated region
      $region29: #{pointnav_baseline_net_forward.5} parent=5 // pred_check
        _
      $region30: #{pointnav_baseline_net_forward.5} parent=5 // pred_check_branch
        %153 = sbr.rel (%p150) target = $region32
      $region31: #{pointnav_baseline_net_forward.5} parent=5 // pred_region
        %s154 = ssub.s32 %s9, 1
        %s155 = smul.u32 6, %s14
        %s156 = ssub.s32 9, %s155
        %p157 = scmp.lt.s32.totalorder %s156, 6
        %s158 = scalar_select %p157, %s156, 6
        %s159 = smul.u32 4, %s158
        %s160 = smul.u32 %s159, 4
        %p161 = scmp.lt.s32.totalorder %s155, 8
        %s162 = scalar_select %p161, %s155, 8
        %s163 = smul.addr %s162, 4
        %s164 = smul.addr %s163, 4
        %s165 = scalar_lea.vmem %s0, %s164
        %p166 = pneg %p35
        %p167 = pneg %p32
        %p168 = pneg %p56
        %p169 = pneg %p53
        %p170 = pneg %p77
        %p171 = pneg %p74
        %p172 = pneg %p103
        %p173 = pneg %p100
        %s174 = sand.u32 %s90, 1
        %s175 = sand.u32 %s90, 1
        %s176 = smul.addr %s175, 24
        %s177 = scalar_lea.vmem [#allocation2], %s176
        %s178 = smul.u32 6, %s14
        %s179 = ssub.s32 9, %s178
        %p180 = scmp.lt.s32.totalorder %s179, 6
        %s181 = scalar_select %p180, %s179, 6
        %s182 = smul.u32 4, %s181
        %s183 = smul.u32 %s182, 4
        %p184 = scmp.lt.s32.totalorder %s178, 8
        %s185 = scalar_select %p184, %s178, 8
        %s186 = smul.addr %s185, 4
        %s187 = smul.addr %s186, 4
        %s188 = scalar_lea.vmem %s0, %s187
        %s189 = smul.u32 6, %s14
        %s190 = ssub.s32 9, %s189
        %p191 = scmp.lt.s32.totalorder %s190, 6
        %s192 = scalar_select %p191, %s190, 6
        %s193 = smul.u32 4, %s192
        %s194 = smul.u32 %s193, 4
        %s195 = smul.u32 6, %s14
        %s196 = ssub.s32 9, %s195
        %p197 = scmp.lt.s32.totalorder %s196, 6
        %s198 = scalar_select %p197, %s196, 6
        %s199 = smul.u32 4, %s198
        %v200 = vld [vmem:[%s188] sm:$0xff]
        %v201 = vld [vmem:[%s188 + $0x8] sm:$0xff]
        %v202 = vld [vmem:[%s188 + $0x10] sm:$0xff]
        %v203 = vld [vmem:[%s188 + $0x18] sm:$0xff]
        %v204 = vld [vmem:[%s188 + $0x20] sm:$0xff]
        %v205 = vld [vmem:[%s188 + $0x28] sm:$0xff]
        %v206 = vld [vmem:[%s188 + $0x30] sm:$0xff]
        %v207 = vld [vmem:[%s188 + $0x38] sm:$0xff]
        %v208 = vld [vmem:[%s188 + $0x40] sm:$0xff]
        %v209 = vld [vmem:[%s188 + $0x48] sm:$0xff]
        %v210 = vld [vmem:[%s188 + $0x50] sm:$0xff]
        %v211 = vld [vmem:[%s188 + $0x58] sm:$0xff]
        %v212 = vld [vmem:[%s1] sm:$0xf]
        %v213 = vld [vmem:[%s1 + $0x4] sm:$0xf]
        %v214 = vld [vmem:[%s1 + $0x8] sm:$0xf]
        %v215 = vld [vmem:[%s1 + $0xc] sm:$0xf]
        %v216 = vld [vmem:[%s1 + $0x10] sm:$0xf]
        %v217 = vld [vmem:[%s1 + $0x14] sm:$0xf]
        %v218 = vld [vmem:[%s1 + $0x18] sm:$0xf]
        %v219 = vld [vmem:[%s1 + $0x1c] sm:$0xf]
        %v220 = vld [vmem:[%s1 + $0x20] sm:$0xf]
        %v221 = vld [vmem:[%s1 + $0x24] sm:$0xf]
        %v222 = vld [vmem:[%s1 + $0x28] sm:$0xf]
        %v223 = vld [vmem:[%s1 + $0x2c] sm:$0xf]
        %v224 = vld [vmem:[%s1 + $0x30] sm:$0xf]
        %v225 = vld [vmem:[%s1 + $0x34] sm:$0xf]
        %v226 = vld [vmem:[%s1 + $0x38] sm:$0xf]
        %v227 = vld [vmem:[%s1 + $0x3c] sm:$0xf]
        %v228 = vld [vmem:[%s1 + $0x40] sm:$0xf]
        %v229 = vld [vmem:[%s1 + $0x44] sm:$0xf]
        %v230 = vld [vmem:[%s1 + $0x48] sm:$0xf]
        %v231 = vld [vmem:[%s1 + $0x4c] sm:$0xf]
        %v232 = vld [vmem:[%s1 + $0x50] sm:$0xf]
        %v233 = vld [vmem:[%s1 + $0x54] sm:$0xf]
        %v234 = vld [vmem:[%s1 + $0x58] sm:$0xf]
        %v235 = vld [vmem:[%s1 + $0x5c] sm:$0xf]
        %v236 = vld [vmem:[%s1 + $0x60] sm:$0xf]
        %v237 = vld [vmem:[%s1 + $0x64] sm:$0xf]
        %v238 = vld [vmem:[%s1 + $0x68] sm:$0xf]
        %v239 = vld [vmem:[%s1 + $0x6c] sm:$0xf]
        %v240 = vld [vmem:[%s1 + $0x70] sm:$0xf]
        %v241 = vld [vmem:[%s1 + $0x74] sm:$0xf]
        %v242 = vld [vmem:[%s1 + $0x78] sm:$0xf]
        %v243 = vld [vmem:[%s1 + $0x7c] sm:$0xf]
        %v244 = vld [vmem:[%s1 + $0x80] sm:$0xf]
        %v245 = vld [vmem:[%s1 + $0x84] sm:$0xf]
        %v246 = vld [vmem:[%s1 + $0x88] sm:$0xf]
        %v247 = vld [vmem:[%s1 + $0x8c] sm:$0xf]
        %v248 = vld [vmem:[%s1 + $0x90] sm:$0xf]
        %v249 = vld [vmem:[%s1 + $0x94] sm:$0xf]
        %v250 = vld [vmem:[%s1 + $0x98] sm:$0xf]
        %v251 = vld [vmem:[%s1 + $0x9c] sm:$0xf]
        %v252 = vld [vmem:[%s1 + $0xa0] sm:$0xf]
        %v253 = vld [vmem:[%s1 + $0xa4] sm:$0xf]
        %v254 = vld [vmem:[%s1 + $0xa8] sm:$0xf]
        %v255 = vld [vmem:[%s1 + $0xac] sm:$0xf]
        %v256 = vld [vmem:[%s1 + $0xb0] sm:$0xf]
        %v257 = vld [vmem:[%s1 + $0xb4] sm:$0xf]
        %v258 = vld [vmem:[%s1 + $0xb8] sm:$0xf]
        %v259 = vld [vmem:[%s1 + $0xbc] sm:$0xf]
        %v260 = vld [vmem:[%s1 + $0xc0] sm:$0xf]
        %v261 = vld [vmem:[%s1 + $0xc4] sm:$0xf]
        %v262 = vld [vmem:[%s1 + $0xc8] sm:$0xf]
        %v263 = vld [vmem:[%s1 + $0xcc] sm:$0xf]
        %v264 = vld [vmem:[%s1 + $0xd0] sm:$0xf]
        %v265 = vld [vmem:[%s1 + $0xd4] sm:$0xf]
        %v266 = vld [vmem:[%s1 + $0xd8] sm:$0xf]
        %v267 = vld [vmem:[%s1 + $0xdc] sm:$0xf]
        %v268 = vld [vmem:[%s1 + $0xe0] sm:$0xf]
        %v269 = vld [vmem:[%s1 + $0xe4] sm:$0xf]
        %v270 = vld [vmem:[%s1 + $0xe8] sm:$0xf]
        %v271 = vld [vmem:[%s1 + $0xec] sm:$0xf]
        %v272 = vld [vmem:[%s1 + $0xf0] sm:$0xf]
        %v273 = vld [vmem:[%s1 + $0xf4] sm:$0xf]
        %v274 = vld [vmem:[%s1 + $0xf8] sm:$0xf]
        %v275 = vld [vmem:[%s1 + $0xfc] sm:$0xf]
        %v276 = vld [vmem:[%s2] sm:$0x1]
        %v278 = vperm.slane %v276, 0
        %v292 = vunpack.c.l.b16 %v200
        %v293 = vunpack.c.h.b16 %v200
        %v294 = vunpack.c.l.b16 %v201
        %v295 = vunpack.c.h.b16 %v201
        %v296 = vunpack.c.l.b16 %v202
        %v297 = vunpack.c.h.b16 %v202
        %v298 = vunpack.c.l.b16 %v203
        %v299 = vunpack.c.h.b16 %v203
        %v300 = vunpack.c.l.b16 %v204
        %v301 = vunpack.c.h.b16 %v204
        %v302 = vunpack.c.l.b16 %v205
        %v303 = vunpack.c.h.b16 %v205
        %v304 = vunpack.c.l.b16 %v206
        %v305 = vunpack.c.h.b16 %v206
        %v306 = vunpack.c.l.b16 %v207
        %v307 = vunpack.c.h.b16 %v207
        %v308 = vunpack.c.l.b16 %v208
        %v309 = vunpack.c.h.b16 %v208
        %v310 = vunpack.c.l.b16 %v209
        %v311 = vunpack.c.h.b16 %v209
        %v312 = vunpack.c.l.b16 %v210
        %v313 = vunpack.c.h.b16 %v210
        %v314 = vunpack.c.l.b16 %v211
        %v315 = vunpack.c.h.b16 %v211
        %v316 = vpack.c.b16 %v296, %v292
        %v317 = vpack.c.b16 %v297, %v293
        %v318 = vpack.c.b16 %v298, %v294
        %v319 = vpack.c.b16 %v299, %v295
        %v320 = vpack.c.b16 %v304, %v300
        %v321 = vpack.c.b16 %v305, %v301
        %v322 = vpack.c.b16 %v306, %v302
        %v323 = vpack.c.b16 %v307, %v303
        %v324 = vpack.c.b16 %v312, %v308
        %v325 = vpack.c.b16 %v313, %v309
        %v326 = vpack.c.b16 %v314, %v310
        %v327 = vpack.c.b16 %v315, %v311
        %v404 = vunpack.c.l.b16 %v212
        %v405 = vunpack.c.l.b16 %v213
        %v406 = vunpack.c.l.b16 %v214
        %v407 = vunpack.c.l.b16 %v215
        %v408 = vunpack.c.l.b16 %v216
        %v409 = vunpack.c.l.b16 %v217
        %v410 = vunpack.c.l.b16 %v218
        %v411 = vunpack.c.l.b16 %v219
        %v412 = vunpack.c.l.b16 %v220
        %v413 = vunpack.c.l.b16 %v221
        %v414 = vunpack.c.l.b16 %v222
        %v415 = vunpack.c.l.b16 %v223
        %v416 = vunpack.c.l.b16 %v224
        %v417 = vunpack.c.l.b16 %v225
        %v418 = vunpack.c.l.b16 %v226
        %v419 = vunpack.c.l.b16 %v227
        %v420 = vunpack.c.l.b16 %v228
        %v421 = vunpack.c.l.b16 %v229
        %v422 = vunpack.c.l.b16 %v230
        %v423 = vunpack.c.l.b16 %v231
        %v424 = vunpack.c.l.b16 %v232
        %v425 = vunpack.c.l.b16 %v233
        %v426 = vunpack.c.l.b16 %v234
        %v427 = vunpack.c.l.b16 %v235
        %v428 = vunpack.c.l.b16 %v236
        %v429 = vunpack.c.l.b16 %v237
        %v430 = vunpack.c.l.b16 %v238
        %v431 = vunpack.c.l.b16 %v239
        %v432 = vunpack.c.l.b16 %v240
        %v433 = vunpack.c.l.b16 %v241
        %v434 = vunpack.c.l.b16 %v242
        %v435 = vunpack.c.l.b16 %v243
        %v436 = vunpack.c.l.b16 %v244
        %v437 = vunpack.c.l.b16 %v245
        %v438 = vunpack.c.l.b16 %v246
        %v439 = vunpack.c.l.b16 %v247
        %v440 = vunpack.c.l.b16 %v248
        %v441 = vunpack.c.l.b16 %v249
        %v442 = vunpack.c.l.b16 %v250
        %v443 = vunpack.c.l.b16 %v251
        %v444 = vunpack.c.l.b16 %v252
        %v445 = vunpack.c.l.b16 %v253
        %v446 = vunpack.c.l.b16 %v254
        %v447 = vunpack.c.l.b16 %v255
        %v448 = vunpack.c.l.b16 %v256
        %v449 = vunpack.c.l.b16 %v257
        %v450 = vunpack.c.l.b16 %v258
        %v451 = vunpack.c.l.b16 %v259
        %v452 = vunpack.c.l.b16 %v260
        %v453 = vunpack.c.l.b16 %v261
        %v454 = vunpack.c.l.b16 %v262
        %v455 = vunpack.c.l.b16 %v263
        %v456 = vunpack.c.l.b16 %v264
        %v457 = vunpack.c.l.b16 %v265
        %v458 = vunpack.c.l.b16 %v266
        %v459 = vunpack.c.l.b16 %v267
        %v460 = vunpack.c.l.b16 %v268
        %v461 = vunpack.c.l.b16 %v269
        %v462 = vunpack.c.l.b16 %v270
        %v463 = vunpack.c.l.b16 %v271
        %v464 = vunpack.c.l.b16 %v272
        %v465 = vunpack.c.l.b16 %v273
        %v466 = vunpack.c.l.b16 %v274
        %v467 = vunpack.c.l.b16 %v275
        %v468 = vpack.c.b16 %v405, %v404
        %v469 = vpack.c.b16 %v407, %v406
        %v470 = vpack.c.b16 %v409, %v408
        %v471 = vpack.c.b16 %v411, %v410
        %v472 = vpack.c.b16 %v413, %v412
        %v473 = vpack.c.b16 %v415, %v414
        %v474 = vpack.c.b16 %v417, %v416
        %v475 = vpack.c.b16 %v419, %v418
        %v476 = vpack.c.b16 %v421, %v420
        %v477 = vpack.c.b16 %v423, %v422
        %v478 = vpack.c.b16 %v425, %v424
        %v479 = vpack.c.b16 %v427, %v426
        %v480 = vpack.c.b16 %v429, %v428
        %v481 = vpack.c.b16 %v431, %v430
        %v482 = vpack.c.b16 %v433, %v432
        %v483 = vpack.c.b16 %v435, %v434
        %v484 = vpack.c.b16 %v437, %v436
        %v485 = vpack.c.b16 %v439, %v438
        %v486 = vpack.c.b16 %v441, %v440
        %v487 = vpack.c.b16 %v443, %v442
        %v488 = vpack.c.b16 %v445, %v444
        %v489 = vpack.c.b16 %v447, %v446
        %v490 = vpack.c.b16 %v449, %v448
        %v491 = vpack.c.b16 %v451, %v450
        %v492 = vpack.c.b16 %v453, %v452
        %v493 = vpack.c.b16 %v455, %v454
        %v494 = vpack.c.b16 %v457, %v456
        %v495 = vpack.c.b16 %v459, %v458
        %v496 = vpack.c.b16 %v461, %v460
        %v497 = vpack.c.b16 %v463, %v462
        %v498 = vpack.c.b16 %v465, %v464
        %v499 = vpack.c.b16 %v467, %v466
        %532 = vmatpush.bf16.msra.mxu0 %v475
        %533 = vmatpush.bf16.msra.mxu0 %v474
        %534 = vmatpush.bf16.msra.mxu0 %v473
        %535 = vmatpush.bf16.msra.mxu0 %v472
        %536 = vmatpush.bf16.msra.mxu0 %v471
        %537 = vmatpush.bf16.msra.mxu0 %v470
        %538 = vmatpush.bf16.msra.mxu0 %v469
        %539 = vmatpush.bf16.msra.mxu0 %v468
        %540 = vmatmul.bf16.gmra.mxu0 %v316
        %v541 = vpop.f32.mrf.mxu0
        %v542 = vadd.f32 %v278, %v541
        %v543 = vpop.f32.mrf.mxu0
        %v544 = vadd.f32 %v278, %v543
        %545 = vmatmul.bf16.gmra.mxu0 %v320
        %v546 = vpop.f32.mrf.mxu0
        %v547 = vadd.f32 %v278, %v546
        %v548 = vpop.f32.mrf.mxu0
        %v549 = vadd.f32 %v278, %v548
        %550 = vmatmul.bf16.gmra.mxu0 %v324
        %v551 = vpop.f32.mrf.mxu0
        %v552 = vadd.f32 %v278, %v551
        %v553 = vpop.f32.mrf.mxu0
        %v554 = vadd.f32 %v278, %v553
        %555 = vdwg.mxu0
        %556 = vmatpush.bf16.msra.mxu0 %v483
        %557 = vmatpush.bf16.msra.mxu0 %v482
        %558 = vmatpush.bf16.msra.mxu0 %v481
        %559 = vmatpush.bf16.msra.mxu0 %v480
        %560 = vmatpush.bf16.msra.mxu0 %v479
        %561 = vmatpush.bf16.msra.mxu0 %v478
        %562 = vmatpush.bf16.msra.mxu0 %v477
        %563 = vmatpush.bf16.msra.mxu0 %v476
        %564 = vmatmul.bf16.gmra.mxu0 %v317
        %v565 = vpop.f32.mrf.mxu0
        %v566 = vadd.f32 %v542, %v565
        %v567 = vpop.f32.mrf.mxu0
        %v568 = vadd.f32 %v544, %v567
        %569 = vmatmul.bf16.gmra.mxu0 %v321
        %v570 = vpop.f32.mrf.mxu0
        %v571 = vadd.f32 %v547, %v570
        %v572 = vpop.f32.mrf.mxu0
        %v573 = vadd.f32 %v549, %v572
        %574 = vmatmul.bf16.gmra.mxu0 %v325
        %v575 = vpop.f32.mrf.mxu0
        %v576 = vadd.f32 %v552, %v575
        %v577 = vpop.f32.mrf.mxu0
        %v578 = vadd.f32 %v554, %v577
        %579 = vdwg.mxu0
        %580 = vmatpush.bf16.msra.mxu0 %v491
        %581 = vmatpush.bf16.msra.mxu0 %v490
        %582 = vmatpush.bf16.msra.mxu0 %v489
        %583 = vmatpush.bf16.msra.mxu0 %v488
        %584 = vmatpush.bf16.msra.mxu0 %v487
        %585 = vmatpush.bf16.msra.mxu0 %v486
        %586 = vmatpush.bf16.msra.mxu0 %v485
        %587 = vmatpush.bf16.msra.mxu0 %v484
        %588 = vmatmul.bf16.gmra.mxu0 %v318
        %v589 = vpop.f32.mrf.mxu0
        %v590 = vadd.f32 %v566, %v589
        %v591 = vpop.f32.mrf.mxu0
        %v592 = vadd.f32 %v568, %v591
        %593 = vmatmul.bf16.gmra.mxu0 %v322
        %v594 = vpop.f32.mrf.mxu0
        %v595 = vadd.f32 %v571, %v594
        %v596 = vpop.f32.mrf.mxu0
        %v597 = vadd.f32 %v573, %v596
        %598 = vmatmul.bf16.gmra.mxu0 %v326
        %v599 = vpop.f32.mrf.mxu0
        %v600 = vadd.f32 %v576, %v599
        %v601 = vpop.f32.mrf.mxu0
        %v602 = vadd.f32 %v578, %v601
        %603 = vdwg.mxu0
        %604 = vmatpush.bf16.msra.mxu0 %v499
        %605 = vmatpush.bf16.msra.mxu0 %v498
        %606 = vmatpush.bf16.msra.mxu0 %v497
        %607 = vmatpush.bf16.msra.mxu0 %v496
        %608 = vmatpush.bf16.msra.mxu0 %v495
        %609 = vmatpush.bf16.msra.mxu0 %v494
        %610 = vmatpush.bf16.msra.mxu0 %v493
        %611 = vmatpush.bf16.msra.mxu0 %v492
        %612 = vmatmul.bf16.gmra.mxu0 %v319
        %v613 = vpop.f32.mrf.mxu0
        %v614 = vadd.f32 %v590, %v613
        %v615 = vpop.f32.mrf.mxu0
        %v616 = vadd.f32 %v592, %v615
        %617 = vmatmul.bf16.gmra.mxu0 %v323
        %v618 = vpop.f32.mrf.mxu0
        %v619 = vadd.f32 %v595, %v618
        %v620 = vpop.f32.mrf.mxu0
        %v621 = vadd.f32 %v597, %v620
        %622 = vmatmul.bf16.gmra.mxu0 %v327
        %v623 = vpop.f32.mrf.mxu0
        %v624 = vadd.f32 %v600, %v623
        %v625 = vpop.f32.mrf.mxu0
        %v626 = vadd.f32 %v602, %v625
        %627 = vdwg.mxu0
        %v628 = vmax.f32 %v614, 0.0
        %v629 = vmax.f32 %v616, 0.0
        %v630 = vmax.f32 %v619, 0.0
        %v631 = vmax.f32 %v621, 0.0
        %v632 = vmax.f32 %v624, 0.0
        %v633 = vmax.f32 %v626, 0.0
        %v634 = vpack.c.bf16 %v628, %v628
        %v635 = vpack.c.bf16 %v629, %v629
        %v636 = vpack.c.bf16 %v630, %v630
        %v637 = vpack.c.bf16 %v631, %v631
        %v638 = vpack.c.bf16 %v632, %v632
        %v639 = vpack.c.bf16 %v633, %v633
        %vm640 = vcmask 519168
        %641 = vst.msk [vmem:[%s177] sm:$0xf] %vm640, %v634
        %642 = vst.msk [vmem:[%s177 + $0x4] sm:$0xf] %vm640, %v635
        %643 = vst.msk [vmem:[%s177 + $0x8] sm:$0xf] %vm640, %v636
        %644 = vst.msk [vmem:[%s177 + $0xc] sm:$0xf] %vm640, %v637
        %645 = vst.msk [vmem:[%s177 + $0x10] sm:$0xf] %vm640, %v638
        %646 = vst.msk [vmem:[%s177 + $0x14] sm:$0xf] %vm640, %v639
        %s647 = sand.u32 %s90, 1
        %s648 = sand.u32 %s90, 1
        %s649 = smul.addr %s648, 24
        %s650 = scalar_lea.vmem [#allocation2], %s649
        // Predicated region
        $region33: #{pointnav_baseline_net_forward.5} parent=31 // pred_check
          %p651 = pneg %p100
        $region34: #{pointnav_baseline_net_forward.5} parent=31 // pred_check_branch
          %653 = sbr.rel (%p651) target = $region36
        $region35: #{pointnav_baseline_net_forward.5} parent=31 // pred_region
          %s654 = smul.u32 6, %s14
          %s655 = ssub.s32 9, %s654
          %p656 = scmp.lt.s32.totalorder %s655, 6
          %s657 = scalar_select %p656, %s655, 6
          %s658 = smul.u32 4, %s657
          %p659 = scmp.ne.s32.totalorder 0, %s658
          %s660 = smul.addr %s654, 4
          %s661 = scalar_lea.vmem %s3, %s660
          // Predicated region
          $region37: #{pointnav_baseline_net_forward.5} parent=35 // pred_check
            %p662 = pneg %p659
          $region38: #{pointnav_baseline_net_forward.5} parent=35 // pred_check_branch
            %664 = sbr.rel (%p662) target = $region40
          $region39: #{pointnav_baseline_net_forward.5} parent=35 // pred_region
            // Predicated region
            $region41: #{pointnav_baseline_net_forward.5} parent=39 // pred_check
              _
            $region42: #{pointnav_baseline_net_forward.5} parent=39 // pred_check_branch
              %666 = sbr.rel target = $region44
            $region43: #{pointnav_baseline_net_forward.5} parent=39 // pred_region
              // Predicated region
              $region63: #{pointnav_baseline_net_forward.5} parent=43 // pred_check
                _
              $region64: #{pointnav_baseline_net_forward.5} parent=43 // pred_check_branch
                %727 = sbr.rel (0) target = $region66
              $region65: #{pointnav_baseline_net_forward.5} parent=43 // pred_region
                %s729 = ssub.s32 16, 1
                %s730 = sdiv.u32.pop %s657, 6
                %s731 = srem.u32.pop %s657, 6
                // While loop
                $region67: #{pointnav_baseline_net_forward.5} parent=65 // loop_pre_header
                  _
                $region68: #{pointnav_baseline_net_forward.5} parent=65 // loop_header
                  %s733 = sphi 0, %s735
                  %p734 = scmp.ge.s32.totalorder %s733, %s730
                  %s738 = sphi 0, %s755
                  %s739 = sphi %s650, %s758
                  %s740 = sphi %s661, %s759
                $region69: #{pointnav_baseline_net_forward.5} parent=65 // loop_header_branch
                  %737 = sbr.rel (%p734) target = $region73
                $region70: #{pointnav_baseline_net_forward.5} parent=65 // loop_body
                  %v741 = vld [vmem:[%s739] sm:%s729]
                  %742 = vst [vmem:[%s740] sm:%s729] %v741
                  %v743 = vld [vmem:[%s739 + $0x4] sm:%s729]
                  %744 = vst [vmem:[%s740 + $0x4] sm:%s729] %v743
                  %v745 = vld [vmem:[%s739 + $0x8] sm:%s729]
                  %746 = vst [vmem:[%s740 + $0x8] sm:%s729] %v745
                  %v747 = vld [vmem:[%s739 + $0xc] sm:%s729]
                  %748 = vst [vmem:[%s740 + $0xc] sm:%s729] %v747
                  %v749 = vld [vmem:[%s739 + $0x10] sm:%s729]
                  %750 = vst [vmem:[%s740 + $0x10] sm:%s729] %v749
                  %v751 = vld [vmem:[%s739 + $0x14] sm:%s729]
                  %752 = vst [vmem:[%s740 + $0x14] sm:%s729] %v751
                  %s753 = sadd.s32 1, %s738
                  %p754 = scmp.ge.s32.totalorder %s753, %s730
                  %s755 = scalar_select %p754, 0, %s753
                  %s756 = smul.u32 %s755, 24
                  %s757 = smul.u32 %s755, 24
                  %s758 = scalar_lea.vmem %s650, %s756 [#allocation2]
                  %s759 = scalar_lea.vmem %s661, %s757
                $region71: #{pointnav_baseline_net_forward.5} parent=65 // loop_footer
                  %s735 = sadd.s32 %s733, 1
                $region72: #{pointnav_baseline_net_forward.5} parent=65 // loop_footer_branch
                  %732 = sbr.rel target = $region68
                $region73: #{pointnav_baseline_net_forward.5} parent=65 // loop_exit
                  _
                %s760 = sdiv.u32.pop %s657, 6
                %s761 = srem.u32.pop %s657, 6
                %s762 = smul.u32 %s760, 6
                %s763 = smul.u32 4, %s762
                %s764 = scalar_lea.vmem %s650, %s763 [#allocation2]
                %s765 = smul.u32 4, %s762
                %s766 = scalar_lea.vmem %s661, %s765
                // While loop
                $region74: #{pointnav_baseline_net_forward.5} parent=65 // loop_pre_header
                  _
                $region75: #{pointnav_baseline_net_forward.5} parent=65 // loop_header
                  %s768 = sphi 0, %s770
                  %p769 = scmp.ge.s32.totalorder %s768, %s761
                  %s773 = sphi 0, %s780
                  %s774 = sphi %s764, %s783
                  %s775 = sphi %s766, %s784
                $region76: #{pointnav_baseline_net_forward.5} parent=65 // loop_header_branch
                  %772 = sbr.rel (%p769) target = $region80
                $region77: #{pointnav_baseline_net_forward.5} parent=65 // loop_body
                  %v776 = vld [vmem:[%s774] sm:%s729]
                  %777 = vst [vmem:[%s775] sm:%s729] %v776
                  %s778 = sadd.s32 1, %s773
                  %p779 = scmp.ge.s32.totalorder %s778, %s761
                  %s780 = scalar_select %p779, 0, %s778
                  %s781 = smul.u32 %s780, 4
                  %s782 = smul.u32 %s780, 4
                  %s783 = scalar_lea.vmem %s764, %s781 [#allocation2]
                  %s784 = scalar_lea.vmem %s766, %s782
                $region78: #{pointnav_baseline_net_forward.5} parent=65 // loop_footer
                  %s770 = sadd.s32 %s768, 1
                $region79: #{pointnav_baseline_net_forward.5} parent=65 // loop_footer_branch
                  %767 = sbr.rel target = $region75
                $region80: #{pointnav_baseline_net_forward.5} parent=65 // loop_exit
                  _
              $region66: #{pointnav_baseline_net_forward.5} parent=43 // pred_fallthru
                _
            $region44: #{pointnav_baseline_net_forward.5} parent=39 // pred_fallthru
              _
            // Predicated region
            $region45: #{pointnav_baseline_net_forward.5} parent=39 // pred_check
              _
            $region46: #{pointnav_baseline_net_forward.5} parent=39 // pred_check_branch
              %668 = sbr.rel (0) target = $region48
            $region47: #{pointnav_baseline_net_forward.5} parent=39 // pred_region
              %s670 = ssub.s32 16, 1
              %s671 = sdiv.u32.pop %s657, 6
              %s672 = srem.u32.pop %s657, 6
              // While loop
              $region49: #{pointnav_baseline_net_forward.5} parent=47 // loop_pre_header
                _
              $region50: #{pointnav_baseline_net_forward.5} parent=47 // loop_header
                %s674 = sphi 0, %s676
                %p675 = scmp.ge.s32.totalorder %s674, %s671
                %s679 = sphi 0, %s696
                %s680 = sphi %s650, %s699
                %s681 = sphi %s661, %s700
              $region51: #{pointnav_baseline_net_forward.5} parent=47 // loop_header_branch
                %678 = sbr.rel (%p675) target = $region55
              $region52: #{pointnav_baseline_net_forward.5} parent=47 // loop_body
                %v682 = vld [vmem:[%s680] sm:%s670]
                %683 = vst [vmem:[%s681] sm:%s670] %v682
                %v684 = vld [vmem:[%s680 + $0x4] sm:%s670]
                %685 = vst [vmem:[%s681 + $0x4] sm:%s670] %v684
                %v686 = vld [vmem:[%s680 + $0x8] sm:%s670]
                %687 = vst [vmem:[%s681 + $0x8] sm:%s670] %v686
                %v688 = vld [vmem:[%s680 + $0xc] sm:%s670]
                %689 = vst [vmem:[%s681 + $0xc] sm:%s670] %v688
                %v690 = vld [vmem:[%s680 + $0x10] sm:%s670]
                %691 = vst [vmem:[%s681 + $0x10] sm:%s670] %v690
                %v692 = vld [vmem:[%s680 + $0x14] sm:%s670]
                %693 = vst [vmem:[%s681 + $0x14] sm:%s670] %v692
                %s694 = sadd.s32 1, %s679
                %p695 = scmp.ge.s32.totalorder %s694, %s671
                %s696 = scalar_select %p695, 0, %s694
                %s697 = smul.u32 %s696, 24
                %s698 = smul.u32 %s696, 24
                %s699 = scalar_lea.vmem %s650, %s697 [#allocation2]
                %s700 = scalar_lea.vmem %s661, %s698
              $region53: #{pointnav_baseline_net_forward.5} parent=47 // loop_footer
                %s676 = sadd.s32 %s674, 1
              $region54: #{pointnav_baseline_net_forward.5} parent=47 // loop_footer_branch
                %673 = sbr.rel target = $region50
              $region55: #{pointnav_baseline_net_forward.5} parent=47 // loop_exit
                _
              %s701 = sdiv.u32.pop %s657, 6
              %s702 = srem.u32.pop %s657, 6
              %s703 = smul.u32 %s701, 6
              %s704 = smul.u32 4, %s703
              %s705 = scalar_lea.vmem %s650, %s704 [#allocation2]
              %s706 = smul.u32 4, %s703
              %s707 = scalar_lea.vmem %s661, %s706
              // While loop
              $region56: #{pointnav_baseline_net_forward.5} parent=47 // loop_pre_header
                _
              $region57: #{pointnav_baseline_net_forward.5} parent=47 // loop_header
                %s709 = sphi 0, %s711
                %p710 = scmp.ge.s32.totalorder %s709, %s702
                %s714 = sphi 0, %s721
                %s715 = sphi %s705, %s724
                %s716 = sphi %s707, %s725
              $region58: #{pointnav_baseline_net_forward.5} parent=47 // loop_header_branch
                %713 = sbr.rel (%p710) target = $region62
              $region59: #{pointnav_baseline_net_forward.5} parent=47 // loop_body
                %v717 = vld [vmem:[%s715] sm:%s670]
                %718 = vst [vmem:[%s716] sm:%s670] %v717
                %s719 = sadd.s32 1, %s714
                %p720 = scmp.ge.s32.totalorder %s719, %s702
                %s721 = scalar_select %p720, 0, %s719
                %s722 = smul.u32 %s721, 4
                %s723 = smul.u32 %s721, 4
                %s724 = scalar_lea.vmem %s705, %s722 [#allocation2]
                %s725 = scalar_lea.vmem %s707, %s723
              $region60: #{pointnav_baseline_net_forward.5} parent=47 // loop_footer
                %s711 = sadd.s32 %s709, 1
              $region61: #{pointnav_baseline_net_forward.5} parent=47 // loop_footer_branch
                %708 = sbr.rel target = $region57
              $region62: #{pointnav_baseline_net_forward.5} parent=47 // loop_exit
                _
            $region48: #{pointnav_baseline_net_forward.5} parent=39 // pred_fallthru
              _
          $region40: #{pointnav_baseline_net_forward.5} parent=35 // pred_fallthru
            _
          %785 = vnop
        $region36: #{pointnav_baseline_net_forward.5} parent=31 // pred_fallthru
          _
      $region32: #{pointnav_baseline_net_forward.5} parent=5 // pred_fallthru
        _
      %p786 = scmp.le.s32.totalorder 2, %s9
      // Predicated region
      $region81: #{pointnav_baseline_net_forward.5} parent=5 // pred_check
        %p787 = pneg %p786
      $region82: #{pointnav_baseline_net_forward.5} parent=5 // pred_check_branch
        %789 = sbr.rel (%p787) target = $region84
      $region83: #{pointnav_baseline_net_forward.5} parent=5 // pred_region
        %s790 = ssub.s32 %s9, 2
        // Predicated region
        $region85: #{pointnav_baseline_net_forward.5} parent=83 // pred_check
          %p791 = pneg %p106
        $region86: #{pointnav_baseline_net_forward.5} parent=83 // pred_check_branch
          %793 = sbr.rel (%p791) target = $region88
        $region87: #{pointnav_baseline_net_forward.5} parent=83 // pred_region
          %s794 = sand.u32 %s91, 1
          %s795 = sand.u32 %s91, 1
          %s796 = smul.addr %s795, 24
          %s797 = scalar_lea.vmem [#allocation2], %s796
        $region88: #{pointnav_baseline_net_forward.5} parent=83 // pred_fallthru
          _
      $region84: #{pointnav_baseline_net_forward.5} parent=5 // pred_fallthru
        _
    $region6: #{pointnav_baseline_net_forward.5} parent=1 // loop_footer
      %s13 = sadd.s32 1, %s9
    $region7: #{pointnav_baseline_net_forward.5} parent=1 // loop_footer_branch
      %8 = sbr.rel target = $region3
    $region8: #{pointnav_baseline_net_forward.5} parent=1 // loop_exit
      _

// kernel: pointnav_baseline_net_forward.6
$region0: #{pointnav_baseline_net_forward.6}
  #allocation0 [shape = 'u32[]', space=smem, size = 0x4, offset = 0x4, fixed_abs, tag = 'smem constant byte address 0x4 - core index']
  #allocation1 [shape = 'u32[72,128]{1,0:T(1,128)}', space=vmem, size = 0x9000, scoped, tag = 'internal scratch']
  %s0 = inlined_call_operand.vmem [shape: bf16[32,576], index: 0, kind: input, shape index: {}]
  %s1 = inlined_call_operand.vmem [shape: bf16[576,32], index: 1, kind: input, shape index: {}]
  %s2 = inlined_call_operand.vmem [shape: f32[1,32], index: 2, kind: input, shape index: {}]
  %s3 = inlined_call_operand.vmem [shape: bf16[32,32], index: 3, kind: output, shape index: {}]
  %s4 = sld [smem:[#allocation0]]
  $region45: #{pointnav_baseline_net_forward.6} parent=0
    _
  %s6 = ssub.s32 1, %s4
  %s7 = scalar_select 0, %s6, %s4
  loop: start=0, step=1, limit=4
  $region2: #{pointnav_baseline_net_forward.6} parent=0 // loop_pre_header
    _
  $region3: #{pointnav_baseline_net_forward.6} parent=0 // loop_header
    %s9 = sphi 0, %s13
    %p10 = scmp.ge.s32.totalorder %s9, 4
    %s19 = sphi 0, %s21
    %s22 = sphi 0, %s19
    %s23 = sphi 0, %s22
    %s39 = sphi 0, %s23
    %s43 = sphi 0, %s43
    %s45 = sphi 0, %s43
    %s46 = sphi 0, %s45
    %s60 = sphi 0, %s46
    %s64 = sphi 0, %s64
    %s66 = sphi 0, %s64
    %s67 = sphi 0, %s66
    %s81 = sphi 0, %s67
    %s87 = sphi 0, %s89
    %s90 = sphi 0, %s87
    %s91 = sphi 0, %s90
    %s107 = sphi 0, %s91
  $region4: #{pointnav_baseline_net_forward.6} parent=0 // loop_header_branch
    %12 = sbr.rel (%p10) target = $region8
  $region5: #{pointnav_baseline_net_forward.6} parent=0 // loop_body
    %s14 = ssub.s32 %s9, 1
    %s15 = ssub.s32 %s9, 2
    %s16 = sadd.s32 %s9, 1
    %s17 = ssub.s32 %s9, %s16
    %p18 = scmp.eq.s32.totalorder %s17, 0
    %s20 = sadd.s32 %s19, 1
    %s21 = scalar_select %p18, %s19, %s20
    %p24 = pneg %p18
    %p25 = scmp.eq.s32.totalorder %s9, 1
    %p26 = por %p24, %p25
    %p27 = scmp.ne.s32.totalorder %s19, %s22
    %p28 = scmp.eq.s32.totalorder %s9, 0
    %p29 = por %p27, %p28
    %p30 = scmp.ne.s32.totalorder %s19, %s22
    %p31 = scmp.eq.s32.totalorder %s14, 1
    %p32 = por %p30, %p31
    %p33 = scmp.ne.s32.totalorder %s22, %s23
    %p34 = scmp.eq.s32.totalorder %s14, 0
    %p35 = por %p33, %p34
    %p36 = scmp.ne.s32.totalorder %s22, %s23
    %p37 = scmp.eq.s32.totalorder %s15, 1
    %p38 = por %p36, %p37
    %p40 = scmp.ne.s32.totalorder %s23, %s39
    %p41 = scmp.eq.s32.totalorder %s15, 0
    %p42 = por %p40, %p41
    %s44 = sadd.s32 %s43, 1
    %p47 = scmp.eq.s32.totalorder %s9, 1
    %p48 = scmp.ne.s32.totalorder %s43, %s45
    %p49 = scmp.eq.s32.totalorder %s9, 0
    %p50 = por %p48, %p49
    %p51 = scmp.ne.s32.totalorder %s43, %s45
    %p52 = scmp.eq.s32.totalorder %s14, 1
    %p53 = por %p51, %p52
    %p54 = scmp.ne.s32.totalorder %s45, %s46
    %p55 = scmp.eq.s32.totalorder %s14, 0
    %p56 = por %p54, %p55
    %p57 = scmp.ne.s32.totalorder %s45, %s46
    %p58 = scmp.eq.s32.totalorder %s15, 1
    %p59 = por %p57, %p58
    %p61 = scmp.ne.s32.totalorder %s46, %s60
    %p62 = scmp.eq.s32.totalorder %s15, 0
    %p63 = por %p61, %p62
    %s65 = sadd.s32 %s64, 1
    %p68 = scmp.eq.s32.totalorder %s9, 1
    %p69 = scmp.ne.s32.totalorder %s64, %s66
    %p70 = scmp.eq.s32.totalorder %s9, 0
    %p71 = por %p69, %p70
    %p72 = scmp.ne.s32.totalorder %s64, %s66
    %p73 = scmp.eq.s32.totalorder %s14, 1
    %p74 = por %p72, %p73
    %p75 = scmp.ne.s32.totalorder %s66, %s67
    %p76 = scmp.eq.s32.totalorder %s14, 0
    %p77 = por %p75, %p76
    %p78 = scmp.ne.s32.totalorder %s66, %s67
    %p79 = scmp.eq.s32.totalorder %s15, 1
    %p80 = por %p78, %p79
    %p82 = scmp.ne.s32.totalorder %s67, %s81
    %p83 = scmp.eq.s32.totalorder %s15, 0
    %p84 = por %p82, %p83
    %s85 = ssub.s32 %s9, %s16
    %p86 = scmp.eq.s32.totalorder %s85, 0
    %s88 = sadd.s32 %s87, 1
    %s89 = scalar_select %p86, %s87, %s88
    %p92 = pneg %p86
    %p93 = scmp.eq.s32.totalorder %s9, 1
    %p94 = por %p92, %p93
    %p95 = scmp.ne.s32.totalorder %s87, %s90
    %p96 = scmp.eq.s32.totalorder %s9, 0
    %p97 = por %p95, %p96
    %p98 = scmp.ne.s32.totalorder %s87, %s90
    %p99 = scmp.eq.s32.totalorder %s14, 1
    %p100 = por %p98, %p99
    %p101 = scmp.ne.s32.totalorder %s90, %s91
    %p102 = scmp.eq.s32.totalorder %s14, 0
    %p103 = por %p101, %p102
    %p104 = scmp.ne.s32.totalorder %s90, %s91
    %p105 = scmp.eq.s32.totalorder %s15, 1
    %p106 = por %p104, %p105
    %p108 = scmp.ne.s32.totalorder %s91, %s107
    %p109 = scmp.eq.s32.totalorder %s15, 0
    %p110 = por %p108, %p109
    %p111 = scmp.le.s32.totalorder 1, %s9
    %p112 = scmp.lt.s32.totalorder %s9, 3
    %p113 = pnand %p111, %p112
    %p114 = pneg %p113
    // Predicated region
    $region9: #{pointnav_baseline_net_forward.6} parent=5 // pred_check
      _
    $region10: #{pointnav_baseline_net_forward.6} parent=5 // pred_check_branch
      %116 = sbr.rel (%p113) target = $region12
    $region11: #{pointnav_baseline_net_forward.6} parent=5 // pred_region
      %s117 = ssub.s32 %s9, 1
      // Predicated region
      $region13: #{pointnav_baseline_net_forward.6} parent=11 // pred_check
        %p118 = pneg %p56
      $region14: #{pointnav_baseline_net_forward.6} parent=11 // pred_check_branch
        %120 = sbr.rel (%p118) target = $region16
      $region15: #{pointnav_baseline_net_forward.6} parent=11 // pred_region
        _
      $region16: #{pointnav_baseline_net_forward.6} parent=11 // pred_fallthru
        _
      // Predicated region
      $region17: #{pointnav_baseline_net_forward.6} parent=11 // pred_check
        %p121 = pneg %p77
      $region18: #{pointnav_baseline_net_forward.6} parent=11 // pred_check_branch
        %123 = sbr.rel (%p121) target = $region20
      $region19: #{pointnav_baseline_net_forward.6} parent=11 // pred_region
        _
      $region20: #{pointnav_baseline_net_forward.6} parent=11 // pred_fallthru
        _
    $region12: #{pointnav_baseline_net_forward.6} parent=5 // pred_fallthru
      _
    %p124 = scmp.lt.s32.totalorder %s9, 2
    // Predicated region
    $region21: #{pointnav_baseline_net_forward.6} parent=5 // pred_check
      %p125 = pneg %p124
    $region22: #{pointnav_baseline_net_forward.6} parent=5 // pred_check_branch
      %127 = sbr.rel (%p125) target = $region24
    $region23: #{pointnav_baseline_net_forward.6} parent=5 // pred_region
      // Predicated region
      $region25: #{pointnav_baseline_net_forward.6} parent=23 // pred_check
        %p128 = pneg %p29
      $region26: #{pointnav_baseline_net_forward.6} parent=23 // pred_check_branch
        %130 = sbr.rel (%p128) target = $region28
      $region27: #{pointnav_baseline_net_forward.6} parent=23 // pred_region
        %s131 = smul.u32 2, %s9
        %p132 = scmp.lt.s32.totalorder %s131, 3
        %s133 = scalar_select %p132, %s131, 3
        %s134 = smul.addr %s133, 5
        %s135 = smul.addr %s134, 4
        %s136 = scalar_lea.vmem %s0, %s135
        %s137 = smul.u32 2, %s9
      $region28: #{pointnav_baseline_net_forward.6} parent=23 // pred_fallthru
        _
    $region24: #{pointnav_baseline_net_forward.6} parent=5 // pred_fallthru
      _
    %p138 = scmp.le.s32.totalorder 1, %s9
    %p139 = scmp.lt.s32.totalorder %s9, 3
    %p140 = pnand %p138, %p139
    %p141 = pneg %p140
    // Predicated region
    $region29: #{pointnav_baseline_net_forward.6} parent=5 // pred_check
      _
    $region30: #{pointnav_baseline_net_forward.6} parent=5 // pred_check_branch
      %143 = sbr.rel (%p140) target = $region32
    $region31: #{pointnav_baseline_net_forward.6} parent=5 // pred_region
      %s144 = ssub.s32 %s9, 1
      %s145 = smul.u32 2, %s14
      %p146 = scmp.lt.s32.totalorder %s145, 3
      %s147 = scalar_select %p146, %s145, 3
      %s148 = smul.addr %s147, 5
      %s149 = smul.addr %s148, 4
      %s150 = scalar_lea.vmem %s0, %s149
      %p151 = pneg %p35
      %p152 = pneg %p32
      %p153 = pneg %p56
      %p154 = pneg %p53
      %p155 = pneg %p77
      %p156 = pneg %p74
      %p157 = pneg %p103
      %p158 = pneg %p100
      %s159 = smul.u32 2, %s14
      %p160 = scmp.lt.s32.totalorder %s159, 3
      %s161 = scalar_select %p160, %s159, 3
      %s162 = smul.addr %s161, 4
      %s163 = scalar_lea.vmem %s3, %s162
      %s164 = smul.u32 2, %s14
      %p165 = scmp.lt.s32.totalorder %s164, 3
      %s166 = scalar_select %p165, %s164, 3
      %s167 = smul.addr %s166, 5
      %s168 = smul.addr %s167, 4
      %s169 = scalar_lea.vmem %s0, %s168
      %s170 = smul.u32 2, %s14
      %s171 = smul.u32 2, %s14
      %p172 = scmp.lt.s32.totalorder %s171, 3
      %s173 = scalar_select %p172, %s171, 3
      %s174 = smul.addr %s173, 4
      %s175 = scalar_lea.vmem %s3, %s174
      %s176 = smul.u32 2, %s14
      %v178 = vld [vmem:[%s169] sm:$0xff]
      %v179 = vld [vmem:[%s169 + $0x8] sm:$0xff]
      %v180 = vld [vmem:[%s169 + $0x10] sm:$0xf]
      %v181 = vld [vmem:[%s169 + $0x14] sm:$0xff]
      %v182 = vld [vmem:[%s169 + $0x1c] sm:$0xff]
      %v183 = vld [vmem:[%s169 + $0x24] sm:$0xf]
      %v184 = vld [vmem:[%s1] sm:$0xf]
      %v185 = vld [vmem:[%s1 + $0x4] sm:$0xf]
      %v186 = vld [vmem:[%s1 + $0x8] sm:$0xf]
      %v187 = vld [vmem:[%s1 + $0xc] sm:$0xf]
      %v188 = vld [vmem:[%s1 + $0x10] sm:$0xf]
      %v189 = vld [vmem:[%s1 + $0x14] sm:$0xf]
      %v190 = vld [vmem:[%s1 + $0x18] sm:$0xf]
      %v191 = vld [vmem:[%s1 + $0x1c] sm:$0xf]
      %v192 = vld [vmem:[%s1 + $0x20] sm:$0xf]
      %v193 = vld [vmem:[%s1 + $0x24] sm:$0xf]
      %v194 = vld [vmem:[%s1 + $0x28] sm:$0xf]
      %v195 = vld [vmem:[%s1 + $0x2c] sm:$0xf]
      %v196 = vld [vmem:[%s1 + $0x30] sm:$0xf]
      %v197 = vld [vmem:[%s1 + $0x34] sm:$0xf]
      %v198 = vld [vmem:[%s1 + $0x38] sm:$0xf]
      %v199 = vld [vmem:[%s1 + $0x3c] sm:$0xf]
      %v200 = vld [vmem:[%s1 + $0x40] sm:$0xf]
      %v201 = vld [vmem:[%s1 + $0x44] sm:$0xf]
      %v202 = vld [vmem:[%s1 + $0x48] sm:$0xf]
      %v203 = vld [vmem:[%s1 + $0x4c] sm:$0xf]
      %v204 = vld [vmem:[%s1 + $0x50] sm:$0xf]
      %v205 = vld [vmem:[%s1 + $0x54] sm:$0xf]
      %v206 = vld [vmem:[%s1 + $0x58] sm:$0xf]
      %v207 = vld [vmem:[%s1 + $0x5c] sm:$0xf]
      %v208 = vld [vmem:[%s1 + $0x60] sm:$0xf]
      %v209 = vld [vmem:[%s1 + $0x64] sm:$0xf]
      %v210 = vld [vmem:[%s1 + $0x68] sm:$0xf]
      %v211 = vld [vmem:[%s1 + $0x6c] sm:$0xf]
      %v212 = vld [vmem:[%s1 + $0x70] sm:$0xf]
      %v213 = vld [vmem:[%s1 + $0x74] sm:$0xf]
      %v214 = vld [vmem:[%s1 + $0x78] sm:$0xf]
      %v215 = vld [vmem:[%s1 + $0x7c] sm:$0xf]
      %v216 = vld [vmem:[%s1 + $0x80] sm:$0xf]
      %v217 = vld [vmem:[%s1 + $0x84] sm:$0xf]
      %v218 = vld [vmem:[%s1 + $0x88] sm:$0xf]
      %v219 = vld [vmem:[%s1 + $0x8c] sm:$0xf]
      %v220 = vld [vmem:[%s1 + $0x90] sm:$0xf]
      %v221 = vld [vmem:[%s1 + $0x94] sm:$0xf]
      %v222 = vld [vmem:[%s1 + $0x98] sm:$0xf]
      %v223 = vld [vmem:[%s1 + $0x9c] sm:$0xf]
      %v224 = vld [vmem:[%s1 + $0xa0] sm:$0xf]
      %v225 = vld [vmem:[%s1 + $0xa4] sm:$0xf]
      %v226 = vld [vmem:[%s1 + $0xa8] sm:$0xf]
      %v227 = vld [vmem:[%s1 + $0xac] sm:$0xf]
      %v228 = vld [vmem:[%s1 + $0xb0] sm:$0xf]
      %v229 = vld [vmem:[%s1 + $0xb4] sm:$0xf]
      %v230 = vld [vmem:[%s1 + $0xb8] sm:$0xf]
      %v231 = vld [vmem:[%s1 + $0xbc] sm:$0xf]
      %v232 = vld [vmem:[%s1 + $0xc0] sm:$0xf]
      %v233 = vld [vmem:[%s1 + $0xc4] sm:$0xf]
      %v234 = vld [vmem:[%s1 + $0xc8] sm:$0xf]
      %v235 = vld [vmem:[%s1 + $0xcc] sm:$0xf]
      %v236 = vld [vmem:[%s1 + $0xd0] sm:$0xf]
      %v237 = vld [vmem:[%s1 + $0xd4] sm:$0xf]
      %v238 = vld [vmem:[%s1 + $0xd8] sm:$0xf]
      %v239 = vld [vmem:[%s1 + $0xdc] sm:$0xf]
      %v240 = vld [vmem:[%s1 + $0xe0] sm:$0xf]
      %v241 = vld [vmem:[%s1 + $0xe4] sm:$0xf]
      %v242 = vld [vmem:[%s1 + $0xe8] sm:$0xf]
      %v243 = vld [vmem:[%s1 + $0xec] sm:$0xf]
      %v244 = vld [vmem:[%s1 + $0xf0] sm:$0xf]
      %v245 = vld [vmem:[%s1 + $0xf4] sm:$0xf]
      %v246 = vld [vmem:[%s1 + $0xf8] sm:$0xf]
      %v247 = vld [vmem:[%s1 + $0xfc] sm:$0xf]
      %v248 = vld [vmem:[%s1 + $0x100] sm:$0xf]
      %v249 = vld [vmem:[%s1 + $0x104] sm:$0xf]
      %v250 = vld [vmem:[%s1 + $0x108] sm:$0xf]
      %v251 = vld [vmem:[%s1 + $0x10c] sm:$0xf]
      %v252 = vld [vmem:[%s1 + $0x110] sm:$0xf]
      %v253 = vld [vmem:[%s1 + $0x114] sm:$0xf]
      %v254 = vld [vmem:[%s1 + $0x118] sm:$0xf]
      %v255 = vld [vmem:[%s1 + $0x11c] sm:$0xf]
      %v256 = vld [vmem:[%s2] sm:$0x1]
      %v258 = vperm.slane %v256, 0
      %v266 = vunpack.c.l.b16 %v178
      %v267 = vunpack.c.h.b16 %v178
      %v268 = vunpack.c.l.b16 %v179
      %v269 = vunpack.c.h.b16 %v179
      %v270 = vunpack.c.l.b16 %v180
      %v271 = vunpack.c.l.b16 %v181
      %v272 = vunpack.c.h.b16 %v181
      %v273 = vunpack.c.l.b16 %v182
      %v274 = vunpack.c.h.b16 %v182
      %v275 = vunpack.c.l.b16 %v183
      %v276 = vpack.c.b16 %v271, %v266
      %v277 = vpack.c.b16 %v272, %v267
      %v278 = vpack.c.b16 %v273, %v268
      %v279 = vpack.c.b16 %v274, %v269
      %v280 = vpack.c.b16 %v275, %v270
      %v357 = vunpack.c.l.b16 %v184
      %v358 = vunpack.c.l.b16 %v185
      %v359 = vunpack.c.l.b16 %v186
      %v360 = vunpack.c.l.b16 %v187
      %v361 = vunpack.c.l.b16 %v188
      %v362 = vunpack.c.l.b16 %v189
      %v363 = vunpack.c.l.b16 %v190
      %v364 = vunpack.c.l.b16 %v191
      %v365 = vunpack.c.l.b16 %v192
      %v366 = vunpack.c.l.b16 %v193
      %v367 = vunpack.c.l.b16 %v194
      %v368 = vunpack.c.l.b16 %v195
      %v369 = vunpack.c.l.b16 %v196
      %v370 = vunpack.c.l.b16 %v197
      %v371 = vunpack.c.l.b16 %v198
      %v372 = vunpack.c.l.b16 %v199
      %v373 = vunpack.c.l.b16 %v200
      %v374 = vunpack.c.l.b16 %v201
      %v375 = vunpack.c.l.b16 %v202
      %v376 = vunpack.c.l.b16 %v203
      %v377 = vunpack.c.l.b16 %v204
      %v378 = vunpack.c.l.b16 %v205
      %v379 = vunpack.c.l.b16 %v206
      %v380 = vunpack.c.l.b16 %v207
      %v381 = vunpack.c.l.b16 %v208
      %v382 = vunpack.c.l.b16 %v209
      %v383 = vunpack.c.l.b16 %v210
      %v384 = vunpack.c.l.b16 %v211
      %v385 = vunpack.c.l.b16 %v212
      %v386 = vunpack.c.l.b16 %v213
      %v387 = vunpack.c.l.b16 %v214
      %v388 = vunpack.c.l.b16 %v215
      %v389 = vunpack.c.l.b16 %v216
      %v390 = vunpack.c.l.b16 %v217
      %v391 = vunpack.c.l.b16 %v218
      %v392 = vunpack.c.l.b16 %v219
      %v393 = vunpack.c.l.b16 %v220
      %v394 = vunpack.c.l.b16 %v221
      %v395 = vunpack.c.l.b16 %v222
      %v396 = vunpack.c.l.b16 %v223
      %v397 = vunpack.c.l.b16 %v224
      %v398 = vunpack.c.l.b16 %v225
      %v399 = vunpack.c.l.b16 %v226
      %v400 = vunpack.c.l.b16 %v227
      %v401 = vunpack.c.l.b16 %v228
      %v402 = vunpack.c.l.b16 %v229
      %v403 = vunpack.c.l.b16 %v230
      %v404 = vunpack.c.l.b16 %v231
      %v405 = vunpack.c.l.b16 %v232
      %v406 = vunpack.c.l.b16 %v233
      %v407 = vunpack.c.l.b16 %v234
      %v408 = vunpack.c.l.b16 %v235
      %v409 = vunpack.c.l.b16 %v236
      %v410 = vunpack.c.l.b16 %v237
      %v411 = vunpack.c.l.b16 %v238
      %v412 = vunpack.c.l.b16 %v239
      %v413 = vunpack.c.l.b16 %v240
      %v414 = vunpack.c.l.b16 %v241
      %v415 = vunpack.c.l.b16 %v242
      %v416 = vunpack.c.l.b16 %v243
      %v417 = vunpack.c.l.b16 %v244
      %v418 = vunpack.c.l.b16 %v245
      %v419 = vunpack.c.l.b16 %v246
      %v420 = vunpack.c.l.b16 %v247
      %v421 = vunpack.c.l.b16 %v248
      %v422 = vunpack.c.l.b16 %v249
      %v423 = vunpack.c.l.b16 %v250
      %v424 = vunpack.c.l.b16 %v251
      %v425 = vunpack.c.l.b16 %v252
      %v426 = vunpack.c.l.b16 %v253
      %v427 = vunpack.c.l.b16 %v254
      %v428 = vunpack.c.l.b16 %v255
      %v429 = vpack.c.b16 %v358, %v357
      %v430 = vpack.c.b16 %v360, %v359
      %v431 = vpack.c.b16 %v362, %v361
      %v432 = vpack.c.b16 %v364, %v363
      %v433 = vpack.c.b16 %v366, %v365
      %v434 = vpack.c.b16 %v368, %v367
      %v435 = vpack.c.b16 %v370, %v369
      %v436 = vpack.c.b16 %v372, %v371
      %v437 = vpack.c.b16 %v374, %v373
      %v438 = vpack.c.b16 %v376, %v375
      %v439 = vpack.c.b16 %v378, %v377
      %v440 = vpack.c.b16 %v380, %v379
      %v441 = vpack.c.b16 %v382, %v381
      %v442 = vpack.c.b16 %v384, %v383
      %v443 = vpack.c.b16 %v386, %v385
      %v444 = vpack.c.b16 %v388, %v387
      %v445 = vpack.c.b16 %v390, %v389
      %v446 = vpack.c.b16 %v392, %v391
      %v447 = vpack.c.b16 %v394, %v393
      %v448 = vpack.c.b16 %v396, %v395
      %v449 = vpack.c.b16 %v398, %v397
      %v450 = vpack.c.b16 %v400, %v399
      %v451 = vpack.c.b16 %v402, %v401
      %v452 = vpack.c.b16 %v404, %v403
      %v453 = vpack.c.b16 %v406, %v405
      %v454 = vpack.c.b16 %v408, %v407
      %v455 = vpack.c.b16 %v410, %v409
      %v456 = vpack.c.b16 %v412, %v411
      %v457 = vpack.c.b16 %v414, %v413
      %v458 = vpack.c.b16 %v416, %v415
      %v459 = vpack.c.b16 %v418, %v417
      %v460 = vpack.c.b16 %v420, %v419
      %v461 = vpack.c.b16 %v422, %v421
      %v462 = vpack.c.b16 %v424, %v423
      %v463 = vpack.c.b16 %v426, %v425
      %v464 = vpack.c.b16 %v428, %v427
      %vm501 = vcmask 523264
      %v503 = vsel %vm501, %v280, 0
      %505 = vmatpush.bf16.msra.mxu0 %v436
      %506 = vmatpush.bf16.msra.mxu0 %v435
      %507 = vmatpush.bf16.msra.mxu0 %v434
      %508 = vmatpush.bf16.msra.mxu0 %v433
      %509 = vmatpush.bf16.msra.mxu0 %v432
      %510 = vmatpush.bf16.msra.mxu0 %v431
      %511 = vmatpush.bf16.msra.mxu0 %v430
      %512 = vmatpush.bf16.msra.mxu0 %v429
      %513 = vmatmul.bf16.gmra.mxu0 %v276
      %v514 = vpop.f32.mrf.mxu0
      %v515 = vadd.f32 %v258, %v514
      %v516 = vpop.f32.mrf.mxu0
      %v517 = vadd.f32 %v258, %v516
      %518 = vdwg.mxu0
      %519 = vmatpush.bf16.msra.mxu0 %v444
      %520 = vmatpush.bf16.msra.mxu0 %v443
      %521 = vmatpush.bf16.msra.mxu0 %v442
      %522 = vmatpush.bf16.msra.mxu0 %v441
      %523 = vmatpush.bf16.msra.mxu0 %v440
      %524 = vmatpush.bf16.msra.mxu0 %v439
      %525 = vmatpush.bf16.msra.mxu0 %v438
      %526 = vmatpush.bf16.msra.mxu0 %v437
      %527 = vmatmul.bf16.gmra.mxu0 %v277
      %v528 = vpop.f32.mrf.mxu0
      %v529 = vadd.f32 %v515, %v528
      %v530 = vpop.f32.mrf.mxu0
      %v531 = vadd.f32 %v517, %v530
      %532 = vdwg.mxu0
      %533 = vmatpush.bf16.msra.mxu0 %v452
      %534 = vmatpush.bf16.msra.mxu0 %v451
      %535 = vmatpush.bf16.msra.mxu0 %v450
      %536 = vmatpush.bf16.msra.mxu0 %v449
      %537 = vmatpush.bf16.msra.mxu0 %v448
      %538 = vmatpush.bf16.msra.mxu0 %v447
      %539 = vmatpush.bf16.msra.mxu0 %v446
      %540 = vmatpush.bf16.msra.mxu0 %v445
      %541 = vmatmul.bf16.gmra.mxu0 %v278
      %v542 = vpop.f32.mrf.mxu0
      %v543 = vadd.f32 %v529, %v542
      %v544 = vpop.f32.mrf.mxu0
      %v545 = vadd.f32 %v531, %v544
      %546 = vdwg.mxu0
      %547 = vmatpush.bf16.msra.mxu0 %v460
      %548 = vmatpush.bf16.msra.mxu0 %v459
      %549 = vmatpush.bf16.msra.mxu0 %v458
      %550 = vmatpush.bf16.msra.mxu0 %v457
      %551 = vmatpush.bf16.msra.mxu0 %v456
      %552 = vmatpush.bf16.msra.mxu0 %v455
      %553 = vmatpush.bf16.msra.mxu0 %v454
      %554 = vmatpush.bf16.msra.mxu0 %v453
      %555 = vmatmul.bf16.gmra.mxu0 %v279
      %v556 = vpop.f32.mrf.mxu0
      %v557 = vadd.f32 %v543, %v556
      %v558 = vpop.f32.mrf.mxu0
      %v559 = vadd.f32 %v545, %v558
      %560 = vdwg.mxu0
      %561 = vmatpush.bf16.msra.mxu0 0
      %562 = vmatpush.bf16.msra.mxu0 0
      %563 = vmatpush.bf16.msra.mxu0 0
      %564 = vmatpush.bf16.msra.mxu0 0
      %565 = vmatpush.bf16.msra.mxu0 %v464
      %566 = vmatpush.bf16.msra.mxu0 %v463
      %567 = vmatpush.bf16.msra.mxu0 %v462
      %568 = vmatpush.bf16.msra.mxu0 %v461
      %569 = vmatmul.bf16.gmra.mxu0 %v503
      %v570 = vpop.f32.mrf.mxu0
      %v571 = vadd.f32 %v557, %v570
      %v572 = vpop.f32.mrf.mxu0
      %v573 = vadd.f32 %v559, %v572
      %574 = vdwg.mxu0
      %v575 = vpack.c.bf16 %v571, %v571
      %v576 = vpack.c.bf16 %v573, %v573
      %vm577 = vcmask 257024
      %578 = vst.msk [vmem:[%s175] sm:$0xf] %vm577, %v575
      %579 = vst.msk [vmem:[%s175 + $0x4] sm:$0xf] %vm577, %v576
      %s580 = smul.u32 2, %s14
      %p581 = scmp.lt.s32.totalorder %s580, 3
      %s582 = scalar_select %p581, %s580, 3
      %s583 = smul.addr %s582, 4
      %s584 = scalar_lea.vmem %s3, %s583
      // Predicated region
      $region33: #{pointnav_baseline_net_forward.6} parent=31 // pred_check
        %p585 = pneg %p100
      $region34: #{pointnav_baseline_net_forward.6} parent=31 // pred_check_branch
        %587 = sbr.rel (%p585) target = $region36
      $region35: #{pointnav_baseline_net_forward.6} parent=31 // pred_region
        %s588 = smul.u32 2, %s14
      $region36: #{pointnav_baseline_net_forward.6} parent=31 // pred_fallthru
        _
    $region32: #{pointnav_baseline_net_forward.6} parent=5 // pred_fallthru
      _
    %p589 = scmp.le.s32.totalorder 2, %s9
    // Predicated region
    $region37: #{pointnav_baseline_net_forward.6} parent=5 // pred_check
      %p590 = pneg %p589
    $region38: #{pointnav_baseline_net_forward.6} parent=5 // pred_check_branch
      %592 = sbr.rel (%p590) target = $region40
    $region39: #{pointnav_baseline_net_forward.6} parent=5 // pred_region
      %s593 = ssub.s32 %s9, 2
      // Predicated region
      $region41: #{pointnav_baseline_net_forward.6} parent=39 // pred_check
        %p594 = pneg %p106
      $region42: #{pointnav_baseline_net_forward.6} parent=39 // pred_check_branch
        %596 = sbr.rel (%p594) target = $region44
      $region43: #{pointnav_baseline_net_forward.6} parent=39 // pred_region
        %s597 = smul.u32 2, %s15
        %p598 = scmp.lt.s32.totalorder %s597, 3
        %s599 = scalar_select %p598, %s597, 3
        %s600 = smul.addr %s599, 4
        %s601 = scalar_lea.vmem %s3, %s600
      $region44: #{pointnav_baseline_net_forward.6} parent=39 // pred_fallthru
        _
    $region40: #{pointnav_baseline_net_forward.6} parent=5 // pred_fallthru
      _
  $region6: #{pointnav_baseline_net_forward.6} parent=0 // loop_footer
    %s13 = sadd.s32 1, %s9
  $region7: #{pointnav_baseline_net_forward.6} parent=0 // loop_footer_branch
    %8 = sbr.rel target = $region3
  $region8: #{pointnav_baseline_net_forward.6} parent=0 // loop_exit
    _

// kernel: pointnav_baseline_net_forward.7
$region0: #{pointnav_baseline_net_forward.7}
  #allocation0 [shape = 'u32[]', space=smem, size = 0x4, offset = 0x4, fixed_abs, tag = 'smem constant byte address 0x4 - core index']
  #allocation1 [shape = 'u32[72,128]{1,0:T(1,128)}', space=vmem, size = 0x9000, scoped, tag = 'internal scratch']
  %s0 = inlined_call_operand.vmem [shape: bf16[2,512], index: 0, kind: input, shape index: {}]
  %s1 = inlined_call_operand.vmem [shape: bf16[2,8], index: 1, kind: input, shape index: {}]
  %s2 = inlined_call_operand.vmem [shape: f32[2,1,32], index: 2, kind: input, shape index: {}, may-alias: {2,11}]
  %s3 = inlined_call_operand.vmem [shape: f32[2,1], index: 3, kind: input, shape index: {}]
  %s4 = inlined_call_operand.vmem [shape: bf16[512,32], index: 4, kind: input, shape index: {}]
  %s5 = inlined_call_operand.vmem [shape: f32[1,32], index: 5, kind: input, shape index: {}]
  %s6 = inlined_call_operand.vmem [shape: bf16[3,32,32], index: 6, kind: input, shape index: {}]
  %s7 = inlined_call_operand.vmem [shape: bf16[3,8,32], index: 7, kind: input, shape index: {}]
  %s8 = inlined_call_operand.vmem [shape: bf16[3,32,32], index: 8, kind: input, shape index: {}]
  %s9 = inlined_call_operand.vmem [shape: f32[3,1,32], index: 9, kind: input, shape index: {}]
  %s10 = inlined_call_operand.vmem [shape: f32[3,1,32], index: 10, kind: input, shape index: {}]
  %s11 = inlined_call_operand.vmem [shape: f32[2,1,32], index: 11, kind: output, shape index: {0}, may-alias: {2,11}]
  %s12 = inlined_call_operand.hbm [shape: f32[2,32], index: 12, kind: output, shape index: {1}]
  %13 = xla_tuple %s11, %s12
  %s14 = sld [smem:[#allocation0]]
  $region62: #{pointnav_baseline_net_forward.7} parent=0
    _
  %s16 = ssub.s32 1, %s14
  %s17 = scalar_select 0, %s16, %s14
  $region1: #{pointnav_baseline_net_forward.7} parent=0
    #allocation2 [shape = 'u8[1024]{0}', space=vmem, size = 0x400, scoped, tag = 'output window, operand 1, single buffered']
    #allocation3 [shape = 's32[1]{0}', space=sflag, size = 0x4, scoped, tag = 'scoped memory for pointnav_baseline_net_forward.7']
    %18 = vsyncpa [#allocation3], 0
    // Predicated region
    $region2: #{pointnav_baseline_net_forward.7} parent=1 // pred_check
      _
    $region3: #{pointnav_baseline_net_forward.7} parent=1 // pred_check_branch
      %20 = sbr.rel (0) target = $region5
    $region4: #{pointnav_baseline_net_forward.7} parent=1 // pred_region
      _
    $region5: #{pointnav_baseline_net_forward.7} parent=1 // pred_fallthru
      _
    // Predicated region
    $region6: #{pointnav_baseline_net_forward.7} parent=1 // pred_check
      _
    $region7: #{pointnav_baseline_net_forward.7} parent=1 // pred_check_branch
      %22 = sbr.rel (0) target = $region9
    $region8: #{pointnav_baseline_net_forward.7} parent=1 // pred_region
      _
    $region9: #{pointnav_baseline_net_forward.7} parent=1 // pred_fallthru
      _
    // Predicated region
    $region10: #{pointnav_baseline_net_forward.7} parent=1 // pred_check
      _
    $region11: #{pointnav_baseline_net_forward.7} parent=1 // pred_check_branch
      %24 = sbr.rel (0) target = $region13
    $region12: #{pointnav_baseline_net_forward.7} parent=1 // pred_region
      _
    $region13: #{pointnav_baseline_net_forward.7} parent=1 // pred_fallthru
      _
    // Predicated region
    $region14: #{pointnav_baseline_net_forward.7} parent=1 // pred_check
      _
    $region15: #{pointnav_baseline_net_forward.7} parent=1 // pred_check_branch
      %26 = sbr.rel (0) target = $region17
    $region16: #{pointnav_baseline_net_forward.7} parent=1 // pred_region
      _
    $region17: #{pointnav_baseline_net_forward.7} parent=1 // pred_fallthru
      _
    // Predicated region
    $region18: #{pointnav_baseline_net_forward.7} parent=1 // pred_check
      _
    $region19: #{pointnav_baseline_net_forward.7} parent=1 // pred_check_branch
      %28 = sbr.rel (0) target = $region21
    $region20: #{pointnav_baseline_net_forward.7} parent=1 // pred_region
      _
    $region21: #{pointnav_baseline_net_forward.7} parent=1 // pred_fallthru
      _
    // Predicated region
    $region22: #{pointnav_baseline_net_forward.7} parent=1 // pred_check
      _
    $region23: #{pointnav_baseline_net_forward.7} parent=1 // pred_check_branch
      %30 = sbr.rel (0) target = $region25
    $region24: #{pointnav_baseline_net_forward.7} parent=1 // pred_region
      _
    $region25: #{pointnav_baseline_net_forward.7} parent=1 // pred_fallthru
      _
    // Predicated region
    $region26: #{pointnav_baseline_net_forward.7} parent=1 // pred_check
      _
    $region27: #{pointnav_baseline_net_forward.7} parent=1 // pred_check_branch
      %32 = sbr.rel (0) target = $region29
    $region28: #{pointnav_baseline_net_forward.7} parent=1 // pred_region
      _
    $region29: #{pointnav_baseline_net_forward.7} parent=1 // pred_fallthru
      _
    // Predicated region
    $region30: #{pointnav_baseline_net_forward.7} parent=1 // pred_check
      _
    $region31: #{pointnav_baseline_net_forward.7} parent=1 // pred_check_branch
      %34 = sbr.rel (0) target = $region33
    $region32: #{pointnav_baseline_net_forward.7} parent=1 // pred_region
      _
    $region33: #{pointnav_baseline_net_forward.7} parent=1 // pred_fallthru
      _
    // Predicated region
    $region34: #{pointnav_baseline_net_forward.7} parent=1 // pred_check
      _
    $region35: #{pointnav_baseline_net_forward.7} parent=1 // pred_check_branch
      %36 = sbr.rel (0) target = $region37
    $region36: #{pointnav_baseline_net_forward.7} parent=1 // pred_region
      _
    $region37: #{pointnav_baseline_net_forward.7} parent=1 // pred_fallthru
      _
    // Predicated region
    $region38: #{pointnav_baseline_net_forward.7} parent=1 // pred_check
      _
    $region39: #{pointnav_baseline_net_forward.7} parent=1 // pred_check_branch
      %38 = sbr.rel (0) target = $region41
    $region40: #{pointnav_baseline_net_forward.7} parent=1 // pred_region
      _
    $region41: #{pointnav_baseline_net_forward.7} parent=1 // pred_fallthru
      _
    // Predicated region
    $region42: #{pointnav_baseline_net_forward.7} parent=1 // pred_check
      _
    $region43: #{pointnav_baseline_net_forward.7} parent=1 // pred_check_branch
      %40 = sbr.rel (0) target = $region45
    $region44: #{pointnav_baseline_net_forward.7} parent=1 // pred_region
      _
    $region45: #{pointnav_baseline_net_forward.7} parent=1 // pred_fallthru
      _
    %v42 = vld [vmem:[%s0] sm:$0xf]
    %v43 = vld [vmem:[%s4] sm:$0xf]
    %v44 = vld [vmem:[%s4 + $0x4] sm:$0xf]
    %v45 = vld [vmem:[%s4 + $0x8] sm:$0xf]
    %v46 = vld [vmem:[%s4 + $0xc] sm:$0xf]
    %v47 = vld [vmem:[%s4 + $0x10] sm:$0xf]
    %v48 = vld [vmem:[%s4 + $0x14] sm:$0xf]
    %v49 = vld [vmem:[%s4 + $0x18] sm:$0xf]
    %v50 = vld [vmem:[%s4 + $0x1c] sm:$0xf]
    %v51 = vld [vmem:[%s4 + $0x20] sm:$0xf]
    %v52 = vld [vmem:[%s4 + $0x24] sm:$0xf]
    %v53 = vld [vmem:[%s4 + $0x28] sm:$0xf]
    %v54 = vld [vmem:[%s4 + $0x2c] sm:$0xf]
    %v55 = vld [vmem:[%s4 + $0x30] sm:$0xf]
    %v56 = vld [vmem:[%s4 + $0x34] sm:$0xf]
    %v57 = vld [vmem:[%s4 + $0x38] sm:$0xf]
    %v58 = vld [vmem:[%s4 + $0x3c] sm:$0xf]
    %v59 = vld [vmem:[%s4 + $0x40] sm:$0xf]
    %v60 = vld [vmem:[%s4 + $0x44] sm:$0xf]
    %v61 = vld [vmem:[%s4 + $0x48] sm:$0xf]
    %v62 = vld [vmem:[%s4 + $0x4c] sm:$0xf]
    %v63 = vld [vmem:[%s4 + $0x50] sm:$0xf]
    %v64 = vld [vmem:[%s4 + $0x54] sm:$0xf]
    %v65 = vld [vmem:[%s4 + $0x58] sm:$0xf]
    %v66 = vld [vmem:[%s4 + $0x5c] sm:$0xf]
    %v67 = vld [vmem:[%s4 + $0x60] sm:$0xf]
    %v68 = vld [vmem:[%s4 + $0x64] sm:$0xf]
    %v69 = vld [vmem:[%s4 + $0x68] sm:$0xf]
    %v70 = vld [vmem:[%s4 + $0x6c] sm:$0xf]
    %v71 = vld [vmem:[%s4 + $0x70] sm:$0xf]
    %v72 = vld [vmem:[%s4 + $0x74] sm:$0xf]
    %v73 = vld [vmem:[%s4 + $0x78] sm:$0xf]
    %v74 = vld [vmem:[%s4 + $0x7c] sm:$0xf]
    %v75 = vld [vmem:[%s4 + $0x80] sm:$0xf]
    %v76 = vld [vmem:[%s4 + $0x84] sm:$0xf]
    %v77 = vld [vmem:[%s4 + $0x88] sm:$0xf]
    %v78 = vld [vmem:[%s4 + $0x8c] sm:$0xf]
    %v79 = vld [vmem:[%s4 + $0x90] sm:$0xf]
    %v80 = vld [vmem:[%s4 + $0x94] sm:$0xf]
    %v81 = vld [vmem:[%s4 + $0x98] sm:$0xf]
    %v82 = vld [vmem:[%s4 + $0x9c] sm:$0xf]
    %v83 = vld [vmem:[%s4 + $0xa0] sm:$0xf]
    %v84 = vld [vmem:[%s4 + $0xa4] sm:$0xf]
    %v85 = vld [vmem:[%s4 + $0xa8] sm:$0xf]
    %v86 = vld [vmem:[%s4 + $0xac] sm:$0xf]
    %v87 = vld [vmem:[%s4 + $0xb0] sm:$0xf]
    %v88 = vld [vmem:[%s4 + $0xb4] sm:$0xf]
    %v89 = vld [vmem:[%s4 + $0xb8] sm:$0xf]
    %v90 = vld [vmem:[%s4 + $0xbc] sm:$0xf]
    %v91 = vld [vmem:[%s4 + $0xc0] sm:$0xf]
    %v92 = vld [vmem:[%s4 + $0xc4] sm:$0xf]
    %v93 = vld [vmem:[%s4 + $0xc8] sm:$0xf]
    %v94 = vld [vmem:[%s4 + $0xcc] sm:$0xf]
    %v95 = vld [vmem:[%s4 + $0xd0] sm:$0xf]
    %v96 = vld [vmem:[%s4 + $0xd4] sm:$0xf]
    %v97 = vld [vmem:[%s4 + $0xd8] sm:$0xf]
    %v98 = vld [vmem:[%s4 + $0xdc] sm:$0xf]
    %v99 = vld [vmem:[%s4 + $0xe0] sm:$0xf]
    %v100 = vld [vmem:[%s4 + $0xe4] sm:$0xf]
    %v101 = vld [vmem:[%s4 + $0xe8] sm:$0xf]
    %v102 = vld [vmem:[%s4 + $0xec] sm:$0xf]
    %v103 = vld [vmem:[%s4 + $0xf0] sm:$0xf]
    %v104 = vld [vmem:[%s4 + $0xf4] sm:$0xf]
    %v105 = vld [vmem:[%s4 + $0xf8] sm:$0xf]
    %v106 = vld [vmem:[%s4 + $0xfc] sm:$0xf]
    %v107 = vld [vmem:[%s5] sm:$0x1]
    %v109 = vperm.slane %v107, 0
    %112 = vst [vmem:[#allocation1] ss:$9 sm:$0xff] %v42
    %v113 = vld [vmem:[#allocation1] sm:$0xff]
    %v114 = vld [vmem:[#allocation1 + $0x9] sm:$0xff]
    %v115 = vld [vmem:[#allocation1 + $0x12] sm:$0xff]
    %v116 = vld [vmem:[#allocation1 + $0x1b] sm:$0xff]
    %v185 = vunpack.c.l.b16 %v43
    %v186 = vunpack.c.l.b16 %v44
    %v187 = vunpack.c.l.b16 %v45
    %v188 = vunpack.c.l.b16 %v46
    %v189 = vunpack.c.l.b16 %v47
    %v190 = vunpack.c.l.b16 %v48
    %v191 = vunpack.c.l.b16 %v49
    %v192 = vunpack.c.l.b16 %v50
    %v193 = vunpack.c.l.b16 %v51
    %v194 = vunpack.c.l.b16 %v52
    %v195 = vunpack.c.l.b16 %v53
    %v196 = vunpack.c.l.b16 %v54
    %v197 = vunpack.c.l.b16 %v55
    %v198 = vunpack.c.l.b16 %v56
    %v199 = vunpack.c.l.b16 %v57
    %v200 = vunpack.c.l.b16 %v58
    %v201 = vunpack.c.l.b16 %v59
    %v202 = vunpack.c.l.b16 %v60
    %v203 = vunpack.c.l.b16 %v61
    %v204 = vunpack.c.l.b16 %v62
    %v205 = vunpack.c.l.b16 %v63
    %v206 = vunpack.c.l.b16 %v64
    %v207 = vunpack.c.l.b16 %v65
    %v208 = vunpack.c.l.b16 %v66
    %v209 = vunpack.c.l.b16 %v67
    %v210 = vunpack.c.l.b16 %v68
    %v211 = vunpack.c.l.b16 %v69
    %v212 = vunpack.c.l.b16 %v70
    %v213 = vunpack.c.l.b16 %v71
    %v214 = vunpack.c.l.b16 %v72
    %v215 = vunpack.c.l.b16 %v73
    %v216 = vunpack.c.l.b16 %v74
    %v217 = vunpack.c.l.b16 %v75
    %v218 = vunpack.c.l.b16 %v76
    %v219 = vunpack.c.l.b16 %v77
    %v220 = vunpack.c.l.b16 %v78
    %v221 = vunpack.c.l.b16 %v79
    %v222 = vunpack.c.l.b16 %v80
    %v223 = vunpack.c.l.b16 %v81
    %v224 = vunpack.c.l.b16 %v82
    %v225 = vunpack.c.l.b16 %v83
    %v226 = vunpack.c.l.b16 %v84
    %v227 = vunpack.c.l.b16 %v85
    %v228 = vunpack.c.l.b16 %v86
    %v229 = vunpack.c.l.b16 %v87
    %v230 = vunpack.c.l.b16 %v88
    %v231 = vunpack.c.l.b16 %v89
    %v232 = vunpack.c.l.b16 %v90
    %v233 = vunpack.c.l.b16 %v91
    %v234 = vunpack.c.l.b16 %v92
    %v235 = vunpack.c.l.b16 %v93
    %v236 = vunpack.c.l.b16 %v94
    %v237 = vunpack.c.l.b16 %v95
    %v238 = vunpack.c.l.b16 %v96
    %v239 = vunpack.c.l.b16 %v97
    %v240 = vunpack.c.l.b16 %v98
    %v241 = vunpack.c.l.b16 %v99
    %v242 = vunpack.c.l.b16 %v100
    %v243 = vunpack.c.l.b16 %v101
    %v244 = vunpack.c.l.b16 %v102
    %v245 = vunpack.c.l.b16 %v103
    %v246 = vunpack.c.l.b16 %v104
    %v247 = vunpack.c.l.b16 %v105
    %v248 = vunpack.c.l.b16 %v106
    %v249 = vpack.c.b16 %v186, %v185
    %v250 = vpack.c.b16 %v188, %v187
    %v251 = vpack.c.b16 %v190, %v189
    %v252 = vpack.c.b16 %v192, %v191
    %v253 = vpack.c.b16 %v194, %v193
    %v254 = vpack.c.b16 %v196, %v195
    %v255 = vpack.c.b16 %v198, %v197
    %v256 = vpack.c.b16 %v200, %v199
    %v257 = vpack.c.b16 %v202, %v201
    %v258 = vpack.c.b16 %v204, %v203
    %v259 = vpack.c.b16 %v206, %v205
    %v260 = vpack.c.b16 %v208, %v207
    %v261 = vpack.c.b16 %v210, %v209
    %v262 = vpack.c.b16 %v212, %v211
    %v263 = vpack.c.b16 %v214, %v213
    %v264 = vpack.c.b16 %v216, %v215
    %v265 = vpack.c.b16 %v218, %v217
    %v266 = vpack.c.b16 %v220, %v219
    %v267 = vpack.c.b16 %v222, %v221
    %v268 = vpack.c.b16 %v224, %v223
    %v269 = vpack.c.b16 %v226, %v225
    %v270 = vpack.c.b16 %v228, %v227
    %v271 = vpack.c.b16 %v230, %v229
    %v272 = vpack.c.b16 %v232, %v231
    %v273 = vpack.c.b16 %v234, %v233
    %v274 = vpack.c.b16 %v236, %v235
    %v275 = vpack.c.b16 %v238, %v237
    %v276 = vpack.c.b16 %v240, %v239
    %v277 = vpack.c.b16 %v242, %v241
    %v278 = vpack.c.b16 %v244, %v243
    %v279 = vpack.c.b16 %v246, %v245
    %v280 = vpack.c.b16 %v248, %v247
    %313 = vmatpush.bf16.msra.mxu0 %v256
    %314 = vmatpush.bf16.msra.mxu0 %v255
    %315 = vmatpush.bf16.msra.mxu0 %v254
    %316 = vmatpush.bf16.msra.mxu0 %v253
    %317 = vmatpush.bf16.msra.mxu0 %v252
    %318 = vmatpush.bf16.msra.mxu0 %v251
    %319 = vmatpush.bf16.msra.mxu0 %v250
    %320 = vmatpush.bf16.msra.mxu0 %v249
    %321 = vmatmul.bf16.gmra.mxu0 %v113
    %v322 = vpop.f32.mrf.mxu0
    %v323 = vadd.f32 %v109, %v322
    %v324 = vpop.f32.mrf.mxu0
    %325 = vdwg.mxu0
    %326 = vmatpush.bf16.msra.mxu0 %v264
    %327 = vmatpush.bf16.msra.mxu0 %v263
    %328 = vmatpush.bf16.msra.mxu0 %v262
    %329 = vmatpush.bf16.msra.mxu0 %v261
    %330 = vmatpush.bf16.msra.mxu0 %v260
    %331 = vmatpush.bf16.msra.mxu0 %v259
    %332 = vmatpush.bf16.msra.mxu0 %v258
    %333 = vmatpush.bf16.msra.mxu0 %v257
    %334 = vmatmul.bf16.gmra.mxu0 %v114
    %v335 = vpop.f32.mrf.mxu0
    %v336 = vadd.f32 %v323, %v335
    %v337 = vpop.f32.mrf.mxu0
    %338 = vdwg.mxu0
    %339 = vmatpush.bf16.msra.mxu0 %v272
    %340 = vmatpush.bf16.msra.mxu0 %v271
    %341 = vmatpush.bf16.msra.mxu0 %v270
    %342 = vmatpush.bf16.msra.mxu0 %v269
    %343 = vmatpush.bf16.msra.mxu0 %v268
    %344 = vmatpush.bf16.msra.mxu0 %v267
    %345 = vmatpush.bf16.msra.mxu0 %v266
    %346 = vmatpush.bf16.msra.mxu0 %v265
    %347 = vmatmul.bf16.gmra.mxu0 %v115
    %v348 = vpop.f32.mrf.mxu0
    %v349 = vadd.f32 %v336, %v348
    %v350 = vpop.f32.mrf.mxu0
    %351 = vdwg.mxu0
    %352 = vmatpush.bf16.msra.mxu0 %v280
    %353 = vmatpush.bf16.msra.mxu0 %v279
    %354 = vmatpush.bf16.msra.mxu0 %v278
    %355 = vmatpush.bf16.msra.mxu0 %v277
    %356 = vmatpush.bf16.msra.mxu0 %v276
    %357 = vmatpush.bf16.msra.mxu0 %v275
    %358 = vmatpush.bf16.msra.mxu0 %v274
    %359 = vmatpush.bf16.msra.mxu0 %v273
    %360 = vmatmul.bf16.gmra.mxu0 %v116
    %v361 = vpop.f32.mrf.mxu0
    %v362 = vadd.f32 %v349, %v361
    %v363 = vpop.f32.mrf.mxu0
    %364 = vdwg.mxu0
    %v365 = vmax.f32 %v362, 0.0
    %vm366 = vcmask 254976
    %367 = vst.msk [vmem:[#allocation2] sm:$0x3] %vm366, %v365
    %v368 = vld [vmem:[%s2] sm:$0x1]
    %v369 = vld [vmem:[%s2 + $0x1] sm:$0x1]
    %v370 = vld [vmem:[%s3] sm:$0x3]
    %372 = vset.pattern.permute.xlu0 0
    %373 = vperm.xlu0 %372, %v370
    %v374 = vpop.permute.xlu0 %373
    %v375 = vperm.slane %v374, 0
    %v376 = vperm.slane %v374, 1
    %v379 = vmul.f32 %v368, %v375
    %v380 = vmul.f32 %v369, %v376
    %v381 = vpack.c.bf16 %v365, %v365
    %v382 = vpack.c.bf16 %v379, %v379
    %v383 = vpack.c.bf16 %v380, %v380
    %v384 = vld [vmem:[%s1] sm:$0x1]
    %v385 = vld [vmem:[%s6] sm:$0xf]
    %v386 = vld [vmem:[%s6 + $0x4] sm:$0xf]
    %v387 = vld [vmem:[%s6 + $0x8] sm:$0xf]
    %v388 = vld [vmem:[%s6 + $0xc] sm:$0xf]
    %v389 = vld [vmem:[%s7] sm:$0xf]
    %vm390 = vcmask 64512
    %v392 = vsel %vm390, %v384, 0
    %vm394 = vcmask 1043456
    %v396 = vsel %vm394, %v389, 0
    %398 = vmatpush.bf16.msra.mxu0 0
    %399 = vmatpush.bf16.msra.mxu0 0
    %400 = vmatpush.bf16.msra.mxu0 0
    %401 = vmatpush.bf16.msra.mxu0 0
    %402 = vmatpush.bf16.msra.mxu0 0
    %403 = vmatpush.bf16.msra.mxu0 0
    %404 = vmatpush.bf16.msra.mxu0 0
    %405 = vmatpush.bf16.msra.mxu0 %v396
    %406 = vmatmul.bf16.gmra.mxu0 %v392
    %v407 = vpop.f32.mrf.mxu0
    %v408 = vadd.f32 0.0, %v407
    %v409 = vpop.f32.mrf.mxu0
    %410 = vdwg.mxu0
    %v415 = vunpack.c.l.b16 %v385
    %v416 = vunpack.c.l.b16 %v386
    %v417 = vunpack.c.l.b16 %v387
    %v418 = vunpack.c.l.b16 %v388
    %v419 = vpack.c.b16 %v416, %v415
    %v420 = vpack.c.b16 %v418, %v417
    %vm423 = vcmask 261120
    %v425 = vsel %vm423, %v381, 0
    %427 = vmatpush.bf16.msra.mxu0 0
    %428 = vmatpush.bf16.msra.mxu0 0
    %429 = vmatpush.bf16.msra.mxu0 0
    %430 = vmatpush.bf16.msra.mxu0 0
    %431 = vmatpush.bf16.msra.mxu0 0
    %432 = vmatpush.bf16.msra.mxu0 0
    %433 = vmatpush.bf16.msra.mxu0 %v420
    %434 = vmatpush.bf16.msra.mxu0 %v419
    %435 = vmatmul.bf16.gmra.mxu0 %v425
    %v436 = vpop.f32.mrf.mxu0
    %v437 = vadd.f32 %v408, %v436
    %v438 = vpop.f32.mrf.mxu0
    %439 = vdwg.mxu0
    %v440 = vld [vmem:[%s9] sm:$0x1]
    %v442 = vperm.slane %v440, 0
    %v444 = vadd.f32 %v437, %v442
    %v445 = vld [vmem:[%s8] sm:$0xf]
    %v446 = vld [vmem:[%s8 + $0x4] sm:$0xf]
    %v447 = vld [vmem:[%s8 + $0x8] sm:$0xf]
    %v448 = vld [vmem:[%s8 + $0xc] sm:$0xf]
    %v449 = vld [vmem:[%s10] sm:$0x1]
    %v451 = vperm.slane %v449, 0
    %v455 = vunpack.c.l.b16 %v382
    %v456 = vunpack.c.l.b16 %v383
    %v457 = vrot.slane %v456, 7
    %vm458 = vcmask 1041409
    %v459 = vsel %vm458, %v457, %v455
    %v460 = vpack.c.b16 %v459, %v459
    %v465 = vunpack.c.l.b16 %v445
    %v466 = vunpack.c.l.b16 %v446
    %v467 = vunpack.c.l.b16 %v447
    %v468 = vunpack.c.l.b16 %v448
    %v469 = vpack.c.b16 %v466, %v465
    %v470 = vpack.c.b16 %v468, %v467
    %v474 = vsel %vm423, %v460, 0
    %476 = vmatpush.bf16.msra.mxu0 0
    %477 = vmatpush.bf16.msra.mxu0 0
    %478 = vmatpush.bf16.msra.mxu0 0
    %479 = vmatpush.bf16.msra.mxu0 0
    %480 = vmatpush.bf16.msra.mxu0 0
    %481 = vmatpush.bf16.msra.mxu0 0
    %482 = vmatpush.bf16.msra.mxu0 %v470
    %483 = vmatpush.bf16.msra.mxu0 %v469
    %484 = vmatmul.bf16.gmra.mxu0 %v474
    %v485 = vpop.f32.mrf.mxu0
    %v486 = vadd.f32 %v451, %v485
    %v487 = vpop.f32.mrf.mxu0
    %488 = vdwg.mxu0
    %s489 = scalar_lea.vmem %s6, 16
    %v490 = vld [vmem:[%s489] sm:$0xf]
    %v491 = vld [vmem:[%s489 + $0x4] sm:$0xf]
    %v492 = vld [vmem:[%s489 + $0x8] sm:$0xf]
    %v493 = vld [vmem:[%s489 + $0xc] sm:$0xf]
    %s494 = scalar_lea.vmem %s7, 4
    %v495 = vld [vmem:[%s494] sm:$0xf]
    %v497 = vsel %vm394, %v495, 0
    %499 = vmatpush.bf16.msra.mxu0 0
    %500 = vmatpush.bf16.msra.mxu0 0
    %501 = vmatpush.bf16.msra.mxu0 0
    %502 = vmatpush.bf16.msra.mxu0 0
    %503 = vmatpush.bf16.msra.mxu0 0
    %504 = vmatpush.bf16.msra.mxu0 0
    %505 = vmatpush.bf16.msra.mxu0 0
    %506 = vmatpush.bf16.msra.mxu0 %v497
    %507 = vmatmul.bf16.gmra.mxu0 %v392
    %v508 = vpop.f32.mrf.mxu0
    %v509 = vadd.f32 0.0, %v508
    %v510 = vpop.f32.mrf.mxu0
    %511 = vdwg.mxu0
    %v516 = vunpack.c.l.b16 %v490
    %v517 = vunpack.c.l.b16 %v491
    %v518 = vunpack.c.l.b16 %v492
    %v519 = vunpack.c.l.b16 %v493
    %v520 = vpack.c.b16 %v517, %v516
    %v521 = vpack.c.b16 %v519, %v518
    %524 = vmatpush.bf16.msra.mxu0 0
    %525 = vmatpush.bf16.msra.mxu0 0
    %526 = vmatpush.bf16.msra.mxu0 0
    %527 = vmatpush.bf16.msra.mxu0 0
    %528 = vmatpush.bf16.msra.mxu0 0
    %529 = vmatpush.bf16.msra.mxu0 0
    %530 = vmatpush.bf16.msra.mxu0 %v521
    %531 = vmatpush.bf16.msra.mxu0 %v520
    %532 = vmatmul.bf16.gmra.mxu0 %v425
    %v533 = vpop.f32.mrf.mxu0
    %v534 = vadd.f32 %v509, %v533
    %v535 = vpop.f32.mrf.mxu0
    %536 = vdwg.mxu0
    %s537 = scalar_lea.vmem %s9, 1
    %v538 = vld [vmem:[%s537] sm:$0x1]
    %v540 = vperm.slane %v538, 0
    %v542 = vadd.f32 %v534, %v540
    %s543 = scalar_lea.vmem %s8, 16
    %v544 = vld [vmem:[%s543] sm:$0xf]
    %v545 = vld [vmem:[%s543 + $0x4] sm:$0xf]
    %v546 = vld [vmem:[%s543 + $0x8] sm:$0xf]
    %v547 = vld [vmem:[%s543 + $0xc] sm:$0xf]
    %s548 = scalar_lea.vmem %s10, 1
    %v549 = vld [vmem:[%s548] sm:$0x1]
    %v551 = vperm.slane %v549, 0
    %v557 = vunpack.c.l.b16 %v544
    %v558 = vunpack.c.l.b16 %v545
    %v559 = vunpack.c.l.b16 %v546
    %v560 = vunpack.c.l.b16 %v547
    %v561 = vpack.c.b16 %v558, %v557
    %v562 = vpack.c.b16 %v560, %v559
    %565 = vmatpush.bf16.msra.mxu0 0
    %566 = vmatpush.bf16.msra.mxu0 0
    %567 = vmatpush.bf16.msra.mxu0 0
    %568 = vmatpush.bf16.msra.mxu0 0
    %569 = vmatpush.bf16.msra.mxu0 0
    %570 = vmatpush.bf16.msra.mxu0 0
    %571 = vmatpush.bf16.msra.mxu0 %v562
    %572 = vmatpush.bf16.msra.mxu0 %v561
    %573 = vmatmul.bf16.gmra.mxu0 %v474
    %v574 = vpop.f32.mrf.mxu0
    %v575 = vadd.f32 %v551, %v574
    %v576 = vpop.f32.mrf.mxu0
    %577 = vdwg.mxu0
    %s578 = scalar_lea.vmem %s6, 32
    %v579 = vld [vmem:[%s578] sm:$0xf]
    %v580 = vld [vmem:[%s578 + $0x4] sm:$0xf]
    %v581 = vld [vmem:[%s578 + $0x8] sm:$0xf]
    %v582 = vld [vmem:[%s578 + $0xc] sm:$0xf]
    %s583 = scalar_lea.vmem %s7, 8
    %v584 = vld [vmem:[%s583] sm:$0xf]
    %v586 = vsel %vm394, %v584, 0
    %588 = vmatpush.bf16.msra.mxu0 0
    %589 = vmatpush.bf16.msra.mxu0 0
    %590 = vmatpush.bf16.msra.mxu0 0
    %591 = vmatpush.bf16.msra.mxu0 0
    %592 = vmatpush.bf16.msra.mxu0 0
    %593 = vmatpush.bf16.msra.mxu0 0
    %594 = vmatpush.bf16.msra.mxu0 0
    %595 = vmatpush.bf16.msra.mxu0 %v586
    %596 = vmatmul.bf16.gmra.mxu0 %v392
    %v597 = vpop.f32.mrf.mxu0
    %v598 = vadd.f32 0.0, %v597
    %v599 = vpop.f32.mrf.mxu0
    %600 = vdwg.mxu0
    %v605 = vunpack.c.l.b16 %v579
    %v606 = vunpack.c.l.b16 %v580
    %v607 = vunpack.c.l.b16 %v581
    %v608 = vunpack.c.l.b16 %v582
    %v609 = vpack.c.b16 %v606, %v605
    %v610 = vpack.c.b16 %v608, %v607
    %613 = vmatpush.bf16.msra.mxu0 0
    %614 = vmatpush.bf16.msra.mxu0 0
    %615 = vmatpush.bf16.msra.mxu0 0
    %616 = vmatpush.bf16.msra.mxu0 0
    %617 = vmatpush.bf16.msra.mxu0 0
    %618 = vmatpush.bf16.msra.mxu0 0
    %619 = vmatpush.bf16.msra.mxu0 %v610
    %620 = vmatpush.bf16.msra.mxu0 %v609
    %621 = vmatmul.bf16.gmra.mxu0 %v425
    %v622 = vpop.f32.mrf.mxu0
    %v623 = vadd.f32 %v598, %v622
    %v624 = vpop.f32.mrf.mxu0
    %625 = vdwg.mxu0
    %s626 = scalar_lea.vmem %s9, 2
    %v627 = vld [vmem:[%s626] sm:$0x1]
    %v629 = vperm.slane %v627, 0
    %v631 = vadd.f32 %v623, %v629
    %s632 = scalar_lea.vmem %s8, 32
    %v633 = vld [vmem:[%s632] sm:$0xf]
    %v634 = vld [vmem:[%s632 + $0x4] sm:$0xf]
    %v635 = vld [vmem:[%s632 + $0x8] sm:$0xf]
    %v636 = vld [vmem:[%s632 + $0xc] sm:$0xf]
    %s637 = scalar_lea.vmem %s10, 2
    %v638 = vld [vmem:[%s637] sm:$0x1]
    %v640 = vperm.slane %v638, 0
    %v646 = vunpack.c.l.b16 %v633
    %v647 = vunpack.c.l.b16 %v634
    %v648 = vunpack.c.l.b16 %v635
    %v649 = vunpack.c.l.b16 %v636
    %v650 = vpack.c.b16 %v647, %v646
    %v651 = vpack.c.b16 %v649, %v648
    %654 = vmatpush.bf16.msra.mxu0 0
    %655 = vmatpush.bf16.msra.mxu0 0
    %656 = vmatpush.bf16.msra.mxu0 0
    %657 = vmatpush.bf16.msra.mxu0 0
    %658 = vmatpush.bf16.msra.mxu0 0
    %659 = vmatpush.bf16.msra.mxu0 0
    %660 = vmatpush.bf16.msra.mxu0 %v651
    %661 = vmatpush.bf16.msra.mxu0 %v650
    %662 = vmatmul.bf16.gmra.mxu0 %v474
    %v663 = vpop.f32.mrf.mxu0
    %v664 = vadd.f32 %v640, %v663
    %v665 = vpop.f32.mrf.mxu0
    %666 = vdwg.mxu0
    %v667 = vadd.f32 %v444, %v486
    %v668 = vxor.u32 %v667, 2147483648
    %v669 = vmul.f32 %v668, 1.442695
    %v670 = vpow.pop %v669
    %v671 = vadd.f32 %v670, 1.0
    %v672 = vrcp.pop %v671
    %v673 = vmul.f32 %v671, %v672
    %v674 = vsub.f32 1.0, %v673
    %v675 = vmul.f32 %v672, %v674
    %v676 = vadd.f32 %v672, %v675
    %vm677 = vweird.f32 %v671
    %vm678 = vweird.f32 %v672
    %vm679 = vmor %vm677, %vm678
    %v680 = vsel %vm679, %v672, %v676
    %v681 = vand.u32 2147483647, %v671
    %vm682 = vcmp.eq.f32.partialorder %v681, 8.507059e+37
    %v683 = vand.u32 %v671, 2147483648
    %v684 = vor.u32 1.1754944e-38, %v683
    %v685 = vsel %vm682, %v684, %v680
    %v686 = vmul.f32 1.0, %v685
    %v687 = vadd.f32 %v542, %v575
    %v688 = vxor.u32 %v687, 2147483648
    %v689 = vmul.f32 %v688, 1.442695
    %v690 = vpow.pop %v689
    %v691 = vadd.f32 %v690, 1.0
    %v692 = vrcp.pop %v691
    %v693 = vmul.f32 %v691, %v692
    %v694 = vsub.f32 1.0, %v693
    %v695 = vmul.f32 %v692, %v694
    %v696 = vadd.f32 %v692, %v695
    %vm697 = vweird.f32 %v691
    %vm698 = vweird.f32 %v692
    %vm699 = vmor %vm697, %vm698
    %v700 = vsel %vm699, %v692, %v696
    %v701 = vand.u32 2147483647, %v691
    %vm702 = vcmp.eq.f32.partialorder %v701, 8.507059e+37
    %v703 = vand.u32 %v691, 2147483648
    %v704 = vor.u32 1.1754944e-38, %v703
    %v705 = vsel %vm702, %v704, %v700
    %v706 = vmul.f32 1.0, %v705
    %v707 = vmul.f32 %v686, %v664
    %v708 = vadd.f32 %v631, %v707
    %v709 = vtanh.pop %v708
    %v710 = vsub.f32 1.0, %v706
    %v711 = vmul.f32 %v710, %v709
    %714 = vst [vmem:[#allocation1] ss:$9 sm:$0xff] %v379
    %s715 = scalar_lea.vmem [#allocation1], 1
    %716 = vst [vmem:[%s715] ss:$9 sm:$0xff] %v380
    %v717 = vld [vmem:[#allocation1] sm:$0xff]
    %v719 = vmul.f32 %v706, %v717
    %v720 = vadd.f32 %v711, %v719
    %v722 = vrot.slane %v720, 1
    %vm724 = vcmask 253952
    %725 = vst.msk [vmem:[%s11] sm:$0x1] %vm724, %v720
    %726 = vst.msk [vmem:[%s11 + $0x1] sm:$0x1] %vm724, %v722
    // Predicated region
    $region46: #{pointnav_baseline_net_forward.7} parent=1 // pred_check
      _
    $region47: #{pointnav_baseline_net_forward.7} parent=1 // pred_check_branch
      %728 = sbr.rel (0) target = $region49
    $region48: #{pointnav_baseline_net_forward.7} parent=1 // pred_region
      _
    $region49: #{pointnav_baseline_net_forward.7} parent=1 // pred_fallthru
      _
    // Predicated region
    $region50: #{pointnav_baseline_net_forward.7} parent=1 // pred_check
      _
    $region51: #{pointnav_baseline_net_forward.7} parent=1 // pred_check_branch
      %730 = sbr.rel (0) target = $region53
    $region52: #{pointnav_baseline_net_forward.7} parent=1 // pred_region
      %732 = vsyncadd [#allocation3], 0
      %s734 = sshll.u32 [#allocation2], 4
      %s735 = int_to_ptr.vmem [resolvable:$true] %s734
      %s736 = sshll.u32 %s12, 4
      %s737 = int_to_ptr.hbm [resolvable:$true] %s736
      %739 = dma.vmem_to_hbm [thread:$0]  %s735, 32, %s737, [#allocation3]
    $region53: #{pointnav_baseline_net_forward.7} parent=1 // pred_fallthru
      _
    // Predicated region
    $region54: #{pointnav_baseline_net_forward.7} parent=1 // pred_check
      _
    $region55: #{pointnav_baseline_net_forward.7} parent=1 // pred_check_branch
      %741 = sbr.rel (0) target = $region57
    $region56: #{pointnav_baseline_net_forward.7} parent=1 // pred_region
      _
    $region57: #{pointnav_baseline_net_forward.7} parent=1 // pred_fallthru
      _
    // Predicated region
    $region58: #{pointnav_baseline_net_forward.7} parent=1 // pred_check
      _
    $region59: #{pointnav_baseline_net_forward.7} parent=1 // pred_check_branch
      %743 = sbr.rel (0) target = $region61
    $region60: #{pointnav_baseline_net_forward.7} parent=1 // pred_region
      %745 = dma.done [#allocation3], 32
    $region61: #{pointnav_baseline_net_forward.7} parent=1 // pred_fallthru
      _
    %746 = vsyncpa [#allocation3], 1

</llo_original>
